<compile_context>
chip_gen: v7x
topology: tpu7x:2x2x1
jax: 0.10.0
libtpu: 0.0.40
codegen_flags: <defaults>
</compile_context>

<pallas_src>
import functools
import math

import jax
import jax.numpy as jnp
from jax.experimental import pallas as pl
from jax.experimental.pallas import tpu as pltpu

NEG = -1e30      # additive mask value (stands in for -inf; rows always have >=1 valid key)
EPS = 1e-5       # LayerNorm eps (PyTorch default)


def _pick_tile(dim, candidates):
    for t in candidates:
        if dim % t == 0:
            return t
    return dim


# ----------------------------------------------------------------------------
# Pallas kernels
# ----------------------------------------------------------------------------
def _matmul_bias_kernel(x_ref, w_ref, b_ref, o_ref, *, activation):
    # x: (tm, K) bf16, w: (K, tn) bf16 (pre-transposed), b: (1, tn) f32
    y = jnp.dot(x_ref[...], w_ref[...], preferred_element_type=jnp.float32)
    y = y + b_ref[...]
    if activation == "relu":
        y = jnp.maximum(y, 0.0)
    o_ref[...] = y.astype(o_ref.dtype)


def linear(x, w_t, b, activation=None, out_dtype=jnp.bfloat16):
    """x: (M, K), w_t: (K, N) pre-transposed weight, b: (N,) -> (M, N)."""
    M, K = x.shape
    N = w_t.shape[1]
    tm = _pick_tile(M, (512, 256, 128, 64, 32, 16, 8))
    tn = _pick_tile(N, (512, 256, 128))
    return pl.pallas_call(
        functools.partial(_matmul_bias_kernel, activation=activation),
        grid=(M // tm, N // tn),
        in_specs=[
            pl.BlockSpec((tm, K), lambda i, j: (i, 0)),
            pl.BlockSpec((K, tn), lambda i, j: (0, j)),
            pl.BlockSpec((1, tn), lambda i, j: (0, j)),
        ],
        out_specs=pl.BlockSpec((tm, tn), lambda i, j: (i, j)),
        out_shape=jax.ShapeDtypeStruct((M, N), out_dtype),
        compiler_params=pltpu.CompilerParams(
            dimension_semantics=("parallel", "parallel")),
    )(x.astype(jnp.bfloat16), w_t, b.reshape(1, N).astype(jnp.float32))


def _matmul_bias_add_ln_kernel(x_ref, w_ref, b_ref, r_ref, g_ref, bt_ref, o_ref):
    # o = LayerNorm(residual + x @ w + b) * g + beta   (post-LN epilogue fusion)
    y = jnp.dot(x_ref[...], w_ref[...], preferred_element_type=jnp.float32)
    h = y + b_ref[...] + r_ref[...].astype(jnp.float32)
    mu = jnp.mean(h, axis=-1, keepdims=True)
    d = h - mu
    var = jnp.mean(d * d, axis=-1, keepdims=True)
    o_ref[...] = (d * jax.lax.rsqrt(var + EPS) * g_ref[...] + bt_ref[...]).astype(o_ref.dtype)


def linear_add_ln(x, w_t, b, residual, gamma, beta, out_dtype=jnp.bfloat16):
    """LayerNorm(residual + x @ w_t + b). x: (M, K), w_t: (K, N), residual: (M, N)."""
    M, K = x.shape
    N = w_t.shape[1]
    tm = _pick_tile(M, (256, 128, 64, 32, 16, 8))
    return pl.pallas_call(
        _matmul_bias_add_ln_kernel,
        grid=(M // tm,),
        in_specs=[
            pl.BlockSpec((tm, K), lambda i: (i, 0)),
            pl.BlockSpec((K, N), lambda i: (0, 0)),
            pl.BlockSpec((1, N), lambda i: (0, 0)),
            pl.BlockSpec((tm, N), lambda i: (i, 0)),
            pl.BlockSpec((1, N), lambda i: (0, 0)),
            pl.BlockSpec((1, N), lambda i: (0, 0)),
        ],
        out_specs=pl.BlockSpec((tm, N), lambda i: (i, 0)),
        out_shape=jax.ShapeDtypeStruct((M, N), out_dtype),
        compiler_params=pltpu.CompilerParams(dimension_semantics=("parallel",)),
    )(x.astype(jnp.bfloat16), w_t, b.reshape(1, N).astype(jnp.float32),
      residual.astype(jnp.bfloat16), gamma.reshape(1, N).astype(jnp.float32),
      beta.reshape(1, N).astype(jnp.float32))


def _ln_kernel(x_ref, g_ref, b_ref, o_ref):
    h = x_ref[...].astype(jnp.float32)
    mu = jnp.mean(h, axis=-1, keepdims=True)
    d = h - mu
    var = jnp.mean(d * d, axis=-1, keepdims=True)
    o_ref[...] = (d * jax.lax.rsqrt(var + EPS) * g_ref[...] + b_ref[...]).astype(o_ref.dtype)


def layernorm(x, gamma, beta):
    """LayerNorm over last dim. x: (B, S, D) -> (B, S, D) bf16."""
    B, S, D = x.shape
    M = B * S
    tm = _pick_tile(M, (256, 128, 64, 32, 16, 8))
    out = pl.pallas_call(
        _ln_kernel,
        grid=(M // tm,),
        in_specs=[
            pl.BlockSpec((tm, D), lambda i: (i, 0)),
            pl.BlockSpec((1, D), lambda i: (0, 0)),
            pl.BlockSpec((1, D), lambda i: (0, 0)),
        ],
        out_specs=pl.BlockSpec((tm, D), lambda i: (i, 0)),
        out_shape=jax.ShapeDtypeStruct((M, D), jnp.bfloat16),
        compiler_params=pltpu.CompilerParams(dimension_semantics=("parallel",)),
    )(x.reshape(M, D).astype(jnp.bfloat16),
      gamma.reshape(1, D).astype(jnp.float32),
      beta.reshape(1, D).astype(jnp.float32))
    return out.reshape(B, S, D)


def _attn_kernel(q_ref, k_ref, v_ref, m_ref, o_ref, *, nhead, dh, scale, causal):
    # q: (1, Sq, D) bf16, k/v: (1, Sk, D) bf16, m: (1, 1, Sk) f32 additive key-pad mask
    q = q_ref[0]                      # (Sq, D)
    k = k_ref[0]                      # (Sk, D)
    v = v_ref[0]                      # (Sk, D)
    kp = m_ref[0]                     # (1, Sk) f32, broadcasts over queries
    Sq = q.shape[0]
    Sk = k.shape[0]
    if causal:
        row = jax.lax.broadcasted_iota(jnp.int32, (Sq, Sk), 0)
        col = jax.lax.broadcasted_iota(jnp.int32, (Sq, Sk), 1)
        causal_blocked = col > row
    for h in range(nhead):            # static unrolled loop over heads
        lo = h * dh
        qh = jax.lax.slice_in_dim(q, lo, lo + dh, axis=1)
        kh = jax.lax.slice_in_dim(k, lo, lo + dh, axis=1)
        vh = jax.lax.slice_in_dim(v, lo, lo + dh, axis=1)
        # scores = qh @ kh^T (contraction expressed without materializing a transpose)
        s = jax.lax.dot_general(qh, kh, (((1,), (1,)), ((), ())),
                                preferred_element_type=jnp.float32) * scale
        s = s + kp
        if causal:
            s = jnp.where(causal_blocked, NEG, s)
        s = s - jnp.max(s, axis=-1, keepdims=True)
        p = jnp.exp(s)
        p = p * pl.reciprocal(jnp.sum(p, axis=-1, keepdims=True), approx=True)
        ctx = jnp.dot(p.astype(vh.dtype), vh, preferred_element_type=jnp.float32)
        o_ref[0, :, lo:lo + dh] = ctx.astype(o_ref.dtype)


def attention(q, k, v, kp_mask, *, nhead, causal):
    """q: (B, Sq, D), k/v: (B, Sk, D) with heads packed in the last dim,
    kp_mask: (B, 1, Sk) additive float mask (0 or NEG). Returns (B, Sq, D)."""
    B, Sq, D = q.shape
    Sk = k.shape[1]
    dh = D // nhead
    scale = 1.0 / math.sqrt(dh)
    return pl.pallas_call(
        functools.partial(_attn_kernel, nhead=nhead, dh=dh, scale=scale, causal=causal),
        grid=(B,),
        in_specs=[
            pl.BlockSpec((1, Sq, D), lambda b: (b, 0, 0)),
            pl.BlockSpec((1, Sk, D), lambda b: (b, 0, 0)),
            pl.BlockSpec((1, Sk, D), lambda b: (b, 0, 0)),
            pl.BlockSpec((1, 1, Sk), lambda b: (b, 0, 0)),
        ],
        out_specs=pl.BlockSpec((1, Sq, D), lambda b: (b, 0, 0)),
        out_shape=jax.ShapeDtypeStruct((B, Sq, D), jnp.bfloat16),
        compiler_params=pltpu.CompilerParams(dimension_semantics=("parallel",)),
    )(q.astype(jnp.bfloat16), k.astype(jnp.bfloat16), v.astype(jnp.bfloat16),
      kp_mask.astype(jnp.float32))


# ----------------------------------------------------------------------------
# Transformer building blocks (wrappers around the Pallas kernels)
# ----------------------------------------------------------------------------
def self_attention_block(x, p, kp_mask, nhead, norm, causal):
    """post-LN: LayerNorm(x + out_proj(attn(qkv_proj(x))))."""
    B, S, D = x.shape
    xf = x.reshape(B * S, D)
    qkv = linear(xf, p["in_w_t"], p["in_b"])                       # (M, 3D) fused QKV
    q = qkv[:, :D].reshape(B, S, D)
    k = qkv[:, D:2 * D].reshape(B, S, D)
    v = qkv[:, 2 * D:].reshape(B, S, D)
    ctx = attention(q, k, v, kp_mask, nhead=nhead, causal=causal)  # (B, S, D)
    out = linear_add_ln(ctx.reshape(B * S, D), p["out_w_t"], p["out_b"],
                        xf, norm["g"], norm["b"])
    return out.reshape(B, S, D)


def cross_attention_block(x, memory, p, kp_mask, nhead, norm):
    B, Sq, D = x.shape
    Sk = memory.shape[1]
    xf = x.reshape(B * Sq, D)
    mf = memory.reshape(B * Sk, D)
    q = linear(xf, p["in_w_t"][:, :D], p["in_b"][:D]).reshape(B, Sq, D)
    kv = linear(mf, p["in_w_t"][:, D:], p["in_b"][D:])             # fused K/V proj
    k = kv[:, :D].reshape(B, Sk, D)
    v = kv[:, D:].reshape(B, Sk, D)
    ctx = attention(q, k, v, kp_mask, nhead=nhead, causal=False)
    out = linear_add_ln(ctx.reshape(B * Sq, D), p["out_w_t"], p["out_b"],
                        xf, norm["g"], norm["b"])
    return out.reshape(B, Sq, D)


def ffn_block(x, p, norm):
    B, S, D = x.shape
    xf = x.reshape(B * S, D)
    h = linear(xf, p["w1_t"], p["b1"], activation="relu")
    out = linear_add_ln(h, p["w2_t"], p["b2"], xf, norm["g"], norm["b"])
    return out.reshape(B, S, D)


def encoder_layer(x, p, src_kp, nhead):
    x = self_attention_block(x, p["self_attn"], src_kp, nhead, p["norm1"], causal=False)
    x = ffn_block(x, p["ffn"], p["norm2"])
    return x


def decoder_layer(x, memory, p, tgt_kp, mem_kp, nhead):
    x = self_attention_block(x, p["self_attn"], tgt_kp, nhead, p["norm1"], causal=True)
    x = cross_attention_block(x, memory, p["cross_attn"], mem_kp, nhead, p["norm2"])
    x = ffn_block(x, p["ffn"], p["norm3"])
    return x


def positional_encoding_table(max_len, d_model):
    pos = jnp.arange(max_len, dtype=jnp.float32)[:, None]
    div = jnp.exp(jnp.arange(0, d_model, 2, dtype=jnp.float32) * (-math.log(10000.0) / d_model))
    pe = jnp.zeros((max_len, d_model), jnp.float32)
    pe = pe.at[:, 0::2].set(jnp.sin(pos * div))
    pe = pe.at[:, 1::2].set(jnp.cos(pos * div))
    return pe


def gcd_transformer_forward(params, src, tgt, *, nhead, pad_id):
    """src, tgt: int32 (B, S). Returns logits (B, S_tgt, vocab) in f32."""
    B, Ss = src.shape
    St = tgt.shape[1]
    D = params["embedding"].shape[1]

    # embedding + positional encoding (glue); cast to bf16 for the MXU paths
    src_emb = (jnp.take(params["embedding"], src, axis=0) + params["pe"][:Ss]).astype(jnp.bfloat16)
    tgt_emb = (jnp.take(params["embedding"], tgt, axis=0) + params["pe"][:St]).astype(jnp.bfloat16)

    # key-padding masks as small (B, 1, Sk) additive vectors; causal term built in-kernel
    src_kp = ((src == pad_id).astype(jnp.float32) * NEG).reshape(B, 1, Ss)
    tgt_kp = ((tgt == pad_id).astype(jnp.float32) * NEG).reshape(B, 1, St)

    # encoder
    x = src_emb
    for p in params["encoder_layers"]:
        x = encoder_layer(x, p, src_kp, nhead)
    memory = layernorm(x, params["enc_norm"]["g"], params["enc_norm"]["b"])

    # decoder
    y = tgt_emb
    for p in params["decoder_layers"]:
        y = decoder_layer(y, memory, p, tgt_kp, src_kp, nhead)
    y = layernorm(y, params["dec_norm"]["g"], params["dec_norm"]["b"])

    # output projection
    V = params["fc_w_t"].shape[1]
    logits = linear(y.reshape(B * St, D), params["fc_w_t"], params["fc_b"],
                    out_dtype=jnp.float32)
    return logits.reshape(B, St, V)


# ----------------------------------------------------------------------------
# Deterministic parameter init (weights stored pre-transposed (K, N), bf16)
# ----------------------------------------------------------------------------
def _normal(key, shape, scale=0.02, dtype=jnp.float32):
    return (jax.random.normal(key, shape, jnp.float32) * scale).astype(dtype)


def init_mha(key, D):
    k1, k2, k3, k4 = jax.random.split(key, 4)
    return {"in_w_t": _normal(k1, (D, 3 * D), dtype=jnp.bfloat16),
            "in_b": _normal(k2, (3 * D,)),
            "out_w_t": _normal(k3, (D, D), dtype=jnp.bfloat16),
            "out_b": _normal(k4, (D,))}


def init_ffn(key, D, Dff):
    k1, k2, k3, k4 = jax.random.split(key, 4)
    return {"w1_t": _normal(k1, (D, Dff), dtype=jnp.bfloat16),
            "b1": _normal(k2, (Dff,)),
            "w2_t": _normal(k3, (Dff, D), dtype=jnp.bfloat16),
            "b2": _normal(k4, (D,))}


def init_ln(D):
    return {"g": jnp.ones((D,), jnp.float32), "b": jnp.zeros((D,), jnp.float32)}


def init_params(key, vocab, D, Dff, num_layers, max_len):
    keys = jax.random.split(key, 3 + 5 * num_layers)
    it = iter(keys)
    params = {
        "embedding": _normal(next(it), (vocab, D)),
        "pe": positional_encoding_table(max_len, D),
        "fc_w_t": _normal(next(it), (D, vocab), dtype=jnp.bfloat16),
        "fc_b": _normal(next(it), (vocab,)),
        "enc_norm": init_ln(D),
        "dec_norm": init_ln(D),
        "encoder_layers": [],
        "decoder_layers": [],
    }
    for _ in range(num_layers):
        params["encoder_layers"].append({
            "self_attn": init_mha(next(it), D),
            "ffn": init_ffn(next(it), D, Dff),
            "norm1": init_ln(D), "norm2": init_ln(D),
        })
    for _ in range(num_layers):
        params["decoder_layers"].append({
            "self_attn": init_mha(next(it), D),
            "cross_attn": init_mha(next(it), D),
            "ffn": init_ffn(next(it), D, Dff),
            "norm1": init_ln(D), "norm2": init_ln(D), "norm3": init_ln(D),
        })
    return params


# ----------------------------------------------------------------------------
# Main
# ----------------------------------------------------------------------------
if __name__ == "__main__":
    # Small, module-consistent config (stands in for d_model=128, nhead=8, num_layers=3)
    VOCAB = 16       # len(tokenizer.vocab)
    D_MODEL = 32
    NHEAD = 4
    NUM_LAYERS = 2
    DIM_FF = 64
    MAX_LEN = 64
    PAD_ID = 0       # tokenizer.token2id[tokenizer.pad_token]
    B, S_SRC, S_TGT = 2, 8, 8

    root = jax.random.PRNGKey(0)
    kp, ks, kt = jax.random.split(root, 3)
    params = init_params(kp, VOCAB, D_MODEL, DIM_FF, NUM_LAYERS, MAX_LEN)

    # deterministic token ids in [1, VOCAB), with trailing padding on batch 1
    src = jax.random.randint(ks, (B, S_SRC), 1, VOCAB, dtype=jnp.int32)
    tgt = jax.random.randint(kt, (B, S_TGT), 1, VOCAB, dtype=jnp.int32)
    src = src.at[1, -2:].set(PAD_ID)   # src_key_padding_mask exercises padding
    tgt = tgt.at[1, -1:].set(PAD_ID)   # tgt_key_padding_mask exercises padding

    forward = jax.jit(functools.partial(gcd_transformer_forward, nhead=NHEAD, pad_id=PAD_ID))
    logits = forward(params, src, tgt)
    jax.block_until_ready(logits)

    assert logits.shape == (B, S_TGT, VOCAB)
    assert bool(jnp.all(jnp.isfinite(logits)))
    # TODO(synk): autoregressive `predict()` greedy-decode loop not ported (host-side loop).
    print("KERNEL_OK")
</pallas_src>

<mosaic_0001>
module attributes {stable_mosaic.version = 11 : i64} {
  func.func @_attn_kernel(%arg0: i32, %arg1: memref<1x8x32xbf16, #tpu.memory_space<vmem>>, %arg2: memref<1x8x32xbf16, #tpu.memory_space<vmem>>, %arg3: memref<1x8x32xbf16, #tpu.memory_space<vmem>>, %arg4: memref<1x1x8xf32, #tpu.memory_space<vmem>>, %arg5: memref<1x8x32xbf16, #tpu.memory_space<vmem>>) attributes {dimension_semantics = [#tpu.dimension_semantics<parallel>], iteration_bounds = array<i64: 2>, scalar_prefetch = 0 : i64, scratch_operands = 0 : i64, tpu.core_type = #tpu.core_type<tc>, window_params = [{transform_indices = @transform_0, window_bounds = array<i64: 1, 8, 32>}, {transform_indices = @transform_1, window_bounds = array<i64: 1, 8, 32>}, {transform_indices = @transform_2, window_bounds = array<i64: 1, 8, 32>}, {transform_indices = @transform_3, window_bounds = array<i64: 1, 1, 8>}, {transform_indices = @transform_4, window_bounds = array<i64: 1, 8, 32>}]} {
    %c0 = arith.constant 0 : index
    %c0_0 = arith.constant 0 : index
    %c0_1 = arith.constant 0 : index
    %0 = vector.load %arg1[%c0, %c0_0, %c0_1] : memref<1x8x32xbf16, #tpu.memory_space<vmem>>, vector<1x8x32xbf16>
    %1 = vector.shape_cast %0 : vector<1x8x32xbf16> to vector<8x32xbf16>
    %c0_2 = arith.constant 0 : index
    %c0_3 = arith.constant 0 : index
    %c0_4 = arith.constant 0 : index
    %2 = vector.load %arg2[%c0_2, %c0_3, %c0_4] : memref<1x8x32xbf16, #tpu.memory_space<vmem>>, vector<1x8x32xbf16>
    %3 = vector.shape_cast %2 : vector<1x8x32xbf16> to vector<8x32xbf16>
    %c0_5 = arith.constant 0 : index
    %c0_6 = arith.constant 0 : index
    %c0_7 = arith.constant 0 : index
    %4 = vector.load %arg3[%c0_5, %c0_6, %c0_7] : memref<1x8x32xbf16, #tpu.memory_space<vmem>>, vector<1x8x32xbf16>
    %5 = vector.shape_cast %4 : vector<1x8x32xbf16> to vector<8x32xbf16>
    %c0_8 = arith.constant 0 : index
    %c0_9 = arith.constant 0 : index
    %c0_10 = arith.constant 0 : index
    %6 = vector.load %arg4[%c0_8, %c0_9, %c0_10] : memref<1x1x8xf32, #tpu.memory_space<vmem>>, vector<1x1x8xf32>
    %7 = vector.shape_cast %6 : vector<1x1x8xf32> to vector<1x8xf32>
    %8 = vector.extract_strided_slice %1 {offsets = [0, 0], sizes = [8, 8], strides = [1, 1]} : vector<8x32xbf16> to vector<8x8xbf16>
    %9 = vector.extract_strided_slice %3 {offsets = [0, 0], sizes = [8, 8], strides = [1, 1]} : vector<8x32xbf16> to vector<8x8xbf16>
    %10 = vector.extract_strided_slice %5 {offsets = [0, 0], sizes = [8, 8], strides = [1, 1]} : vector<8x32xbf16> to vector<8x8xbf16>
    %cst = arith.constant dense<0.000000e+00> : vector<8x8xf32>
    %11 = tpu.matmul %8, %9, %cst {dimension_numbers = #tpu.dot_dimension_numbers<[1], [1], [0], [0], [0, 0, 1, 0], [], []>} : vector<8x8xbf16>, vector<8x8xbf16>, vector<8x8xf32> -> vector<8x8xf32>
    %cst_11 = arith.constant 0.353553385 : f32
    %12 = vector.broadcast %cst_11 : f32 to vector<8x8xf32>
    %13 = arith.mulf %11, %12 : vector<8x8xf32>
    %14 = vector.broadcast %7 : vector<1x8xf32> to vector<8x8xf32>
    %15 = arith.addf %13, %14 : vector<8x8xf32>
    %cst_12 = arith.constant dense<0xFF800000> : vector<8xf32>
    %16 = vector.multi_reduction <maximumf>, %15, %cst_12 [1] : vector<8x8xf32> to vector<8xf32>
    %17 = vector.shape_cast %16 : vector<8xf32> to vector<8x1xf32>
    %18 = vector.broadcast %17 : vector<8x1xf32> to vector<8x8xf32>
    %19 = arith.subf %15, %18 : vector<8x8xf32>
    %20 = math.exp %19 : vector<8x8xf32>
    %cst_13 = arith.constant dense<0.000000e+00> : vector<8xf32>
    %21 = vector.multi_reduction <add>, %20, %cst_13 [1] : vector<8x8xf32> to vector<8xf32>
    %22 = vector.shape_cast %21 : vector<8xf32> to vector<8x1xf32>
    %23 = tpu.reciprocal %22 {approx = true} : vector<8x1xf32> -> vector<8x1xf32>
    %24 = vector.broadcast %23 : vector<8x1xf32> to vector<8x8xf32>
    %25 = arith.mulf %20, %24 : vector<8x8xf32>
    %26 = arith.truncf %25 : vector<8x8xf32> to vector<8x8xbf16>
    %cst_14 = arith.constant dense<0.000000e+00> : vector<8x8xf32>
    %27 = tpu.matmul %26, %10, %cst_14 {dimension_numbers = #tpu.dot_dimension_numbers<[1], [0], [0], [1], [0, 0, 1, 1], [], []>} : vector<8x8xbf16>, vector<8x8xbf16>, vector<8x8xf32> -> vector<8x8xf32>
    %28 = arith.truncf %27 : vector<8x8xf32> to vector<8x8xbf16>
    %c0_15 = arith.constant 0 : index
    %c0_16 = arith.constant 0 : index
    %c0_17 = arith.constant 0 : index
    %29 = vector.load %arg5[%c0_15, %c0_16, %c0_17] : memref<1x8x32xbf16, #tpu.memory_space<vmem>>, vector<1x8x8xbf16>
    %30 = vector.shape_cast %29 : vector<1x8x8xbf16> to vector<8x8xbf16>
    %31 = vector.shape_cast %28 : vector<8x8xbf16> to vector<1x8x8xbf16>
    tpu.vector_store %arg5[%c0_15, %c0_16, %c0_17], %31 {strides = array<i32>} : memref<1x8x32xbf16, #tpu.memory_space<vmem>>, vector<1x8x8xbf16>,
    %32 = vector.extract_strided_slice %1 {offsets = [0, 8], sizes = [8, 8], strides = [1, 1]} : vector<8x32xbf16> to vector<8x8xbf16>
    %33 = vector.extract_strided_slice %3 {offsets = [0, 8], sizes = [8, 8], strides = [1, 1]} : vector<8x32xbf16> to vector<8x8xbf16>
    %34 = vector.extract_strided_slice %5 {offsets = [0, 8], sizes = [8, 8], strides = [1, 1]} : vector<8x32xbf16> to vector<8x8xbf16>
    %cst_18 = arith.constant dense<0.000000e+00> : vector<8x8xf32>
    %35 = tpu.matmul %32, %33, %cst_18 {dimension_numbers = #tpu.dot_dimension_numbers<[1], [1], [0], [0], [0, 0, 1, 0], [], []>} : vector<8x8xbf16>, vector<8x8xbf16>, vector<8x8xf32> -> vector<8x8xf32>
    %cst_19 = arith.constant 0.353553385 : f32
    %36 = vector.broadcast %cst_19 : f32 to vector<8x8xf32>
    %37 = arith.mulf %35, %36 : vector<8x8xf32>
    %38 = vector.broadcast %7 : vector<1x8xf32> to vector<8x8xf32>
    %39 = arith.addf %37, %38 : vector<8x8xf32>
    %cst_20 = arith.constant dense<0xFF800000> : vector<8xf32>
    %40 = vector.multi_reduction <maximumf>, %39, %cst_20 [1] : vector<8x8xf32> to vector<8xf32>
    %41 = vector.shape_cast %40 : vector<8xf32> to vector<8x1xf32>
    %42 = vector.broadcast %41 : vector<8x1xf32> to vector<8x8xf32>
    %43 = arith.subf %39, %42 : vector<8x8xf32>
    %44 = math.exp %43 : vector<8x8xf32>
    %cst_21 = arith.constant dense<0.000000e+00> : vector<8xf32>
    %45 = vector.multi_reduction <add>, %44, %cst_21 [1] : vector<8x8xf32> to vector<8xf32>
    %46 = vector.shape_cast %45 : vector<8xf32> to vector<8x1xf32>
    %47 = tpu.reciprocal %46 {approx = true} : vector<8x1xf32> -> vector<8x1xf32>
    %48 = vector.broadcast %47 : vector<8x1xf32> to vector<8x8xf32>
    %49 = arith.mulf %44, %48 : vector<8x8xf32>
    %50 = arith.truncf %49 : vector<8x8xf32> to vector<8x8xbf16>
    %cst_22 = arith.constant dense<0.000000e+00> : vector<8x8xf32>
    %51 = tpu.matmul %50, %34, %cst_22 {dimension_numbers = #tpu.dot_dimension_numbers<[1], [0], [0], [1], [0, 0, 1, 1], [], []>} : vector<8x8xbf16>, vector<8x8xbf16>, vector<8x8xf32> -> vector<8x8xf32>
    %52 = arith.truncf %51 : vector<8x8xf32> to vector<8x8xbf16>
    %c0_23 = arith.constant 0 : index
    %c0_24 = arith.constant 0 : index
    %c8 = arith.constant 8 : index
    %53 = vector.load %arg5[%c0_23, %c0_24, %c8] : memref<1x8x32xbf16, #tpu.memory_space<vmem>>, vector<1x8x8xbf16>
    %54 = vector.shape_cast %53 : vector<1x8x8xbf16> to vector<8x8xbf16>
    %55 = vector.shape_cast %52 : vector<8x8xbf16> to vector<1x8x8xbf16>
    tpu.vector_store %arg5[%c0_23, %c0_24, %c8], %55 {strides = array<i32>} : memref<1x8x32xbf16, #tpu.memory_space<vmem>>, vector<1x8x8xbf16>,
    %56 = vector.extract_strided_slice %1 {offsets = [0, 16], sizes = [8, 8], strides = [1, 1]} : vector<8x32xbf16> to vector<8x8xbf16>
    %57 = vector.extract_strided_slice %3 {offsets = [0, 16], sizes = [8, 8], strides = [1, 1]} : vector<8x32xbf16> to vector<8x8xbf16>
    %58 = vector.extract_strided_slice %5 {offsets = [0, 16], sizes = [8, 8], strides = [1, 1]} : vector<8x32xbf16> to vector<8x8xbf16>
    %cst_25 = arith.constant dense<0.000000e+00> : vector<8x8xf32>
    %59 = tpu.matmul %56, %57, %cst_25 {dimension_numbers = #tpu.dot_dimension_numbers<[1], [1], [0], [0], [0, 0, 1, 0], [], []>} : vector<8x8xbf16>, vector<8x8xbf16>, vector<8x8xf32> -> vector<8x8xf32>
    %cst_26 = arith.constant 0.353553385 : f32
    %60 = vector.broadcast %cst_26 : f32 to vector<8x8xf32>
    %61 = arith.mulf %59, %60 : vector<8x8xf32>
    %62 = vector.broadcast %7 : vector<1x8xf32> to vector<8x8xf32>
    %63 = arith.addf %61, %62 : vector<8x8xf32>
    %cst_27 = arith.constant dense<0xFF800000> : vector<8xf32>
    %64 = vector.multi_reduction <maximumf>, %63, %cst_27 [1] : vector<8x8xf32> to vector<8xf32>
    %65 = vector.shape_cast %64 : vector<8xf32> to vector<8x1xf32>
    %66 = vector.broadcast %65 : vector<8x1xf32> to vector<8x8xf32>
    %67 = arith.subf %63, %66 : vector<8x8xf32>
    %68 = math.exp %67 : vector<8x8xf32>
    %cst_28 = arith.constant dense<0.000000e+00> : vector<8xf32>
    %69 = vector.multi_reduction <add>, %68, %cst_28 [1] : vector<8x8xf32> to vector<8xf32>
    %70 = vector.shape_cast %69 : vector<8xf32> to vector<8x1xf32>
    %71 = tpu.reciprocal %70 {approx = true} : vector<8x1xf32> -> vector<8x1xf32>
    %72 = vector.broadcast %71 : vector<8x1xf32> to vector<8x8xf32>
    %73 = arith.mulf %68, %72 : vector<8x8xf32>
    %74 = arith.truncf %73 : vector<8x8xf32> to vector<8x8xbf16>
    %cst_29 = arith.constant dense<0.000000e+00> : vector<8x8xf32>
    %75 = tpu.matmul %74, %58, %cst_29 {dimension_numbers = #tpu.dot_dimension_numbers<[1], [0], [0], [1], [0, 0, 1, 1], [], []>} : vector<8x8xbf16>, vector<8x8xbf16>, vector<8x8xf32> -> vector<8x8xf32>
    %76 = arith.truncf %75 : vector<8x8xf32> to vector<8x8xbf16>
    %c0_30 = arith.constant 0 : index
    %c0_31 = arith.constant 0 : index
    %c16 = arith.constant 16 : index
    %77 = vector.load %arg5[%c0_30, %c0_31, %c16] : memref<1x8x32xbf16, #tpu.memory_space<vmem>>, vector<1x8x8xbf16>
    %78 = vector.shape_cast %77 : vector<1x8x8xbf16> to vector<8x8xbf16>
    %79 = vector.shape_cast %76 : vector<8x8xbf16> to vector<1x8x8xbf16>
    tpu.vector_store %arg5[%c0_30, %c0_31, %c16], %79 {strides = array<i32>} : memref<1x8x32xbf16, #tpu.memory_space<vmem>>, vector<1x8x8xbf16>,
    %80 = vector.extract_strided_slice %1 {offsets = [0, 24], sizes = [8, 8], strides = [1, 1]} : vector<8x32xbf16> to vector<8x8xbf16>
    %81 = vector.extract_strided_slice %3 {offsets = [0, 24], sizes = [8, 8], strides = [1, 1]} : vector<8x32xbf16> to vector<8x8xbf16>
    %82 = vector.extract_strided_slice %5 {offsets = [0, 24], sizes = [8, 8], strides = [1, 1]} : vector<8x32xbf16> to vector<8x8xbf16>
    %cst_32 = arith.constant dense<0.000000e+00> : vector<8x8xf32>
    %83 = tpu.matmul %80, %81, %cst_32 {dimension_numbers = #tpu.dot_dimension_numbers<[1], [1], [0], [0], [0, 0, 1, 0], [], []>} : vector<8x8xbf16>, vector<8x8xbf16>, vector<8x8xf32> -> vector<8x8xf32>
    %cst_33 = arith.constant 0.353553385 : f32
    %84 = vector.broadcast %cst_33 : f32 to vector<8x8xf32>
    %85 = arith.mulf %83, %84 : vector<8x8xf32>
    %86 = vector.broadcast %7 : vector<1x8xf32> to vector<8x8xf32>
    %87 = arith.addf %85, %86 : vector<8x8xf32>
    %cst_34 = arith.constant dense<0xFF800000> : vector<8xf32>
    %88 = vector.multi_reduction <maximumf>, %87, %cst_34 [1] : vector<8x8xf32> to vector<8xf32>
    %89 = vector.shape_cast %88 : vector<8xf32> to vector<8x1xf32>
    %90 = vector.broadcast %89 : vector<8x1xf32> to vector<8x8xf32>
    %91 = arith.subf %87, %90 : vector<8x8xf32>
    %92 = math.exp %91 : vector<8x8xf32>
    %cst_35 = arith.constant dense<0.000000e+00> : vector<8xf32>
    %93 = vector.multi_reduction <add>, %92, %cst_35 [1] : vector<8x8xf32> to vector<8xf32>
    %94 = vector.shape_cast %93 : vector<8xf32> to vector<8x1xf32>
    %95 = tpu.reciprocal %94 {approx = true} : vector<8x1xf32> -> vector<8x1xf32>
    %96 = vector.broadcast %95 : vector<8x1xf32> to vector<8x8xf32>
    %97 = arith.mulf %92, %96 : vector<8x8xf32>
    %98 = arith.truncf %97 : vector<8x8xf32> to vector<8x8xbf16>
    %cst_36 = arith.constant dense<0.000000e+00> : vector<8x8xf32>
    %99 = tpu.matmul %98, %82, %cst_36 {dimension_numbers = #tpu.dot_dimension_numbers<[1], [0], [0], [1], [0, 0, 1, 1], [], []>} : vector<8x8xbf16>, vector<8x8xbf16>, vector<8x8xf32> -> vector<8x8xf32>
    %100 = arith.truncf %99 : vector<8x8xf32> to vector<8x8xbf16>
    %c0_37 = arith.constant 0 : index
    %c0_38 = arith.constant 0 : index
    %c24 = arith.constant 24 : index
    %101 = vector.load %arg5[%c0_37, %c0_38, %c24] : memref<1x8x32xbf16, #tpu.memory_space<vmem>>, vector<1x8x8xbf16>
    %102 = vector.shape_cast %101 : vector<1x8x8xbf16> to vector<8x8xbf16>
    %103 = vector.shape_cast %100 : vector<8x8xbf16> to vector<1x8x8xbf16>
    tpu.vector_store %arg5[%c0_37, %c0_38, %c24], %103 {strides = array<i32>} : memref<1x8x32xbf16, #tpu.memory_space<vmem>>, vector<1x8x8xbf16>,
    return
  }
  func.func @transform_0(%arg0: i32) -> (i32, i32, i32) {
    %c0_i32 = arith.constant 0 : i32
    %c0_i32_0 = arith.constant 0 : i32
    %c0_i32_1 = arith.constant 0 : i32
    return %arg0, %c0_i32, %c0_i32_0 : i32, i32, i32
  }
  func.func @transform_1(%arg0: i32) -> (i32, i32, i32) {
    %c0_i32 = arith.constant 0 : i32
    %c0_i32_0 = arith.constant 0 : i32
    %c0_i32_1 = arith.constant 0 : i32
    return %arg0, %c0_i32, %c0_i32_0 : i32, i32, i32
  }
  func.func @transform_2(%arg0: i32) -> (i32, i32, i32) {
    %c0_i32 = arith.constant 0 : i32
    %c0_i32_0 = arith.constant 0 : i32
    %c0_i32_1 = arith.constant 0 : i32
    return %arg0, %c0_i32, %c0_i32_0 : i32, i32, i32
  }
  func.func @transform_3(%arg0: i32) -> (i32, i32, i32) {
    %c0_i32 = arith.constant 0 : i32
    %c0_i32_0 = arith.constant 0 : i32
    %c0_i32_1 = arith.constant 0 : i32
    return %arg0, %c0_i32, %c0_i32_0 : i32, i32, i32
  }
  func.func @transform_4(%arg0: i32) -> (i32, i32, i32) {
    %c0_i32 = arith.constant 0 : i32
    %c0_i32_0 = arith.constant 0 : i32
    %c0_i32_1 = arith.constant 0 : i32
    return %arg0, %c0_i32, %c0_i32_0 : i32, i32, i32
  }
}

module attributes {stable_mosaic.version = 11 : i64} {
  func.func @_matmul_bias_kernel(%arg0: i32, %arg1: i32, %arg2: memref<16x32xbf16, #tpu.memory_space<vmem>>, %arg3: memref<32x96xbf16, #tpu.memory_space<vmem>>, %arg4: memref<1x96xf32, #tpu.memory_space<vmem>>, %arg5: memref<16x96xbf16, #tpu.memory_space<vmem>>) attributes {dimension_semantics = [#tpu.dimension_semantics<parallel>, #tpu.dimension_semantics<parallel>], iteration_bounds = array<i64: 1, 1>, scalar_prefetch = 0 : i64, scratch_operands = 0 : i64, tpu.core_type = #tpu.core_type<tc>, window_params = [{transform_indices = @transform_0, window_bounds = array<i64: 16, 32>}, {transform_indices = @transform_1, window_bounds = array<i64: 32, 96>}, {transform_indices = @transform_2, window_bounds = array<i64: 1, 96>}, {transform_indices = @transform_3, window_bounds = array<i64: 16, 96>}]} {
    %c0 = arith.constant 0 : index
    %c0_0 = arith.constant 0 : index
    %0 = vector.load %arg2[%c0, %c0_0] : memref<16x32xbf16, #tpu.memory_space<vmem>>, vector<16x32xbf16>
    %c0_1 = arith.constant 0 : index
    %c0_2 = arith.constant 0 : index
    %1 = vector.load %arg3[%c0_1, %c0_2] : memref<32x96xbf16, #tpu.memory_space<vmem>>, vector<32x96xbf16>
    %cst = arith.constant dense<0.000000e+00> : vector<16x96xf32>
    %2 = tpu.matmul %0, %1, %cst {dimension_numbers = #tpu.dot_dimension_numbers<[1], [0], [0], [1], [0, 0, 1, 1], [], []>} : vector<16x32xbf16>, vector<32x96xbf16>, vector<16x96xf32> -> vector<16x96xf32>
    %c0_3 = arith.constant 0 : index
    %c0_4 = arith.constant 0 : index
    %3 = vector.load %arg4[%c0_3, %c0_4] : memref<1x96xf32, #tpu.memory_space<vmem>>, vector<1x96xf32>
    %4 = vector.broadcast %3 : vector<1x96xf32> to vector<16x96xf32>
    %5 = arith.addf %2, %4 : vector<16x96xf32>
    %6 = arith.truncf %5 : vector<16x96xf32> to vector<16x96xbf16>
    %c0_5 = arith.constant 0 : index
    %c0_6 = arith.constant 0 : index
    %7 = vector.load %arg5[%c0_5, %c0_6] : memref<16x96xbf16, #tpu.memory_space<vmem>>, vector<16x96xbf16>
    tpu.vector_store %arg5[%c0_5, %c0_6], %6 {strides = array<i32>} : memref<16x96xbf16, #tpu.memory_space<vmem>>, vector<16x96xbf16>,
    return
  }
  func.func @transform_0(%arg0: i32, %arg1: i32) -> (i32, i32) {
    %c0_i32 = arith.constant 0 : i32
    %c0_i32_0 = arith.constant 0 : i32
    return %arg0, %c0_i32 : i32, i32
  }
  func.func @transform_1(%arg0: i32, %arg1: i32) -> (i32, i32) {
    %c0_i32 = arith.constant 0 : i32
    %c0_i32_0 = arith.constant 0 : i32
    return %c0_i32, %arg1 : i32, i32
  }
  func.func @transform_2(%arg0: i32, %arg1: i32) -> (i32, i32) {
    %c0_i32 = arith.constant 0 : i32
    %c0_i32_0 = arith.constant 0 : i32
    return %c0_i32, %arg1 : i32, i32
  }
  func.func @transform_3(%arg0: i32, %arg1: i32) -> (i32, i32) {
    %c0_i32 = arith.constant 0 : i32
    return %arg0, %arg1 : i32, i32
  }
}

module attributes {stable_mosaic.version = 11 : i64} {
  func.func @_matmul_bias_add_ln_kernel(%arg0: i32, %arg1: memref<16x32xbf16, #tpu.memory_space<vmem>>, %arg2: memref<32x32xbf16, #tpu.memory_space<vmem>>, %arg3: memref<1x32xf32, #tpu.memory_space<vmem>>, %arg4: memref<16x32xbf16, #tpu.memory_space<vmem>>, %arg5: memref<1x32xf32, #tpu.memory_space<vmem>>, %arg6: memref<1x32xf32, #tpu.memory_space<vmem>>, %arg7: memref<16x32xbf16, #tpu.memory_space<vmem>>) attributes {dimension_semantics = [#tpu.dimension_semantics<parallel>], iteration_bounds = array<i64: 1>, scalar_prefetch = 0 : i64, scratch_operands = 0 : i64, tpu.core_type = #tpu.core_type<tc>, window_params = [{transform_indices = @transform_0, window_bounds = array<i64: 16, 32>}, {pipeline_mode = #tpu.pipeline_mode<synchronous>, transform_indices = @transform_1, window_bounds = array<i64: 32, 32>}, {pipeline_mode = #tpu.pipeline_mode<synchronous>, transform_indices = @transform_2, window_bounds = array<i64: 1, 32>}, {transform_indices = @transform_3, window_bounds = array<i64: 16, 32>}, {pipeline_mode = #tpu.pipeline_mode<synchronous>, transform_indices = @transform_4, window_bounds = array<i64: 1, 32>}, {pipeline_mode = #tpu.pipeline_mode<synchronous>, transform_indices = @transform_5, window_bounds = array<i64: 1, 32>}, {transform_indices = @transform_6, window_bounds = array<i64: 16, 32>}]} {
    %c0 = arith.constant 0 : index
    %c0_0 = arith.constant 0 : index
    %0 = vector.load %arg1[%c0, %c0_0] : memref<16x32xbf16, #tpu.memory_space<vmem>>, vector<16x32xbf16>
    %c0_1 = arith.constant 0 : index
    %c0_2 = arith.constant 0 : index
    %1 = vector.load %arg2[%c0_1, %c0_2] : memref<32x32xbf16, #tpu.memory_space<vmem>>, vector<32x32xbf16>
    %cst = arith.constant dense<0.000000e+00> : vector<16x32xf32>
    %2 = tpu.matmul %0, %1, %cst {dimension_numbers = #tpu.dot_dimension_numbers<[1], [0], [0], [1], [0, 0, 1, 1], [], []>} : vector<16x32xbf16>, vector<32x32xbf16>, vector<16x32xf32> -> vector<16x32xf32>
    %c0_3 = arith.constant 0 : index
    %c0_4 = arith.constant 0 : index
    %3 = vector.load %arg3[%c0_3, %c0_4] : memref<1x32xf32, #tpu.memory_space<vmem>>, vector<1x32xf32>
    %4 = vector.broadcast %3 : vector<1x32xf32> to vector<16x32xf32>
    %5 = arith.addf %2, %4 : vector<16x32xf32>
    %c0_5 = arith.constant 0 : index
    %c0_6 = arith.constant 0 : index
    %6 = vector.load %arg4[%c0_5, %c0_6] : memref<16x32xbf16, #tpu.memory_space<vmem>>, vector<16x32xbf16>
    %7 = arith.extf %6 : vector<16x32xbf16> to vector<16x32xf32>
    %8 = arith.addf %5, %7 : vector<16x32xf32>
    %cst_7 = arith.constant dense<0.000000e+00> : vector<16xf32>
    %9 = vector.multi_reduction <add>, %8, %cst_7 [1] : vector<16x32xf32> to vector<16xf32>
    %10 = vector.shape_cast %9 : vector<16xf32> to vector<16x1xf32>
    %cst_8 = arith.constant 3.200000e+01 : f32
    %11 = vector.broadcast %cst_8 : f32 to vector<16x1xf32>
    %12 = arith.divf %10, %11 : vector<16x1xf32>
    %13 = vector.broadcast %12 : vector<16x1xf32> to vector<16x32xf32>
    %14 = arith.subf %8, %13 : vector<16x32xf32>
    %15 = arith.mulf %14, %14 : vector<16x32xf32>
    %cst_9 = arith.constant dense<0.000000e+00> : vector<16xf32>
    %16 = vector.multi_reduction <add>, %15, %cst_9 [1] : vector<16x32xf32> to vector<16xf32>
    %17 = vector.shape_cast %16 : vector<16xf32> to vector<16x1xf32>
    %cst_10 = arith.constant 3.200000e+01 : f32
    %18 = vector.broadcast %cst_10 : f32 to vector<16x1xf32>
    %19 = arith.divf %17, %18 : vector<16x1xf32>
    %cst_11 = arith.constant 9.99999974E-6 : f32
    %20 = vector.broadcast %cst_11 : f32 to vector<16x1xf32>
    %21 = arith.addf %19, %20 : vector<16x1xf32>
    %22 = math.rsqrt %21 : vector<16x1xf32>
    %23 = vector.broadcast %22 : vector<16x1xf32> to vector<16x32xf32>
    %24 = arith.mulf %14, %23 : vector<16x32xf32>
    %c0_12 = arith.constant 0 : index
    %c0_13 = arith.constant 0 : index
    %25 = vector.load %arg5[%c0_12, %c0_13] : memref<1x32xf32, #tpu.memory_space<vmem>>, vector<1x32xf32>
    %26 = vector.broadcast %25 : vector<1x32xf32> to vector<16x32xf32>
    %27 = arith.mulf %24, %26 : vector<16x32xf32>
    %c0_14 = arith.constant 0 : index
    %c0_15 = arith.constant 0 : index
    %28 = vector.load %arg6[%c0_14, %c0_15] : memref<1x32xf32, #tpu.memory_space<vmem>>, vector<1x32xf32>
    %29 = vector.broadcast %28 : vector<1x32xf32> to vector<16x32xf32>
    %30 = arith.addf %27, %29 : vector<16x32xf32>
    %31 = arith.truncf %30 : vector<16x32xf32> to vector<16x32xbf16>
    %c0_16 = arith.constant 0 : index
    %c0_17 = arith.constant 0 : index
    %32 = vector.load %arg7[%c0_16, %c0_17] : memref<16x32xbf16, #tpu.memory_space<vmem>>, vector<16x32xbf16>
    tpu.vector_store %arg7[%c0_16, %c0_17], %31 {strides = array<i32>} : memref<16x32xbf16, #tpu.memory_space<vmem>>, vector<16x32xbf16>,
    return
  }
  func.func @transform_0(%arg0: i32) -> (i32, i32) {
    %c0_i32 = arith.constant 0 : i32
    %c0_i32_0 = arith.constant 0 : i32
    return %arg0, %c0_i32 : i32, i32
  }
  func.func @transform_1(%arg0: i32) -> (i32, i32) {
    %c0_i32 = arith.constant 0 : i32
    %c0_i32_0 = arith.constant 0 : i32
    %c0_i32_1 = arith.constant 0 : i32
    return %c0_i32, %c0_i32_0 : i32, i32
  }
  func.func @transform_2(%arg0: i32) -> (i32, i32) {
    %c0_i32 = arith.constant 0 : i32
    %c0_i32_0 = arith.constant 0 : i32
    %c0_i32_1 = arith.constant 0 : i32
    return %c0_i32, %c0_i32_0 : i32, i32
  }
  func.func @transform_3(%arg0: i32) -> (i32, i32) {
    %c0_i32 = arith.constant 0 : i32
    %c0_i32_0 = arith.constant 0 : i32
    return %arg0, %c0_i32 : i32, i32
  }
  func.func @transform_4(%arg0: i32) -> (i32, i32) {
    %c0_i32 = arith.constant 0 : i32
    %c0_i32_0 = arith.constant 0 : i32
    %c0_i32_1 = arith.constant 0 : i32
    return %c0_i32, %c0_i32_0 : i32, i32
  }
  func.func @transform_5(%arg0: i32) -> (i32, i32) {
    %c0_i32 = arith.constant 0 : i32
    %c0_i32_0 = arith.constant 0 : i32
    %c0_i32_1 = arith.constant 0 : i32
    return %c0_i32, %c0_i32_0 : i32, i32
  }
  func.func @transform_6(%arg0: i32) -> (i32, i32) {
    %c0_i32 = arith.constant 0 : i32
    %c0_i32_0 = arith.constant 0 : i32
    return %arg0, %c0_i32 : i32, i32
  }
}

module attributes {stable_mosaic.version = 11 : i64} {
  func.func @_matmul_bias_kernel(%arg0: i32, %arg1: i32, %arg2: memref<16x32xbf16, #tpu.memory_space<vmem>>, %arg3: memref<32x64xbf16, #tpu.memory_space<vmem>>, %arg4: memref<1x64xf32, #tpu.memory_space<vmem>>, %arg5: memref<16x64xbf16, #tpu.memory_space<vmem>>) attributes {dimension_semantics = [#tpu.dimension_semantics<parallel>, #tpu.dimension_semantics<parallel>], iteration_bounds = array<i64: 1, 1>, scalar_prefetch = 0 : i64, scratch_operands = 0 : i64, tpu.core_type = #tpu.core_type<tc>, window_params = [{transform_indices = @transform_0, window_bounds = array<i64: 16, 32>}, {transform_indices = @transform_1, window_bounds = array<i64: 32, 64>}, {transform_indices = @transform_2, window_bounds = array<i64: 1, 64>}, {transform_indices = @transform_3, window_bounds = array<i64: 16, 64>}]} {
    %c0 = arith.constant 0 : index
    %c0_0 = arith.constant 0 : index
    %0 = vector.load %arg2[%c0, %c0_0] : memref<16x32xbf16, #tpu.memory_space<vmem>>, vector<16x32xbf16>
    %c0_1 = arith.constant 0 : index
    %c0_2 = arith.constant 0 : index
    %1 = vector.load %arg3[%c0_1, %c0_2] : memref<32x64xbf16, #tpu.memory_space<vmem>>, vector<32x64xbf16>
    %cst = arith.constant dense<0.000000e+00> : vector<16x64xf32>
    %2 = tpu.matmul %0, %1, %cst {dimension_numbers = #tpu.dot_dimension_numbers<[1], [0], [0], [1], [0, 0, 1, 1], [], []>} : vector<16x32xbf16>, vector<32x64xbf16>, vector<16x64xf32> -> vector<16x64xf32>
    %c0_3 = arith.constant 0 : index
    %c0_4 = arith.constant 0 : index
    %3 = vector.load %arg4[%c0_3, %c0_4] : memref<1x64xf32, #tpu.memory_space<vmem>>, vector<1x64xf32>
    %4 = vector.broadcast %3 : vector<1x64xf32> to vector<16x64xf32>
    %5 = arith.addf %2, %4 : vector<16x64xf32>
    %cst_5 = arith.constant 0.000000e+00 : f32
    %6 = vector.broadcast %cst_5 : f32 to vector<16x64xf32>
    %7 = arith.maximumf %5, %6 : vector<16x64xf32>
    %8 = arith.truncf %7 : vector<16x64xf32> to vector<16x64xbf16>
    %c0_6 = arith.constant 0 : index
    %c0_7 = arith.constant 0 : index
    %9 = vector.load %arg5[%c0_6, %c0_7] : memref<16x64xbf16, #tpu.memory_space<vmem>>, vector<16x64xbf16>
    tpu.vector_store %arg5[%c0_6, %c0_7], %8 {strides = array<i32>} : memref<16x64xbf16, #tpu.memory_space<vmem>>, vector<16x64xbf16>,
    return
  }
  func.func @transform_0(%arg0: i32, %arg1: i32) -> (i32, i32) {
    %c0_i32 = arith.constant 0 : i32
    %c0_i32_0 = arith.constant 0 : i32
    return %arg0, %c0_i32 : i32, i32
  }
  func.func @transform_1(%arg0: i32, %arg1: i32) -> (i32, i32) {
    %c0_i32 = arith.constant 0 : i32
    %c0_i32_0 = arith.constant 0 : i32
    return %c0_i32, %arg1 : i32, i32
  }
  func.func @transform_2(%arg0: i32, %arg1: i32) -> (i32, i32) {
    %c0_i32 = arith.constant 0 : i32
    %c0_i32_0 = arith.constant 0 : i32
    return %c0_i32, %arg1 : i32, i32
  }
  func.func @transform_3(%arg0: i32, %arg1: i32) -> (i32, i32) {
    %c0_i32 = arith.constant 0 : i32
    return %arg0, %arg1 : i32, i32
  }
}

module attributes {stable_mosaic.version = 11 : i64} {
  func.func @_matmul_bias_add_ln_kernel(%arg0: i32, %arg1: memref<16x64xbf16, #tpu.memory_space<vmem>>, %arg2: memref<64x32xbf16, #tpu.memory_space<vmem>>, %arg3: memref<1x32xf32, #tpu.memory_space<vmem>>, %arg4: memref<16x32xbf16, #tpu.memory_space<vmem>>, %arg5: memref<1x32xf32, #tpu.memory_space<vmem>>, %arg6: memref<1x32xf32, #tpu.memory_space<vmem>>, %arg7: memref<16x32xbf16, #tpu.memory_space<vmem>>) attributes {dimension_semantics = [#tpu.dimension_semantics<parallel>], iteration_bounds = array<i64: 1>, scalar_prefetch = 0 : i64, scratch_operands = 0 : i64, tpu.core_type = #tpu.core_type<tc>, window_params = [{transform_indices = @transform_0, window_bounds = array<i64: 16, 64>}, {pipeline_mode = #tpu.pipeline_mode<synchronous>, transform_indices = @transform_1, window_bounds = array<i64: 64, 32>}, {pipeline_mode = #tpu.pipeline_mode<synchronous>, transform_indices = @transform_2, window_bounds = array<i64: 1, 32>}, {transform_indices = @transform_3, window_bounds = array<i64: 16, 32>}, {pipeline_mode = #tpu.pipeline_mode<synchronous>, transform_indices = @transform_4, window_bounds = array<i64: 1, 32>}, {pipeline_mode = #tpu.pipeline_mode<synchronous>, transform_indices = @transform_5, window_bounds = array<i64: 1, 32>}, {transform_indices = @transform_6, window_bounds = array<i64: 16, 32>}]} {
    %c0 = arith.constant 0 : index
    %c0_0 = arith.constant 0 : index
    %0 = vector.load %arg1[%c0, %c0_0] : memref<16x64xbf16, #tpu.memory_space<vmem>>, vector<16x64xbf16>
    %c0_1 = arith.constant 0 : index
    %c0_2 = arith.constant 0 : index
    %1 = vector.load %arg2[%c0_1, %c0_2] : memref<64x32xbf16, #tpu.memory_space<vmem>>, vector<64x32xbf16>
    %cst = arith.constant dense<0.000000e+00> : vector<16x32xf32>
    %2 = tpu.matmul %0, %1, %cst {dimension_numbers = #tpu.dot_dimension_numbers<[1], [0], [0], [1], [0, 0, 1, 1], [], []>} : vector<16x64xbf16>, vector<64x32xbf16>, vector<16x32xf32> -> vector<16x32xf32>
    %c0_3 = arith.constant 0 : index
    %c0_4 = arith.constant 0 : index
    %3 = vector.load %arg3[%c0_3, %c0_4] : memref<1x32xf32, #tpu.memory_space<vmem>>, vector<1x32xf32>
    %4 = vector.broadcast %3 : vector<1x32xf32> to vector<16x32xf32>
    %5 = arith.addf %2, %4 : vector<16x32xf32>
    %c0_5 = arith.constant 0 : index
    %c0_6 = arith.constant 0 : index
    %6 = vector.load %arg4[%c0_5, %c0_6] : memref<16x32xbf16, #tpu.memory_space<vmem>>, vector<16x32xbf16>
    %7 = arith.extf %6 : vector<16x32xbf16> to vector<16x32xf32>
    %8 = arith.addf %5, %7 : vector<16x32xf32>
    %cst_7 = arith.constant dense<0.000000e+00> : vector<16xf32>
    %9 = vector.multi_reduction <add>, %8, %cst_7 [1] : vector<16x32xf32> to vector<16xf32>
    %10 = vector.shape_cast %9 : vector<16xf32> to vector<16x1xf32>
    %cst_8 = arith.constant 3.200000e+01 : f32
    %11 = vector.broadcast %cst_8 : f32 to vector<16x1xf32>
    %12 = arith.divf %10, %11 : vector<16x1xf32>
    %13 = vector.broadcast %12 : vector<16x1xf32> to vector<16x32xf32>
    %14 = arith.subf %8, %13 : vector<16x32xf32>
    %15 = arith.mulf %14, %14 : vector<16x32xf32>
    %cst_9 = arith.constant dense<0.000000e+00> : vector<16xf32>
    %16 = vector.multi_reduction <add>, %15, %cst_9 [1] : vector<16x32xf32> to vector<16xf32>
    %17 = vector.shape_cast %16 : vector<16xf32> to vector<16x1xf32>
    %cst_10 = arith.constant 3.200000e+01 : f32
    %18 = vector.broadcast %cst_10 : f32 to vector<16x1xf32>
    %19 = arith.divf %17, %18 : vector<16x1xf32>
    %cst_11 = arith.constant 9.99999974E-6 : f32
    %20 = vector.broadcast %cst_11 : f32 to vector<16x1xf32>
    %21 = arith.addf %19, %20 : vector<16x1xf32>
    %22 = math.rsqrt %21 : vector<16x1xf32>
    %23 = vector.broadcast %22 : vector<16x1xf32> to vector<16x32xf32>
    %24 = arith.mulf %14, %23 : vector<16x32xf32>
    %c0_12 = arith.constant 0 : index
    %c0_13 = arith.constant 0 : index
    %25 = vector.load %arg5[%c0_12, %c0_13] : memref<1x32xf32, #tpu.memory_space<vmem>>, vector<1x32xf32>
    %26 = vector.broadcast %25 : vector<1x32xf32> to vector<16x32xf32>
    %27 = arith.mulf %24, %26 : vector<16x32xf32>
    %c0_14 = arith.constant 0 : index
    %c0_15 = arith.constant 0 : index
    %28 = vector.load %arg6[%c0_14, %c0_15] : memref<1x32xf32, #tpu.memory_space<vmem>>, vector<1x32xf32>
    %29 = vector.broadcast %28 : vector<1x32xf32> to vector<16x32xf32>
    %30 = arith.addf %27, %29 : vector<16x32xf32>
    %31 = arith.truncf %30 : vector<16x32xf32> to vector<16x32xbf16>
    %c0_16 = arith.constant 0 : index
    %c0_17 = arith.constant 0 : index
    %32 = vector.load %arg7[%c0_16, %c0_17] : memref<16x32xbf16, #tpu.memory_space<vmem>>, vector<16x32xbf16>
    tpu.vector_store %arg7[%c0_16, %c0_17], %31 {strides = array<i32>} : memref<16x32xbf16, #tpu.memory_space<vmem>>, vector<16x32xbf16>,
    return
  }
  func.func @transform_0(%arg0: i32) -> (i32, i32) {
    %c0_i32 = arith.constant 0 : i32
    %c0_i32_0 = arith.constant 0 : i32
    return %arg0, %c0_i32 : i32, i32
  }
  func.func @transform_1(%arg0: i32) -> (i32, i32) {
    %c0_i32 = arith.constant 0 : i32
    %c0_i32_0 = arith.constant 0 : i32
    %c0_i32_1 = arith.constant 0 : i32
    return %c0_i32, %c0_i32_0 : i32, i32
  }
  func.func @transform_2(%arg0: i32) -> (i32, i32) {
    %c0_i32 = arith.constant 0 : i32
    %c0_i32_0 = arith.constant 0 : i32
    %c0_i32_1 = arith.constant 0 : i32
    return %c0_i32, %c0_i32_0 : i32, i32
  }
  func.func @transform_3(%arg0: i32) -> (i32, i32) {
    %c0_i32 = arith.constant 0 : i32
    %c0_i32_0 = arith.constant 0 : i32
    return %arg0, %c0_i32 : i32, i32
  }
  func.func @transform_4(%arg0: i32) -> (i32, i32) {
    %c0_i32 = arith.constant 0 : i32
    %c0_i32_0 = arith.constant 0 : i32
    %c0_i32_1 = arith.constant 0 : i32
    return %c0_i32, %c0_i32_0 : i32, i32
  }
  func.func @transform_5(%arg0: i32) -> (i32, i32) {
    %c0_i32 = arith.constant 0 : i32
    %c0_i32_0 = arith.constant 0 : i32
    %c0_i32_1 = arith.constant 0 : i32
    return %c0_i32, %c0_i32_0 : i32, i32
  }
  func.func @transform_6(%arg0: i32) -> (i32, i32) {
    %c0_i32 = arith.constant 0 : i32
    %c0_i32_0 = arith.constant 0 : i32
    return %arg0, %c0_i32 : i32, i32
  }
}

module attributes {stable_mosaic.version = 11 : i64} {
  func.func @_ln_kernel(%arg0: i32, %arg1: memref<16x32xbf16, #tpu.memory_space<vmem>>, %arg2: memref<1x32xf32, #tpu.memory_space<vmem>>, %arg3: memref<1x32xf32, #tpu.memory_space<vmem>>, %arg4: memref<16x32xbf16, #tpu.memory_space<vmem>>) attributes {dimension_semantics = [#tpu.dimension_semantics<parallel>], iteration_bounds = array<i64: 1>, scalar_prefetch = 0 : i64, scratch_operands = 0 : i64, tpu.core_type = #tpu.core_type<tc>, window_params = [{transform_indices = @transform_0, window_bounds = array<i64: 16, 32>}, {pipeline_mode = #tpu.pipeline_mode<synchronous>, transform_indices = @transform_1, window_bounds = array<i64: 1, 32>}, {pipeline_mode = #tpu.pipeline_mode<synchronous>, transform_indices = @transform_2, window_bounds = array<i64: 1, 32>}, {transform_indices = @transform_3, window_bounds = array<i64: 16, 32>}]} {
    %c0 = arith.constant 0 : index
    %c0_0 = arith.constant 0 : index
    %0 = vector.load %arg1[%c0, %c0_0] : memref<16x32xbf16, #tpu.memory_space<vmem>>, vector<16x32xbf16>
    %1 = arith.extf %0 : vector<16x32xbf16> to vector<16x32xf32>
    %cst = arith.constant dense<0.000000e+00> : vector<16xf32>
    %2 = vector.multi_reduction <add>, %1, %cst [1] : vector<16x32xf32> to vector<16xf32>
    %3 = vector.shape_cast %2 : vector<16xf32> to vector<16x1xf32>
    %cst_1 = arith.constant 3.200000e+01 : f32
    %4 = vector.broadcast %cst_1 : f32 to vector<16x1xf32>
    %5 = arith.divf %3, %4 : vector<16x1xf32>
    %6 = vector.broadcast %5 : vector<16x1xf32> to vector<16x32xf32>
    %7 = arith.subf %1, %6 : vector<16x32xf32>
    %8 = arith.mulf %7, %7 : vector<16x32xf32>
    %cst_2 = arith.constant dense<0.000000e+00> : vector<16xf32>
    %9 = vector.multi_reduction <add>, %8, %cst_2 [1] : vector<16x32xf32> to vector<16xf32>
    %10 = vector.shape_cast %9 : vector<16xf32> to vector<16x1xf32>
    %cst_3 = arith.constant 3.200000e+01 : f32
    %11 = vector.broadcast %cst_3 : f32 to vector<16x1xf32>
    %12 = arith.divf %10, %11 : vector<16x1xf32>
    %cst_4 = arith.constant 9.99999974E-6 : f32
    %13 = vector.broadcast %cst_4 : f32 to vector<16x1xf32>
    %14 = arith.addf %12, %13 : vector<16x1xf32>
    %15 = math.rsqrt %14 : vector<16x1xf32>
    %16 = vector.broadcast %15 : vector<16x1xf32> to vector<16x32xf32>
    %17 = arith.mulf %7, %16 : vector<16x32xf32>
    %c0_5 = arith.constant 0 : index
    %c0_6 = arith.constant 0 : index
    %18 = vector.load %arg2[%c0_5, %c0_6] : memref<1x32xf32, #tpu.memory_space<vmem>>, vector<1x32xf32>
    %19 = vector.broadcast %18 : vector<1x32xf32> to vector<16x32xf32>
    %20 = arith.mulf %17, %19 : vector<16x32xf32>
    %c0_7 = arith.constant 0 : index
    %c0_8 = arith.constant 0 : index
    %21 = vector.load %arg3[%c0_7, %c0_8] : memref<1x32xf32, #tpu.memory_space<vmem>>, vector<1x32xf32>
    %22 = vector.broadcast %21 : vector<1x32xf32> to vector<16x32xf32>
    %23 = arith.addf %20, %22 : vector<16x32xf32>
    %24 = arith.truncf %23 : vector<16x32xf32> to vector<16x32xbf16>
    %c0_9 = arith.constant 0 : index
    %c0_10 = arith.constant 0 : index
    %25 = vector.load %arg4[%c0_9, %c0_10] : memref<16x32xbf16, #tpu.memory_space<vmem>>, vector<16x32xbf16>
    tpu.vector_store %arg4[%c0_9, %c0_10], %24 {strides = array<i32>} : memref<16x32xbf16, #tpu.memory_space<vmem>>, vector<16x32xbf16>,
    return
  }
  func.func @transform_0(%arg0: i32) -> (i32, i32) {
    %c0_i32 = arith.constant 0 : i32
    %c0_i32_0 = arith.constant 0 : i32
    return %arg0, %c0_i32 : i32, i32
  }
  func.func @transform_1(%arg0: i32) -> (i32, i32) {
    %c0_i32 = arith.constant 0 : i32
    %c0_i32_0 = arith.constant 0 : i32
    %c0_i32_1 = arith.constant 0 : i32
    return %c0_i32, %c0_i32_0 : i32, i32
  }
  func.func @transform_2(%arg0: i32) -> (i32, i32) {
    %c0_i32 = arith.constant 0 : i32
    %c0_i32_0 = arith.constant 0 : i32
    %c0_i32_1 = arith.constant 0 : i32
    return %c0_i32, %c0_i32_0 : i32, i32
  }
  func.func @transform_3(%arg0: i32) -> (i32, i32) {
    %c0_i32 = arith.constant 0 : i32
    %c0_i32_0 = arith.constant 0 : i32
    return %arg0, %c0_i32 : i32, i32
  }
}

module attributes {stable_mosaic.version = 11 : i64} {
  func.func @_matmul_bias_kernel(%arg0: i32, %arg1: i32, %arg2: memref<16x32xbf16, #tpu.memory_space<vmem>>, %arg3: memref<32x64xbf16, #tpu.memory_space<vmem>>, %arg4: memref<1x64xf32, #tpu.memory_space<vmem>>, %arg5: memref<16x64xbf16, #tpu.memory_space<vmem>>) attributes {dimension_semantics = [#tpu.dimension_semantics<parallel>, #tpu.dimension_semantics<parallel>], iteration_bounds = array<i64: 1, 1>, scalar_prefetch = 0 : i64, scratch_operands = 0 : i64, tpu.core_type = #tpu.core_type<tc>, window_params = [{transform_indices = @transform_0, window_bounds = array<i64: 16, 32>}, {transform_indices = @transform_1, window_bounds = array<i64: 32, 64>}, {transform_indices = @transform_2, window_bounds = array<i64: 1, 64>}, {transform_indices = @transform_3, window_bounds = array<i64: 16, 64>}]} {
    %c0 = arith.constant 0 : index
    %c0_0 = arith.constant 0 : index
    %0 = vector.load %arg2[%c0, %c0_0] : memref<16x32xbf16, #tpu.memory_space<vmem>>, vector<16x32xbf16>
    %c0_1 = arith.constant 0 : index
    %c0_2 = arith.constant 0 : index
    %1 = vector.load %arg3[%c0_1, %c0_2] : memref<32x64xbf16, #tpu.memory_space<vmem>>, vector<32x64xbf16>
    %cst = arith.constant dense<0.000000e+00> : vector<16x64xf32>
    %2 = tpu.matmul %0, %1, %cst {dimension_numbers = #tpu.dot_dimension_numbers<[1], [0], [0], [1], [0, 0, 1, 1], [], []>} : vector<16x32xbf16>, vector<32x64xbf16>, vector<16x64xf32> -> vector<16x64xf32>
    %c0_3 = arith.constant 0 : index
    %c0_4 = arith.constant 0 : index
    %3 = vector.load %arg4[%c0_3, %c0_4] : memref<1x64xf32, #tpu.memory_space<vmem>>, vector<1x64xf32>
    %4 = vector.broadcast %3 : vector<1x64xf32> to vector<16x64xf32>
    %5 = arith.addf %2, %4 : vector<16x64xf32>
    %6 = arith.truncf %5 : vector<16x64xf32> to vector<16x64xbf16>
    %c0_5 = arith.constant 0 : index
    %c0_6 = arith.constant 0 : index
    %7 = vector.load %arg5[%c0_5, %c0_6] : memref<16x64xbf16, #tpu.memory_space<vmem>>, vector<16x64xbf16>
    tpu.vector_store %arg5[%c0_5, %c0_6], %6 {strides = array<i32>} : memref<16x64xbf16, #tpu.memory_space<vmem>>, vector<16x64xbf16>,
    return
  }
  func.func @transform_0(%arg0: i32, %arg1: i32) -> (i32, i32) {
    %c0_i32 = arith.constant 0 : i32
    %c0_i32_0 = arith.constant 0 : i32
    return %arg0, %c0_i32 : i32, i32
  }
  func.func @transform_1(%arg0: i32, %arg1: i32) -> (i32, i32) {
    %c0_i32 = arith.constant 0 : i32
    %c0_i32_0 = arith.constant 0 : i32
    return %c0_i32, %arg1 : i32, i32
  }
  func.func @transform_2(%arg0: i32, %arg1: i32) -> (i32, i32) {
    %c0_i32 = arith.constant 0 : i32
    %c0_i32_0 = arith.constant 0 : i32
    return %c0_i32, %arg1 : i32, i32
  }
  func.func @transform_3(%arg0: i32, %arg1: i32) -> (i32, i32) {
    %c0_i32 = arith.constant 0 : i32
    return %arg0, %arg1 : i32, i32
  }
}

module attributes {stable_mosaic.version = 11 : i64} {
  func.func @_attn_kernel(%arg0: i32, %arg1: memref<1x8x32xbf16, #tpu.memory_space<vmem>>, %arg2: memref<1x8x32xbf16, #tpu.memory_space<vmem>>, %arg3: memref<1x8x32xbf16, #tpu.memory_space<vmem>>, %arg4: memref<1x1x8xf32, #tpu.memory_space<vmem>>, %arg5: memref<1x8x32xbf16, #tpu.memory_space<vmem>>) attributes {dimension_semantics = [#tpu.dimension_semantics<parallel>], iteration_bounds = array<i64: 2>, scalar_prefetch = 0 : i64, scratch_operands = 0 : i64, tpu.core_type = #tpu.core_type<tc>, window_params = [{transform_indices = @transform_0, window_bounds = array<i64: 1, 8, 32>}, {transform_indices = @transform_1, window_bounds = array<i64: 1, 8, 32>}, {transform_indices = @transform_2, window_bounds = array<i64: 1, 8, 32>}, {transform_indices = @transform_3, window_bounds = array<i64: 1, 1, 8>}, {transform_indices = @transform_4, window_bounds = array<i64: 1, 8, 32>}]} {
    %c0 = arith.constant 0 : index
    %c0_0 = arith.constant 0 : index
    %c0_1 = arith.constant 0 : index
    %0 = vector.load %arg1[%c0, %c0_0, %c0_1] : memref<1x8x32xbf16, #tpu.memory_space<vmem>>, vector<1x8x32xbf16>
    %1 = vector.shape_cast %0 : vector<1x8x32xbf16> to vector<8x32xbf16>
    %c0_2 = arith.constant 0 : index
    %c0_3 = arith.constant 0 : index
    %c0_4 = arith.constant 0 : index
    %2 = vector.load %arg2[%c0_2, %c0_3, %c0_4] : memref<1x8x32xbf16, #tpu.memory_space<vmem>>, vector<1x8x32xbf16>
    %3 = vector.shape_cast %2 : vector<1x8x32xbf16> to vector<8x32xbf16>
    %c0_5 = arith.constant 0 : index
    %c0_6 = arith.constant 0 : index
    %c0_7 = arith.constant 0 : index
    %4 = vector.load %arg3[%c0_5, %c0_6, %c0_7] : memref<1x8x32xbf16, #tpu.memory_space<vmem>>, vector<1x8x32xbf16>
    %5 = vector.shape_cast %4 : vector<1x8x32xbf16> to vector<8x32xbf16>
    %c0_8 = arith.constant 0 : index
    %c0_9 = arith.constant 0 : index
    %c0_10 = arith.constant 0 : index
    %6 = vector.load %arg4[%c0_8, %c0_9, %c0_10] : memref<1x1x8xf32, #tpu.memory_space<vmem>>, vector<1x1x8xf32>
    %7 = vector.shape_cast %6 : vector<1x1x8xf32> to vector<1x8xf32>
    %8 = tpu.iota {dimensions = array<i32: 0>} : vector<8x8xi32>
    %9 = tpu.iota {dimensions = array<i32: 1>} : vector<8x8xi32>
    %10 = arith.cmpi sgt, %9, %8 : vector<8x8xi32>
    %11 = vector.extract_strided_slice %1 {offsets = [0, 0], sizes = [8, 8], strides = [1, 1]} : vector<8x32xbf16> to vector<8x8xbf16>
    %12 = vector.extract_strided_slice %3 {offsets = [0, 0], sizes = [8, 8], strides = [1, 1]} : vector<8x32xbf16> to vector<8x8xbf16>
    %13 = vector.extract_strided_slice %5 {offsets = [0, 0], sizes = [8, 8], strides = [1, 1]} : vector<8x32xbf16> to vector<8x8xbf16>
    %cst = arith.constant dense<0.000000e+00> : vector<8x8xf32>
    %14 = tpu.matmul %11, %12, %cst {dimension_numbers = #tpu.dot_dimension_numbers<[1], [1], [0], [0], [0, 0, 1, 0], [], []>} : vector<8x8xbf16>, vector<8x8xbf16>, vector<8x8xf32> -> vector<8x8xf32>
    %cst_11 = arith.constant 0.353553385 : f32
    %15 = vector.broadcast %cst_11 : f32 to vector<8x8xf32>
    %16 = arith.mulf %14, %15 : vector<8x8xf32>
    %17 = vector.broadcast %7 : vector<1x8xf32> to vector<8x8xf32>
    %18 = arith.addf %16, %17 : vector<8x8xf32>
    %cst_12 = arith.constant -1.000000e+30 : f32
    %19 = vector.broadcast %cst_12 : f32 to vector<8x8xf32>
    %20 = arith.select %10, %19, %18 : vector<8x8xi1>, vector<8x8xf32>
    %cst_13 = arith.constant dense<0xFF800000> : vector<8xf32>
    %21 = vector.multi_reduction <maximumf>, %20, %cst_13 [1] : vector<8x8xf32> to vector<8xf32>
    %22 = vector.shape_cast %21 : vector<8xf32> to vector<8x1xf32>
    %23 = vector.broadcast %22 : vector<8x1xf32> to vector<8x8xf32>
    %24 = arith.subf %20, %23 : vector<8x8xf32>
    %25 = math.exp %24 : vector<8x8xf32>
    %cst_14 = arith.constant dense<0.000000e+00> : vector<8xf32>
    %26 = vector.multi_reduction <add>, %25, %cst_14 [1] : vector<8x8xf32> to vector<8xf32>
    %27 = vector.shape_cast %26 : vector<8xf32> to vector<8x1xf32>
    %28 = tpu.reciprocal %27 {approx = true} : vector<8x1xf32> -> vector<8x1xf32>
    %29 = vector.broadcast %28 : vector<8x1xf32> to vector<8x8xf32>
    %30 = arith.mulf %25, %29 : vector<8x8xf32>
    %31 = arith.truncf %30 : vector<8x8xf32> to vector<8x8xbf16>
    %cst_15 = arith.constant dense<0.000000e+00> : vector<8x8xf32>
    %32 = tpu.matmul %31, %13, %cst_15 {dimension_numbers = #tpu.dot_dimension_numbers<[1], [0], [0], [1], [0, 0, 1, 1], [], []>} : vector<8x8xbf16>, vector<8x8xbf16>, vector<8x8xf32> -> vector<8x8xf32>
    %33 = arith.truncf %32 : vector<8x8xf32> to vector<8x8xbf16>
    %c0_16 = arith.constant 0 : index
    %c0_17 = arith.constant 0 : index
    %c0_18 = arith.constant 0 : index
    %34 = vector.load %arg5[%c0_16, %c0_17, %c0_18] : memref<1x8x32xbf16, #tpu.memory_space<vmem>>, vector<1x8x8xbf16>
    %35 = vector.shape_cast %34 : vector<1x8x8xbf16> to vector<8x8xbf16>
    %36 = vector.shape_cast %33 : vector<8x8xbf16> to vector<1x8x8xbf16>
    tpu.vector_store %arg5[%c0_16, %c0_17, %c0_18], %36 {strides = array<i32>} : memref<1x8x32xbf16, #tpu.memory_space<vmem>>, vector<1x8x8xbf16>,
    %37 = vector.extract_strided_slice %1 {offsets = [0, 8], sizes = [8, 8], strides = [1, 1]} : vector<8x32xbf16> to vector<8x8xbf16>
    %38 = vector.extract_strided_slice %3 {offsets = [0, 8], sizes = [8, 8], strides = [1, 1]} : vector<8x32xbf16> to vector<8x8xbf16>
    %39 = vector.extract_strided_slice %5 {offsets = [0, 8], sizes = [8, 8], strides = [1, 1]} : vector<8x32xbf16> to vector<8x8xbf16>
    %cst_19 = arith.constant dense<0.000000e+00> : vector<8x8xf32>
    %40 = tpu.matmul %37, %38, %cst_19 {dimension_numbers = #tpu.dot_dimension_numbers<[1], [1], [0], [0], [0, 0, 1, 0], [], []>} : vector<8x8xbf16>, vector<8x8xbf16>, vector<8x8xf32> -> vector<8x8xf32>
    %cst_20 = arith.constant 0.353553385 : f32
    %41 = vector.broadcast %cst_20 : f32 to vector<8x8xf32>
    %42 = arith.mulf %40, %41 : vector<8x8xf32>
    %43 = vector.broadcast %7 : vector<1x8xf32> to vector<8x8xf32>
    %44 = arith.addf %42, %43 : vector<8x8xf32>
    %cst_21 = arith.constant -1.000000e+30 : f32
    %45 = vector.broadcast %cst_21 : f32 to vector<8x8xf32>
    %46 = arith.select %10, %45, %44 : vector<8x8xi1>, vector<8x8xf32>
    %cst_22 = arith.constant dense<0xFF800000> : vector<8xf32>
    %47 = vector.multi_reduction <maximumf>, %46, %cst_22 [1] : vector<8x8xf32> to vector<8xf32>
    %48 = vector.shape_cast %47 : vector<8xf32> to vector<8x1xf32>
    %49 = vector.broadcast %48 : vector<8x1xf32> to vector<8x8xf32>
    %50 = arith.subf %46, %49 : vector<8x8xf32>
    %51 = math.exp %50 : vector<8x8xf32>
    %cst_23 = arith.constant dense<0.000000e+00> : vector<8xf32>
    %52 = vector.multi_reduction <add>, %51, %cst_23 [1] : vector<8x8xf32> to vector<8xf32>
    %53 = vector.shape_cast %52 : vector<8xf32> to vector<8x1xf32>
    %54 = tpu.reciprocal %53 {approx = true} : vector<8x1xf32> -> vector<8x1xf32>
    %55 = vector.broadcast %54 : vector<8x1xf32> to vector<8x8xf32>
    %56 = arith.mulf %51, %55 : vector<8x8xf32>
    %57 = arith.truncf %56 : vector<8x8xf32> to vector<8x8xbf16>
    %cst_24 = arith.constant dense<0.000000e+00> : vector<8x8xf32>
    %58 = tpu.matmul %57, %39, %cst_24 {dimension_numbers = #tpu.dot_dimension_numbers<[1], [0], [0], [1], [0, 0, 1, 1], [], []>} : vector<8x8xbf16>, vector<8x8xbf16>, vector<8x8xf32> -> vector<8x8xf32>
    %59 = arith.truncf %58 : vector<8x8xf32> to vector<8x8xbf16>
    %c0_25 = arith.constant 0 : index
    %c0_26 = arith.constant 0 : index
    %c8 = arith.constant 8 : index
    %60 = vector.load %arg5[%c0_25, %c0_26, %c8] : memref<1x8x32xbf16, #tpu.memory_space<vmem>>, vector<1x8x8xbf16>
    %61 = vector.shape_cast %60 : vector<1x8x8xbf16> to vector<8x8xbf16>
    %62 = vector.shape_cast %59 : vector<8x8xbf16> to vector<1x8x8xbf16>
    tpu.vector_store %arg5[%c0_25, %c0_26, %c8], %62 {strides = array<i32>} : memref<1x8x32xbf16, #tpu.memory_space<vmem>>, vector<1x8x8xbf16>,
    %63 = vector.extract_strided_slice %1 {offsets = [0, 16], sizes = [8, 8], strides = [1, 1]} : vector<8x32xbf16> to vector<8x8xbf16>
    %64 = vector.extract_strided_slice %3 {offsets = [0, 16], sizes = [8, 8], strides = [1, 1]} : vector<8x32xbf16> to vector<8x8xbf16>
    %65 = vector.extract_strided_slice %5 {offsets = [0, 16], sizes = [8, 8], strides = [1, 1]} : vector<8x32xbf16> to vector<8x8xbf16>
    %cst_27 = arith.constant dense<0.000000e+00> : vector<8x8xf32>
    %66 = tpu.matmul %63, %64, %cst_27 {dimension_numbers = #tpu.dot_dimension_numbers<[1], [1], [0], [0], [0, 0, 1, 0], [], []>} : vector<8x8xbf16>, vector<8x8xbf16>, vector<8x8xf32> -> vector<8x8xf32>
    %cst_28 = arith.constant 0.353553385 : f32
    %67 = vector.broadcast %cst_28 : f32 to vector<8x8xf32>
    %68 = arith.mulf %66, %67 : vector<8x8xf32>
    %69 = vector.broadcast %7 : vector<1x8xf32> to vector<8x8xf32>
    %70 = arith.addf %68, %69 : vector<8x8xf32>
    %cst_29 = arith.constant -1.000000e+30 : f32
    %71 = vector.broadcast %cst_29 : f32 to vector<8x8xf32>
    %72 = arith.select %10, %71, %70 : vector<8x8xi1>, vector<8x8xf32>
    %cst_30 = arith.constant dense<0xFF800000> : vector<8xf32>
    %73 = vector.multi_reduction <maximumf>, %72, %cst_30 [1] : vector<8x8xf32> to vector<8xf32>
    %74 = vector.shape_cast %73 : vector<8xf32> to vector<8x1xf32>
    %75 = vector.broadcast %74 : vector<8x1xf32> to vector<8x8xf32>
    %76 = arith.subf %72, %75 : vector<8x8xf32>
    %77 = math.exp %76 : vector<8x8xf32>
    %cst_31 = arith.constant dense<0.000000e+00> : vector<8xf32>
    %78 = vector.multi_reduction <add>, %77, %cst_31 [1] : vector<8x8xf32> to vector<8xf32>
    %79 = vector.shape_cast %78 : vector<8xf32> to vector<8x1xf32>
    %80 = tpu.reciprocal %79 {approx = true} : vector<8x1xf32> -> vector<8x1xf32>
    %81 = vector.broadcast %80 : vector<8x1xf32> to vector<8x8xf32>
    %82 = arith.mulf %77, %81 : vector<8x8xf32>
    %83 = arith.truncf %82 : vector<8x8xf32> to vector<8x8xbf16>
    %cst_32 = arith.constant dense<0.000000e+00> : vector<8x8xf32>
    %84 = tpu.matmul %83, %65, %cst_32 {dimension_numbers = #tpu.dot_dimension_numbers<[1], [0], [0], [1], [0, 0, 1, 1], [], []>} : vector<8x8xbf16>, vector<8x8xbf16>, vector<8x8xf32> -> vector<8x8xf32>
    %85 = arith.truncf %84 : vector<8x8xf32> to vector<8x8xbf16>
    %c0_33 = arith.constant 0 : index
    %c0_34 = arith.constant 0 : index
    %c16 = arith.constant 16 : index
    %86 = vector.load %arg5[%c0_33, %c0_34, %c16] : memref<1x8x32xbf16, #tpu.memory_space<vmem>>, vector<1x8x8xbf16>
    %87 = vector.shape_cast %86 : vector<1x8x8xbf16> to vector<8x8xbf16>
    %88 = vector.shape_cast %85 : vector<8x8xbf16> to vector<1x8x8xbf16>
    tpu.vector_store %arg5[%c0_33, %c0_34, %c16], %88 {strides = array<i32>} : memref<1x8x32xbf16, #tpu.memory_space<vmem>>, vector<1x8x8xbf16>,
    %89 = vector.extract_strided_slice %1 {offsets = [0, 24], sizes = [8, 8], strides = [1, 1]} : vector<8x32xbf16> to vector<8x8xbf16>
    %90 = vector.extract_strided_slice %3 {offsets = [0, 24], sizes = [8, 8], strides = [1, 1]} : vector<8x32xbf16> to vector<8x8xbf16>
    %91 = vector.extract_strided_slice %5 {offsets = [0, 24], sizes = [8, 8], strides = [1, 1]} : vector<8x32xbf16> to vector<8x8xbf16>
    %cst_35 = arith.constant dense<0.000000e+00> : vector<8x8xf32>
    %92 = tpu.matmul %89, %90, %cst_35 {dimension_numbers = #tpu.dot_dimension_numbers<[1], [1], [0], [0], [0, 0, 1, 0], [], []>} : vector<8x8xbf16>, vector<8x8xbf16>, vector<8x8xf32> -> vector<8x8xf32>
    %cst_36 = arith.constant 0.353553385 : f32
    %93 = vector.broadcast %cst_36 : f32 to vector<8x8xf32>
    %94 = arith.mulf %92, %93 : vector<8x8xf32>
    %95 = vector.broadcast %7 : vector<1x8xf32> to vector<8x8xf32>
    %96 = arith.addf %94, %95 : vector<8x8xf32>
    %cst_37 = arith.constant -1.000000e+30 : f32
    %97 = vector.broadcast %cst_37 : f32 to vector<8x8xf32>
    %98 = arith.select %10, %97, %96 : vector<8x8xi1>, vector<8x8xf32>
    %cst_38 = arith.constant dense<0xFF800000> : vector<8xf32>
    %99 = vector.multi_reduction <maximumf>, %98, %cst_38 [1] : vector<8x8xf32> to vector<8xf32>
    %100 = vector.shape_cast %99 : vector<8xf32> to vector<8x1xf32>
    %101 = vector.broadcast %100 : vector<8x1xf32> to vector<8x8xf32>
    %102 = arith.subf %98, %101 : vector<8x8xf32>
    %103 = math.exp %102 : vector<8x8xf32>
    %cst_39 = arith.constant dense<0.000000e+00> : vector<8xf32>
    %104 = vector.multi_reduction <add>, %103, %cst_39 [1] : vector<8x8xf32> to vector<8xf32>
    %105 = vector.shape_cast %104 : vector<8xf32> to vector<8x1xf32>
    %106 = tpu.reciprocal %105 {approx = true} : vector<8x1xf32> -> vector<8x1xf32>
    %107 = vector.broadcast %106 : vector<8x1xf32> to vector<8x8xf32>
    %108 = arith.mulf %103, %107 : vector<8x8xf32>
    %109 = arith.truncf %108 : vector<8x8xf32> to vector<8x8xbf16>
    %cst_40 = arith.constant dense<0.000000e+00> : vector<8x8xf32>
    %110 = tpu.matmul %109, %91, %cst_40 {dimension_numbers = #tpu.dot_dimension_numbers<[1], [0], [0], [1], [0, 0, 1, 1], [], []>} : vector<8x8xbf16>, vector<8x8xbf16>, vector<8x8xf32> -> vector<8x8xf32>
    %111 = arith.truncf %110 : vector<8x8xf32> to vector<8x8xbf16>
    %c0_41 = arith.constant 0 : index
    %c0_42 = arith.constant 0 : index
    %c24 = arith.constant 24 : index
    %112 = vector.load %arg5[%c0_41, %c0_42, %c24] : memref<1x8x32xbf16, #tpu.memory_space<vmem>>, vector<1x8x8xbf16>
    %113 = vector.shape_cast %112 : vector<1x8x8xbf16> to vector<8x8xbf16>
    %114 = vector.shape_cast %111 : vector<8x8xbf16> to vector<1x8x8xbf16>
    tpu.vector_store %arg5[%c0_41, %c0_42, %c24], %114 {strides = array<i32>} : memref<1x8x32xbf16, #tpu.memory_space<vmem>>, vector<1x8x8xbf16>,
    return
  }
  func.func @transform_0(%arg0: i32) -> (i32, i32, i32) {
    %c0_i32 = arith.constant 0 : i32
    %c0_i32_0 = arith.constant 0 : i32
    %c0_i32_1 = arith.constant 0 : i32
    return %arg0, %c0_i32, %c0_i32_0 : i32, i32, i32
  }
  func.func @transform_1(%arg0: i32) -> (i32, i32, i32) {
    %c0_i32 = arith.constant 0 : i32
    %c0_i32_0 = arith.constant 0 : i32
    %c0_i32_1 = arith.constant 0 : i32
    return %arg0, %c0_i32, %c0_i32_0 : i32, i32, i32
  }
  func.func @transform_2(%arg0: i32) -> (i32, i32, i32) {
    %c0_i32 = arith.constant 0 : i32
    %c0_i32_0 = arith.constant 0 : i32
    %c0_i32_1 = arith.constant 0 : i32
    return %arg0, %c0_i32, %c0_i32_0 : i32, i32, i32
  }
  func.func @transform_3(%arg0: i32) -> (i32, i32, i32) {
    %c0_i32 = arith.constant 0 : i32
    %c0_i32_0 = arith.constant 0 : i32
    %c0_i32_1 = arith.constant 0 : i32
    return %arg0, %c0_i32, %c0_i32_0 : i32, i32, i32
  }
  func.func @transform_4(%arg0: i32) -> (i32, i32, i32) {
    %c0_i32 = arith.constant 0 : i32
    %c0_i32_0 = arith.constant 0 : i32
    %c0_i32_1 = arith.constant 0 : i32
    return %arg0, %c0_i32, %c0_i32_0 : i32, i32, i32
  }
}

module attributes {stable_mosaic.version = 11 : i64} {
  func.func @_matmul_bias_kernel(%arg0: i32, %arg1: i32, %arg2: memref<16x32xbf16, #tpu.memory_space<vmem>>, %arg3: memref<32x32xbf16, #tpu.memory_space<vmem>>, %arg4: memref<1x32xf32, #tpu.memory_space<vmem>>, %arg5: memref<16x32xbf16, #tpu.memory_space<vmem>>) attributes {dimension_semantics = [#tpu.dimension_semantics<parallel>, #tpu.dimension_semantics<parallel>], iteration_bounds = array<i64: 1, 1>, scalar_prefetch = 0 : i64, scratch_operands = 0 : i64, tpu.core_type = #tpu.core_type<tc>, window_params = [{transform_indices = @transform_0, window_bounds = array<i64: 16, 32>}, {transform_indices = @transform_1, window_bounds = array<i64: 32, 32>}, {transform_indices = @transform_2, window_bounds = array<i64: 1, 32>}, {transform_indices = @transform_3, window_bounds = array<i64: 16, 32>}]} {
    %c0 = arith.constant 0 : index
    %c0_0 = arith.constant 0 : index
    %0 = vector.load %arg2[%c0, %c0_0] : memref<16x32xbf16, #tpu.memory_space<vmem>>, vector<16x32xbf16>
    %c0_1 = arith.constant 0 : index
    %c0_2 = arith.constant 0 : index
    %1 = vector.load %arg3[%c0_1, %c0_2] : memref<32x32xbf16, #tpu.memory_space<vmem>>, vector<32x32xbf16>
    %cst = arith.constant dense<0.000000e+00> : vector<16x32xf32>
    %2 = tpu.matmul %0, %1, %cst {dimension_numbers = #tpu.dot_dimension_numbers<[1], [0], [0], [1], [0, 0, 1, 1], [], []>} : vector<16x32xbf16>, vector<32x32xbf16>, vector<16x32xf32> -> vector<16x32xf32>
    %c0_3 = arith.constant 0 : index
    %c0_4 = arith.constant 0 : index
    %3 = vector.load %arg4[%c0_3, %c0_4] : memref<1x32xf32, #tpu.memory_space<vmem>>, vector<1x32xf32>
    %4 = vector.broadcast %3 : vector<1x32xf32> to vector<16x32xf32>
    %5 = arith.addf %2, %4 : vector<16x32xf32>
    %6 = arith.truncf %5 : vector<16x32xf32> to vector<16x32xbf16>
    %c0_5 = arith.constant 0 : index
    %c0_6 = arith.constant 0 : index
    %7 = vector.load %arg5[%c0_5, %c0_6] : memref<16x32xbf16, #tpu.memory_space<vmem>>, vector<16x32xbf16>
    tpu.vector_store %arg5[%c0_5, %c0_6], %6 {strides = array<i32>} : memref<16x32xbf16, #tpu.memory_space<vmem>>, vector<16x32xbf16>,
    return
  }
  func.func @transform_0(%arg0: i32, %arg1: i32) -> (i32, i32) {
    %c0_i32 = arith.constant 0 : i32
    %c0_i32_0 = arith.constant 0 : i32
    return %arg0, %c0_i32 : i32, i32
  }
  func.func @transform_1(%arg0: i32, %arg1: i32) -> (i32, i32) {
    %c0_i32 = arith.constant 0 : i32
    %c0_i32_0 = arith.constant 0 : i32
    return %c0_i32, %arg1 : i32, i32
  }
  func.func @transform_2(%arg0: i32, %arg1: i32) -> (i32, i32) {
    %c0_i32 = arith.constant 0 : i32
    %c0_i32_0 = arith.constant 0 : i32
    return %c0_i32, %arg1 : i32, i32
  }
  func.func @transform_3(%arg0: i32, %arg1: i32) -> (i32, i32) {
    %c0_i32 = arith.constant 0 : i32
    return %arg0, %arg1 : i32, i32
  }
}

module attributes {stable_mosaic.version = 11 : i64} {
  func.func @_matmul_bias_kernel(%arg0: i32, %arg1: i32, %arg2: memref<16x32xbf16, #tpu.memory_space<vmem>>, %arg3: memref<32x16xbf16, #tpu.memory_space<vmem>>, %arg4: memref<1x16xf32, #tpu.memory_space<vmem>>, %arg5: memref<16x16xf32, #tpu.memory_space<vmem>>) attributes {dimension_semantics = [#tpu.dimension_semantics<parallel>, #tpu.dimension_semantics<parallel>], iteration_bounds = array<i64: 1, 1>, scalar_prefetch = 0 : i64, scratch_operands = 0 : i64, tpu.core_type = #tpu.core_type<tc>, window_params = [{transform_indices = @transform_0, window_bounds = array<i64: 16, 32>}, {transform_indices = @transform_1, window_bounds = array<i64: 32, 16>}, {transform_indices = @transform_2, window_bounds = array<i64: 1, 16>}, {transform_indices = @transform_3, window_bounds = array<i64: 16, 16>}]} {
    %c0 = arith.constant 0 : index
    %c0_0 = arith.constant 0 : index
    %0 = vector.load %arg2[%c0, %c0_0] : memref<16x32xbf16, #tpu.memory_space<vmem>>, vector<16x32xbf16>
    %c0_1 = arith.constant 0 : index
    %c0_2 = arith.constant 0 : index
    %1 = vector.load %arg3[%c0_1, %c0_2] : memref<32x16xbf16, #tpu.memory_space<vmem>>, vector<32x16xbf16>
    %cst = arith.constant dense<0.000000e+00> : vector<16x16xf32>
    %2 = tpu.matmul %0, %1, %cst {dimension_numbers = #tpu.dot_dimension_numbers<[1], [0], [0], [1], [0, 0, 1, 1], [], []>} : vector<16x32xbf16>, vector<32x16xbf16>, vector<16x16xf32> -> vector<16x16xf32>
    %c0_3 = arith.constant 0 : index
    %c0_4 = arith.constant 0 : index
    %3 = vector.load %arg4[%c0_3, %c0_4] : memref<1x16xf32, #tpu.memory_space<vmem>>, vector<1x16xf32>
    %4 = vector.broadcast %3 : vector<1x16xf32> to vector<16x16xf32>
    %5 = arith.addf %2, %4 : vector<16x16xf32>
    %c0_5 = arith.constant 0 : index
    %c0_6 = arith.constant 0 : index
    %6 = vector.load %arg5[%c0_5, %c0_6] : memref<16x16xf32, #tpu.memory_space<vmem>>, vector<16x16xf32>
    tpu.vector_store %arg5[%c0_5, %c0_6], %5 {strides = array<i32>} : memref<16x16xf32, #tpu.memory_space<vmem>>, vector<16x16xf32>,
    return
  }
  func.func @transform_0(%arg0: i32, %arg1: i32) -> (i32, i32) {
    %c0_i32 = arith.constant 0 : i32
    %c0_i32_0 = arith.constant 0 : i32
    return %arg0, %c0_i32 : i32, i32
  }
  func.func @transform_1(%arg0: i32, %arg1: i32) -> (i32, i32) {
    %c0_i32 = arith.constant 0 : i32
    %c0_i32_0 = arith.constant 0 : i32
    return %c0_i32, %arg1 : i32, i32
  }
  func.func @transform_2(%arg0: i32, %arg1: i32) -> (i32, i32) {
    %c0_i32 = arith.constant 0 : i32
    %c0_i32_0 = arith.constant 0 : i32
    return %c0_i32, %arg1 : i32, i32
  }
  func.func @transform_3(%arg0: i32, %arg1: i32) -> (i32, i32) {
    %c0_i32 = arith.constant 0 : i32
    return %arg0, %arg1 : i32, i32
  }
}

</mosaic_0001>

<llo_original>
// kernel: gcd_transformer_forward.31
$region0: #{gcd_transformer_forward.31}
  #allocation0 [shape = 'u32[]', space=smem, size = 0x4, offset = 0x4, fixed_abs, tag = 'smem constant byte address 0x4 - core index']
  #allocation1 [shape = 'u32[144,128]{1,0:T(1,128)}', space=vmem, size = 0x12000, scoped, tag = 'internal scratch']
  %s0 = inlined_call_operand.vmem [shape: bf16[16,32], index: 0, kind: input, shape index: {}]
  %s1 = inlined_call_operand.vmem [shape: bf16[32,96], index: 1, kind: input, shape index: {}]
  %s2 = inlined_call_operand.vmem [shape: f32[1,96], index: 2, kind: input, shape index: {}]
  %s3 = inlined_call_operand.vmem [shape: bf16[16,96], index: 3, kind: output, shape index: {}]
  %s4 = sld [smem:[#allocation0]]
  $region22: #{gcd_transformer_forward.31} parent=0
    _
  %s6 = ssub.s32 1, %s4
  %s7 = scalar_select 0, %s6, %s4
  // Predicated region
  $region2: #{gcd_transformer_forward.31} parent=0 // pred_check
    _
  $region3: #{gcd_transformer_forward.31} parent=0 // pred_check_branch
    %9 = sbr.rel (0) target = $region5
  $region4: #{gcd_transformer_forward.31} parent=0 // pred_region
    _
  $region5: #{gcd_transformer_forward.31} parent=0 // pred_fallthru
    _
  // Predicated region
  $region6: #{gcd_transformer_forward.31} parent=0 // pred_check
    _
  $region7: #{gcd_transformer_forward.31} parent=0 // pred_check_branch
    %11 = sbr.rel (0) target = $region9
  $region8: #{gcd_transformer_forward.31} parent=0 // pred_region
    _
  $region9: #{gcd_transformer_forward.31} parent=0 // pred_fallthru
    _
  // Predicated region
  $region10: #{gcd_transformer_forward.31} parent=0 // pred_check
    _
  $region11: #{gcd_transformer_forward.31} parent=0 // pred_check_branch
    %13 = sbr.rel (0) target = $region13
  $region12: #{gcd_transformer_forward.31} parent=0 // pred_region
    _
  $region13: #{gcd_transformer_forward.31} parent=0 // pred_fallthru
    _
  %v15 = vld [vmem:[%s0] sm:$0xf]
  %v16 = vld [vmem:[%s0 + $0x4] sm:$0xf]
  %v17 = vld [vmem:[%s1] sm:$0xf]
  %v18 = vld [vmem:[%s1 + $0x4] sm:$0xf]
  %v19 = vld [vmem:[%s1 + $0x8] sm:$0xf]
  %v20 = vld [vmem:[%s1 + $0xc] sm:$0xf]
  %v21 = vld [vmem:[%s2] sm:$0x1]
  %v23 = vlaneseq
  %v24 = vshrl.u32 %v23, 7
  %v25 = vsub.s32 0, %v24
  %v26 = vrot.slane %v21, %v25
  %v30 = vunpack.c.l.b16 %v15
  %v31 = vunpack.c.l.b16 %v16
  %v32 = vpack.c.b16 %v31, %v30
  %v37 = vunpack.c.l.b16 %v17
  %v38 = vunpack.c.l.b16 %v18
  %v39 = vunpack.c.l.b16 %v19
  %v40 = vunpack.c.l.b16 %v20
  %v41 = vpack.c.b16 %v38, %v37
  %v42 = vpack.c.b16 %v40, %v39
  %vm45 = vcmask 261120
  %v47 = vsel %vm45, %v32, 0
  %49 = vmatprep.subr.bf16.mxu0 0
  %50 = vmatpush1.bf16.msra.mxu0 %v41
  %51 = vmatprep.subr.bf16.mxu0 0
  %52 = vmatpush1.bf16.msra.mxu0 %v42
  %53 = vmatprep.subr.bf16.mxu0 0
  %54 = vmatpush1.bf16.msra.mxu0 0
  %55 = vmatprep.subr.bf16.mxu0 0
  %56 = vmatpush1.bf16.msra.mxu0 0
  %57 = vmatprep.subr.bf16.mxu0 0
  %58 = vmatpush1.bf16.msra.mxu0 0
  %59 = vmatprep.subr.bf16.mxu0 0
  %60 = vmatpush1.bf16.msra.mxu0 0
  %61 = vmatprep.subr.bf16.mxu0 0
  %62 = vmatpush1.bf16.msra.mxu0 0
  %63 = vmatprep.subr.bf16.mxu0 0
  %64 = vmatpush1.bf16.msra.mxu0 0
  %65 = vmatprep.subr.bf16.mxu0 0
  %66 = vmatpush1.bf16.msra.mxu0 0
  %67 = vmatprep.subr.bf16.mxu0 0
  %68 = vmatpush1.bf16.msra.mxu0 0
  %69 = vmatprep.subr.bf16.mxu0 0
  %70 = vmatpush1.bf16.msra.mxu0 0
  %71 = vmatprep.subr.bf16.mxu0 0
  %72 = vmatpush1.bf16.msra.mxu0 0
  %73 = vmatprep.subr.bf16.mxu0 0
  %74 = vmatpush1.bf16.msra.mxu0 0
  %75 = vmatprep.subr.bf16.mxu0 0
  %76 = vmatpush1.bf16.msra.mxu0 0
  %77 = vmatprep.subr.bf16.mxu0 0
  %78 = vmatpush1.bf16.msra.mxu0 0
  %79 = vmatprep.subr.bf16.mxu0 0
  %80 = vmatpush1.bf16.msra.mxu0 0
  %81 = vmatprep.mubr.bf16.mxu0 0
  %82 = vmatmul.mubr.bf16.gmra.mrb[0].mxu0 %v47
  %v83 = vpop.f32.mrb[0].mxu0
  %v84 = vadd.f32 %v26, %v83
  %v85 = vpop.f32.mrb[0].mxu0
  %v86 = vpop.f32.mrb[0].mxu0
  %v87 = vadd.f32 %v26, %v86
  %v88 = vpop.f32.mrb[0].mxu0
  %89 = vdwg.mxu0
  %v90 = vpack.c.bf16 %v87, %v84
  %v92 = vunpack.c.l.b16 %v90
  %v93 = vunpack.c.h.b16 %v90
  %v94 = vpack.c.b16 %v92, %v92
  %v95 = vpack.c.b16 %v93, %v93
  %vm98 = vcmask 781312
  %99 = vst.msk [vmem:[%s3] sm:$0xf] %vm98, %v94
  %100 = vst.msk [vmem:[%s3 + $0x4] sm:$0xf] %vm98, %v95
  // Predicated region
  $region14: #{gcd_transformer_forward.31} parent=0 // pred_check
    _
  $region15: #{gcd_transformer_forward.31} parent=0 // pred_check_branch
    %102 = sbr.rel (0) target = $region17
  $region16: #{gcd_transformer_forward.31} parent=0 // pred_region
    _
  $region17: #{gcd_transformer_forward.31} parent=0 // pred_fallthru
    _
  // Predicated region
  $region18: #{gcd_transformer_forward.31} parent=0 // pred_check
    _
  $region19: #{gcd_transformer_forward.31} parent=0 // pred_check_branch
    %104 = sbr.rel (0) target = $region21
  $region20: #{gcd_transformer_forward.31} parent=0 // pred_region
    _
  $region21: #{gcd_transformer_forward.31} parent=0 // pred_fallthru
    _

// kernel: gcd_transformer_forward.34
$region0: #{gcd_transformer_forward.34}
  #allocation0 [shape = 'u32[]', space=smem, size = 0x4, offset = 0x4, fixed_abs, tag = 'smem constant byte address 0x4 - core index']
  #allocation1 [shape = 'u32[144,128]{1,0:T(1,128)}', space=vmem, size = 0x12000, scoped, tag = 'internal scratch']
  %s0 = inlined_call_operand.vmem [shape: bf16[16,32], index: 0, kind: input, shape index: {}]
  %s1 = inlined_call_operand.vmem [shape: bf16[32,64], index: 1, kind: input, shape index: {}]
  %s2 = inlined_call_operand.vmem [shape: f32[1,64], index: 2, kind: input, shape index: {}]
  %s3 = inlined_call_operand.vmem [shape: bf16[16,64], index: 3, kind: output, shape index: {}]
  %s4 = sld [smem:[#allocation0]]
  $region22: #{gcd_transformer_forward.34} parent=0
    _
  %s6 = ssub.s32 1, %s4
  %s7 = scalar_select 0, %s6, %s4
  // Predicated region
  $region2: #{gcd_transformer_forward.34} parent=0 // pred_check
    _
  $region3: #{gcd_transformer_forward.34} parent=0 // pred_check_branch
    %9 = sbr.rel (0) target = $region5
  $region4: #{gcd_transformer_forward.34} parent=0 // pred_region
    _
  $region5: #{gcd_transformer_forward.34} parent=0 // pred_fallthru
    _
  // Predicated region
  $region6: #{gcd_transformer_forward.34} parent=0 // pred_check
    _
  $region7: #{gcd_transformer_forward.34} parent=0 // pred_check_branch
    %11 = sbr.rel (0) target = $region9
  $region8: #{gcd_transformer_forward.34} parent=0 // pred_region
    _
  $region9: #{gcd_transformer_forward.34} parent=0 // pred_fallthru
    _
  // Predicated region
  $region10: #{gcd_transformer_forward.34} parent=0 // pred_check
    _
  $region11: #{gcd_transformer_forward.34} parent=0 // pred_check_branch
    %13 = sbr.rel (0) target = $region13
  $region12: #{gcd_transformer_forward.34} parent=0 // pred_region
    _
  $region13: #{gcd_transformer_forward.34} parent=0 // pred_fallthru
    _
  %v15 = vld [vmem:[%s0] sm:$0xf]
  %v16 = vld [vmem:[%s0 + $0x4] sm:$0xf]
  %v17 = vld [vmem:[%s1] sm:$0xf]
  %v18 = vld [vmem:[%s1 + $0x4] sm:$0xf]
  %v19 = vld [vmem:[%s1 + $0x8] sm:$0xf]
  %v20 = vld [vmem:[%s1 + $0xc] sm:$0xf]
  %v21 = vld [vmem:[%s2] sm:$0x1]
  %v23 = vlaneseq
  %v24 = vshrl.u32 %v23, 7
  %v25 = vsub.s32 0, %v24
  %v26 = vrot.slane %v21, %v25
  %v30 = vunpack.c.l.b16 %v15
  %v31 = vunpack.c.l.b16 %v16
  %v32 = vpack.c.b16 %v31, %v30
  %v37 = vunpack.c.l.b16 %v17
  %v38 = vunpack.c.l.b16 %v18
  %v39 = vunpack.c.l.b16 %v19
  %v40 = vunpack.c.l.b16 %v20
  %v41 = vpack.c.b16 %v38, %v37
  %v42 = vpack.c.b16 %v40, %v39
  %vm45 = vcmask 261120
  %v47 = vsel %vm45, %v32, 0
  %49 = vmatprep.subr.bf16.mxu0 0
  %50 = vmatpush1.bf16.msra.mxu0 %v41
  %51 = vmatprep.subr.bf16.mxu0 0
  %52 = vmatpush1.bf16.msra.mxu0 %v42
  %53 = vmatprep.subr.bf16.mxu0 0
  %54 = vmatpush1.bf16.msra.mxu0 0
  %55 = vmatprep.subr.bf16.mxu0 0
  %56 = vmatpush1.bf16.msra.mxu0 0
  %57 = vmatprep.subr.bf16.mxu0 0
  %58 = vmatpush1.bf16.msra.mxu0 0
  %59 = vmatprep.subr.bf16.mxu0 0
  %60 = vmatpush1.bf16.msra.mxu0 0
  %61 = vmatprep.subr.bf16.mxu0 0
  %62 = vmatpush1.bf16.msra.mxu0 0
  %63 = vmatprep.subr.bf16.mxu0 0
  %64 = vmatpush1.bf16.msra.mxu0 0
  %65 = vmatprep.subr.bf16.mxu0 0
  %66 = vmatpush1.bf16.msra.mxu0 0
  %67 = vmatprep.subr.bf16.mxu0 0
  %68 = vmatpush1.bf16.msra.mxu0 0
  %69 = vmatprep.subr.bf16.mxu0 0
  %70 = vmatpush1.bf16.msra.mxu0 0
  %71 = vmatprep.subr.bf16.mxu0 0
  %72 = vmatpush1.bf16.msra.mxu0 0
  %73 = vmatprep.subr.bf16.mxu0 0
  %74 = vmatpush1.bf16.msra.mxu0 0
  %75 = vmatprep.subr.bf16.mxu0 0
  %76 = vmatpush1.bf16.msra.mxu0 0
  %77 = vmatprep.subr.bf16.mxu0 0
  %78 = vmatpush1.bf16.msra.mxu0 0
  %79 = vmatprep.subr.bf16.mxu0 0
  %80 = vmatpush1.bf16.msra.mxu0 0
  %81 = vmatprep.mubr.bf16.mxu0 0
  %82 = vmatmul.mubr.bf16.gmra.mrb[0].mxu0 %v47
  %v83 = vpop.f32.mrb[0].mxu0
  %v84 = vadd.f32 %v26, %v83
  %v85 = vpop.f32.mrb[0].mxu0
  %v86 = vpop.f32.mrb[0].mxu0
  %v87 = vadd.f32 %v26, %v86
  %v88 = vpop.f32.mrb[0].mxu0
  %89 = vdwg.mxu0
  %v90 = vmax.f32 %v84, 0.0
  %v91 = vmax.f32 %v87, 0.0
  %v92 = vpack.c.bf16 %v91, %v90
  %v94 = vunpack.c.l.b16 %v92
  %v95 = vunpack.c.h.b16 %v92
  %v96 = vpack.c.b16 %v94, %v94
  %v97 = vpack.c.b16 %v95, %v95
  %vm100 = vcmask 519168
  %101 = vst.msk [vmem:[%s3] sm:$0xf] %vm100, %v96
  %102 = vst.msk [vmem:[%s3 + $0x4] sm:$0xf] %vm100, %v97
  // Predicated region
  $region14: #{gcd_transformer_forward.34} parent=0 // pred_check
    _
  $region15: #{gcd_transformer_forward.34} parent=0 // pred_check_branch
    %104 = sbr.rel (0) target = $region17
  $region16: #{gcd_transformer_forward.34} parent=0 // pred_region
    _
  $region17: #{gcd_transformer_forward.34} parent=0 // pred_fallthru
    _
  // Predicated region
  $region18: #{gcd_transformer_forward.34} parent=0 // pred_check
    _
  $region19: #{gcd_transformer_forward.34} parent=0 // pred_check_branch
    %106 = sbr.rel (0) target = $region21
  $region20: #{gcd_transformer_forward.34} parent=0 // pred_region
    _
  $region21: #{gcd_transformer_forward.34} parent=0 // pred_fallthru
    _

// kernel: gcd_transformer_forward.33
$region0: #{gcd_transformer_forward.33}
  #allocation0 [shape = 'u32[]', space=smem, size = 0x4, offset = 0x4, fixed_abs, tag = 'smem constant byte address 0x4 - core index']
  #allocation1 [shape = 'u32[144,128]{1,0:T(1,128)}', space=vmem, size = 0x12000, scoped, tag = 'internal scratch']
  %s0 = inlined_call_operand.vmem [shape: bf16[16,32], index: 0, kind: input, shape index: {}]
  %s1 = inlined_call_operand.vmem [shape: bf16[32,32], index: 1, kind: input, shape index: {}]
  %s2 = inlined_call_operand.vmem [shape: f32[1,32], index: 2, kind: input, shape index: {}]
  %s3 = inlined_call_operand.vmem [shape: bf16[16,32], index: 3, kind: input, shape index: {}]
  %s4 = inlined_call_operand.vmem [shape: f32[1,32], index: 4, kind: input, shape index: {}]
  %s5 = inlined_call_operand.vmem [shape: f32[1,32], index: 5, kind: input, shape index: {}]
  %s6 = inlined_call_operand.vmem [shape: bf16[16,32], index: 6, kind: output, shape index: {}]
  %s7 = sld [smem:[#allocation0]]
  $region34: #{gcd_transformer_forward.33} parent=0
    _
  %s9 = ssub.s32 1, %s7
  %s10 = scalar_select 0, %s9, %s7
  // Predicated region
  $region2: #{gcd_transformer_forward.33} parent=0 // pred_check
    _
  $region3: #{gcd_transformer_forward.33} parent=0 // pred_check_branch
    %12 = sbr.rel (0) target = $region5
  $region4: #{gcd_transformer_forward.33} parent=0 // pred_region
    _
  $region5: #{gcd_transformer_forward.33} parent=0 // pred_fallthru
    _
  // Predicated region
  $region6: #{gcd_transformer_forward.33} parent=0 // pred_check
    _
  $region7: #{gcd_transformer_forward.33} parent=0 // pred_check_branch
    %14 = sbr.rel (0) target = $region9
  $region8: #{gcd_transformer_forward.33} parent=0 // pred_region
    _
  $region9: #{gcd_transformer_forward.33} parent=0 // pred_fallthru
    _
  // Predicated region
  $region10: #{gcd_transformer_forward.33} parent=0 // pred_check
    _
  $region11: #{gcd_transformer_forward.33} parent=0 // pred_check_branch
    %16 = sbr.rel (0) target = $region13
  $region12: #{gcd_transformer_forward.33} parent=0 // pred_region
    _
  $region13: #{gcd_transformer_forward.33} parent=0 // pred_fallthru
    _
  // Predicated region
  $region14: #{gcd_transformer_forward.33} parent=0 // pred_check
    _
  $region15: #{gcd_transformer_forward.33} parent=0 // pred_check_branch
    %18 = sbr.rel (0) target = $region17
  $region16: #{gcd_transformer_forward.33} parent=0 // pred_region
    _
  $region17: #{gcd_transformer_forward.33} parent=0 // pred_fallthru
    _
  // Predicated region
  $region18: #{gcd_transformer_forward.33} parent=0 // pred_check
    _
  $region19: #{gcd_transformer_forward.33} parent=0 // pred_check_branch
    %20 = sbr.rel (0) target = $region21
  $region20: #{gcd_transformer_forward.33} parent=0 // pred_region
    _
  $region21: #{gcd_transformer_forward.33} parent=0 // pred_fallthru
    _
  // Predicated region
  $region22: #{gcd_transformer_forward.33} parent=0 // pred_check
    _
  $region23: #{gcd_transformer_forward.33} parent=0 // pred_check_branch
    %22 = sbr.rel (0) target = $region25
  $region24: #{gcd_transformer_forward.33} parent=0 // pred_region
    _
  $region25: #{gcd_transformer_forward.33} parent=0 // pred_fallthru
    _
  %v24 = vld [vmem:[%s0] sm:$0xf]
  %v25 = vld [vmem:[%s0 + $0x4] sm:$0xf]
  %v26 = vld [vmem:[%s1] sm:$0xf]
  %v27 = vld [vmem:[%s1 + $0x4] sm:$0xf]
  %v28 = vld [vmem:[%s1 + $0x8] sm:$0xf]
  %v29 = vld [vmem:[%s1 + $0xc] sm:$0xf]
  %v30 = vld [vmem:[%s2] sm:$0x1]
  %v32 = vlaneseq
  %v33 = vshrl.u32 %v32, 7
  %v34 = vsub.s32 0, %v33
  %v35 = vrot.slane %v30, %v34
  %v39 = vunpack.c.l.b16 %v24
  %v40 = vunpack.c.l.b16 %v25
  %v41 = vpack.c.b16 %v40, %v39
  %v46 = vunpack.c.l.b16 %v26
  %v47 = vunpack.c.l.b16 %v27
  %v48 = vunpack.c.l.b16 %v28
  %v49 = vunpack.c.l.b16 %v29
  %v50 = vpack.c.b16 %v47, %v46
  %v51 = vpack.c.b16 %v49, %v48
  %vm54 = vcmask 261120
  %v56 = vsel %vm54, %v41, 0
  %58 = vmatprep.subr.bf16.mxu0 0
  %59 = vmatpush1.bf16.msra.mxu0 %v50
  %60 = vmatprep.subr.bf16.mxu0 0
  %61 = vmatpush1.bf16.msra.mxu0 %v51
  %62 = vmatprep.subr.bf16.mxu0 0
  %63 = vmatpush1.bf16.msra.mxu0 0
  %64 = vmatprep.subr.bf16.mxu0 0
  %65 = vmatpush1.bf16.msra.mxu0 0
  %66 = vmatprep.subr.bf16.mxu0 0
  %67 = vmatpush1.bf16.msra.mxu0 0
  %68 = vmatprep.subr.bf16.mxu0 0
  %69 = vmatpush1.bf16.msra.mxu0 0
  %70 = vmatprep.subr.bf16.mxu0 0
  %71 = vmatpush1.bf16.msra.mxu0 0
  %72 = vmatprep.subr.bf16.mxu0 0
  %73 = vmatpush1.bf16.msra.mxu0 0
  %74 = vmatprep.subr.bf16.mxu0 0
  %75 = vmatpush1.bf16.msra.mxu0 0
  %76 = vmatprep.subr.bf16.mxu0 0
  %77 = vmatpush1.bf16.msra.mxu0 0
  %78 = vmatprep.subr.bf16.mxu0 0
  %79 = vmatpush1.bf16.msra.mxu0 0
  %80 = vmatprep.subr.bf16.mxu0 0
  %81 = vmatpush1.bf16.msra.mxu0 0
  %82 = vmatprep.subr.bf16.mxu0 0
  %83 = vmatpush1.bf16.msra.mxu0 0
  %84 = vmatprep.subr.bf16.mxu0 0
  %85 = vmatpush1.bf16.msra.mxu0 0
  %86 = vmatprep.subr.bf16.mxu0 0
  %87 = vmatpush1.bf16.msra.mxu0 0
  %88 = vmatprep.subr.bf16.mxu0 0
  %89 = vmatpush1.bf16.msra.mxu0 0
  %90 = vmatprep.mubr.bf16.mxu0 0
  %91 = vmatmul.mubr.bf16.gmra.mrb[0].mxu0 %v56
  %v92 = vpop.f32.mrb[0].mxu0
  %v93 = vadd.f32 %v35, %v92
  %v94 = vpop.f32.mrb[0].mxu0
  %v95 = vpop.f32.mrb[0].mxu0
  %v96 = vadd.f32 %v35, %v95
  %v97 = vpop.f32.mrb[0].mxu0
  %98 = vdwg.mxu0
  %v99 = vld [vmem:[%s3] sm:$0xf]
  %v100 = vld [vmem:[%s3 + $0x4] sm:$0xf]
  %v101 = vunpack.c.l.bf16 %v99
  %v102 = vunpack.c.l.bf16 %v100
  %v103 = vadd.f32 %v93, %v101
  %v104 = vadd.f32 %v96, %v102
  %v105 = vsel %vm54, %v103, 0.0
  %106 = vadd.xlane.f32.xlu0 %v105
  %v107 = vpop.xlane.xlu0 %106
  %v108 = vsel %vm54, %v104, 0.0
  %109 = vadd.xlane.f32.xlu0 %v108
  %v110 = vpop.xlane.xlu0 %109
  %v111 = vrcp.pop 32.0
  %v112 = vmul.f32 %v107, %v111
  %v113 = vmul.f32 %v110, %v111
  %v114 = vsub.f32 %v103, %v112
  %v115 = vsub.f32 %v104, %v113
  %v116 = vmul.f32 %v114, %v114
  %v117 = vmul.f32 %v115, %v115
  %v118 = vsel %vm54, %v116, 0.0
  %119 = vadd.xlane.f32.xlu0 %v118
  %v120 = vpop.xlane.xlu0 %119
  %v121 = vsel %vm54, %v117, 0.0
  %122 = vadd.xlane.f32.xlu0 %v121
  %v123 = vpop.xlane.xlu0 %122
  %v124 = vmul.f32 %v120, %v111
  %v125 = vmul.f32 %v123, %v111
  %v126 = vadd.f32 %v124, 1e-05
  %v127 = vadd.f32 %v125, 1e-05
  %v128 = vrsqrt.pop %v126
  %v129 = vrsqrt.pop %v127
  %v130 = vmul.f32 %v114, %v128
  %v131 = vmul.f32 %v115, %v129
  %v132 = vld [vmem:[%s4] sm:$0x1]
  %v134 = vlaneseq
  %v135 = vshrl.u32 %v134, 7
  %v136 = vsub.s32 0, %v135
  %v137 = vrot.slane %v132, %v136
  %v139 = vmul.f32 %v130, %v137
  %v140 = vmul.f32 %v131, %v137
  %v141 = vld [vmem:[%s5] sm:$0x1]
  %v143 = vlaneseq
  %v144 = vshrl.u32 %v143, 7
  %v145 = vsub.s32 0, %v144
  %v146 = vrot.slane %v141, %v145
  %v148 = vadd.f32 %v139, %v146
  %v149 = vadd.f32 %v140, %v146
  %v150 = vpack.c.bf16 %v149, %v148
  %v152 = vunpack.c.l.b16 %v150
  %v153 = vunpack.c.h.b16 %v150
  %v154 = vpack.c.b16 %v152, %v152
  %v155 = vpack.c.b16 %v153, %v153
  %vm158 = vcmask 257024
  %159 = vst.msk [vmem:[%s6] sm:$0xf] %vm158, %v154
  %160 = vst.msk [vmem:[%s6 + $0x4] sm:$0xf] %vm158, %v155
  // Predicated region
  $region26: #{gcd_transformer_forward.33} parent=0 // pred_check
    _
  $region27: #{gcd_transformer_forward.33} parent=0 // pred_check_branch
    %162 = sbr.rel (0) target = $region29
  $region28: #{gcd_transformer_forward.33} parent=0 // pred_region
    _
  $region29: #{gcd_transformer_forward.33} parent=0 // pred_fallthru
    _
  // Predicated region
  $region30: #{gcd_transformer_forward.33} parent=0 // pred_check
    _
  $region31: #{gcd_transformer_forward.33} parent=0 // pred_check_branch
    %164 = sbr.rel (0) target = $region33
  $region32: #{gcd_transformer_forward.33} parent=0 // pred_region
    _
  $region33: #{gcd_transformer_forward.33} parent=0 // pred_fallthru
    _

// kernel: gcd_transformer_forward.32
$region0: #{gcd_transformer_forward.32}
  #allocation0 [shape = 'u32[]', space=smem, size = 0x4, offset = 0x4, fixed_abs, tag = 'smem constant byte address 0x4 - core index']
  #allocation1 [shape = 'u32[144,128]{1,0:T(1,128)}', space=vmem, size = 0x12000, scoped, tag = 'internal scratch']
  %s0 = inlined_call_operand.vmem [shape: bf16[2,8,32], index: 0, kind: input, shape index: {}]
  %s1 = inlined_call_operand.vmem [shape: bf16[2,8,32], index: 1, kind: input, shape index: {}]
  %s2 = inlined_call_operand.vmem [shape: bf16[2,8,32], index: 2, kind: input, shape index: {}]
  %s3 = inlined_call_operand.vmem [shape: f32[2,1,8], index: 3, kind: input, shape index: {}]
  %s4 = inlined_call_operand.vmem [shape: bf16[2,8,32], index: 4, kind: output, shape index: {}]
  %s5 = sld [smem:[#allocation0]]
  $region49: #{gcd_transformer_forward.32} parent=0
    _
  %s7 = ssub.s32 1, %s5
  %s8 = scalar_select 0, %s7, %s5
  loop: start=0, step=1, limit=4
  $region2: #{gcd_transformer_forward.32} parent=0 // loop_pre_header
    _
  $region3: #{gcd_transformer_forward.32} parent=0 // loop_header
    %s10 = sphi 0, %s14
    %p11 = scmp.ge.s32.totalorder %s10, 4
    %s20 = sphi 0, %s22
    %s23 = sphi 0, %s20
    %s24 = sphi 0, %s23
    %s40 = sphi 0, %s24
    %s46 = sphi 0, %s48
    %s49 = sphi 0, %s46
    %s50 = sphi 0, %s49
    %s66 = sphi 0, %s50
    %s72 = sphi 0, %s74
    %s75 = sphi 0, %s72
    %s76 = sphi 0, %s75
    %s92 = sphi 0, %s76
    %s98 = sphi 0, %s100
    %s101 = sphi 0, %s98
    %s102 = sphi 0, %s101
    %s118 = sphi 0, %s102
    %s124 = sphi 0, %s126
    %s127 = sphi 0, %s124
    %s128 = sphi 0, %s127
    %s144 = sphi 0, %s128
  $region4: #{gcd_transformer_forward.32} parent=0 // loop_header_branch
    %13 = sbr.rel (%p11) target = $region8
  $region5: #{gcd_transformer_forward.32} parent=0 // loop_body
    %s15 = ssub.s32 %s10, 1
    %s16 = ssub.s32 %s10, 2
    %s17 = sadd.s32 %s10, 1
    %s18 = ssub.s32 %s10, %s17
    %p19 = scmp.eq.s32.totalorder %s18, 0
    %s21 = sadd.s32 %s20, 1
    %s22 = scalar_select %p19, %s20, %s21
    %p25 = pneg %p19
    %p26 = scmp.eq.s32.totalorder %s10, 1
    %p27 = por %p25, %p26
    %p28 = scmp.ne.s32.totalorder %s20, %s23
    %p29 = scmp.eq.s32.totalorder %s10, 0
    %p30 = por %p28, %p29
    %p31 = scmp.ne.s32.totalorder %s20, %s23
    %p32 = scmp.eq.s32.totalorder %s15, 1
    %p33 = por %p31, %p32
    %p34 = scmp.ne.s32.totalorder %s23, %s24
    %p35 = scmp.eq.s32.totalorder %s15, 0
    %p36 = por %p34, %p35
    %p37 = scmp.ne.s32.totalorder %s23, %s24
    %p38 = scmp.eq.s32.totalorder %s16, 1
    %p39 = por %p37, %p38
    %p41 = scmp.ne.s32.totalorder %s24, %s40
    %p42 = scmp.eq.s32.totalorder %s16, 0
    %p43 = por %p41, %p42
    %s44 = ssub.s32 %s10, %s17
    %p45 = scmp.eq.s32.totalorder %s44, 0
    %s47 = sadd.s32 %s46, 1
    %s48 = scalar_select %p45, %s46, %s47
    %p51 = pneg %p45
    %p52 = scmp.eq.s32.totalorder %s10, 1
    %p53 = por %p51, %p52
    %p54 = scmp.ne.s32.totalorder %s46, %s49
    %p55 = scmp.eq.s32.totalorder %s10, 0
    %p56 = por %p54, %p55
    %p57 = scmp.ne.s32.totalorder %s46, %s49
    %p58 = scmp.eq.s32.totalorder %s15, 1
    %p59 = por %p57, %p58
    %p60 = scmp.ne.s32.totalorder %s49, %s50
    %p61 = scmp.eq.s32.totalorder %s15, 0
    %p62 = por %p60, %p61
    %p63 = scmp.ne.s32.totalorder %s49, %s50
    %p64 = scmp.eq.s32.totalorder %s16, 1
    %p65 = por %p63, %p64
    %p67 = scmp.ne.s32.totalorder %s50, %s66
    %p68 = scmp.eq.s32.totalorder %s16, 0
    %p69 = por %p67, %p68
    %s70 = ssub.s32 %s10, %s17
    %p71 = scmp.eq.s32.totalorder %s70, 0
    %s73 = sadd.s32 %s72, 1
    %s74 = scalar_select %p71, %s72, %s73
    %p77 = pneg %p71
    %p78 = scmp.eq.s32.totalorder %s10, 1
    %p79 = por %p77, %p78
    %p80 = scmp.ne.s32.totalorder %s72, %s75
    %p81 = scmp.eq.s32.totalorder %s10, 0
    %p82 = por %p80, %p81
    %p83 = scmp.ne.s32.totalorder %s72, %s75
    %p84 = scmp.eq.s32.totalorder %s15, 1
    %p85 = por %p83, %p84
    %p86 = scmp.ne.s32.totalorder %s75, %s76
    %p87 = scmp.eq.s32.totalorder %s15, 0
    %p88 = por %p86, %p87
    %p89 = scmp.ne.s32.totalorder %s75, %s76
    %p90 = scmp.eq.s32.totalorder %s16, 1
    %p91 = por %p89, %p90
    %p93 = scmp.ne.s32.totalorder %s76, %s92
    %p94 = scmp.eq.s32.totalorder %s16, 0
    %p95 = por %p93, %p94
    %s96 = ssub.s32 %s10, %s17
    %p97 = scmp.eq.s32.totalorder %s96, 0
    %s99 = sadd.s32 %s98, 1
    %s100 = scalar_select %p97, %s98, %s99
    %p103 = pneg %p97
    %p104 = scmp.eq.s32.totalorder %s10, 1
    %p105 = por %p103, %p104
    %p106 = scmp.ne.s32.totalorder %s98, %s101
    %p107 = scmp.eq.s32.totalorder %s10, 0
    %p108 = por %p106, %p107
    %p109 = scmp.ne.s32.totalorder %s98, %s101
    %p110 = scmp.eq.s32.totalorder %s15, 1
    %p111 = por %p109, %p110
    %p112 = scmp.ne.s32.totalorder %s101, %s102
    %p113 = scmp.eq.s32.totalorder %s15, 0
    %p114 = por %p112, %p113
    %p115 = scmp.ne.s32.totalorder %s101, %s102
    %p116 = scmp.eq.s32.totalorder %s16, 1
    %p117 = por %p115, %p116
    %p119 = scmp.ne.s32.totalorder %s102, %s118
    %p120 = scmp.eq.s32.totalorder %s16, 0
    %p121 = por %p119, %p120
    %s122 = ssub.s32 %s10, %s17
    %p123 = scmp.eq.s32.totalorder %s122, 0
    %s125 = sadd.s32 %s124, 1
    %s126 = scalar_select %p123, %s124, %s125
    %p129 = pneg %p123
    %p130 = scmp.eq.s32.totalorder %s10, 1
    %p131 = por %p129, %p130
    %p132 = scmp.ne.s32.totalorder %s124, %s127
    %p133 = scmp.eq.s32.totalorder %s10, 0
    %p134 = por %p132, %p133
    %p135 = scmp.ne.s32.totalorder %s124, %s127
    %p136 = scmp.eq.s32.totalorder %s15, 1
    %p137 = por %p135, %p136
    %p138 = scmp.ne.s32.totalorder %s127, %s128
    %p139 = scmp.eq.s32.totalorder %s15, 0
    %p140 = por %p138, %p139
    %p141 = scmp.ne.s32.totalorder %s127, %s128
    %p142 = scmp.eq.s32.totalorder %s16, 1
    %p143 = por %p141, %p142
    %p145 = scmp.ne.s32.totalorder %s128, %s144
    %p146 = scmp.eq.s32.totalorder %s16, 0
    %p147 = por %p145, %p146
    %p148 = scmp.le.s32.totalorder 1, %s10
    %p149 = scmp.lt.s32.totalorder %s10, 3
    %p150 = pnand %p148, %p149
    %p151 = pneg %p150
    // Predicated region
    $region9: #{gcd_transformer_forward.32} parent=5 // pred_check
      _
    $region10: #{gcd_transformer_forward.32} parent=5 // pred_check_branch
      %153 = sbr.rel (%p150) target = $region12
    $region11: #{gcd_transformer_forward.32} parent=5 // pred_region
      %s154 = ssub.s32 %s10, 1
    $region12: #{gcd_transformer_forward.32} parent=5 // pred_fallthru
      _
    %p155 = scmp.lt.s32.totalorder %s10, 2
    // Predicated region
    $region13: #{gcd_transformer_forward.32} parent=5 // pred_check
      %p156 = pneg %p155
    $region14: #{gcd_transformer_forward.32} parent=5 // pred_check_branch
      %158 = sbr.rel (%p156) target = $region16
    $region15: #{gcd_transformer_forward.32} parent=5 // pred_region
      // Predicated region
      $region17: #{gcd_transformer_forward.32} parent=15 // pred_check
        %p159 = pneg %p30
      $region18: #{gcd_transformer_forward.32} parent=15 // pred_check_branch
        %161 = sbr.rel (%p159) target = $region20
      $region19: #{gcd_transformer_forward.32} parent=15 // pred_region
        %p162 = scmp.lt.s32.totalorder %s10, 1
        %s163 = scalar_select %p162, %s10, 1
        %s164 = smul.addr %s163, 4
        %s165 = scalar_lea.vmem %s0, %s164
      $region20: #{gcd_transformer_forward.32} parent=15 // pred_fallthru
        _
      // Predicated region
      $region21: #{gcd_transformer_forward.32} parent=15 // pred_check
        %p166 = pneg %p56
      $region22: #{gcd_transformer_forward.32} parent=15 // pred_check_branch
        %168 = sbr.rel (%p166) target = $region24
      $region23: #{gcd_transformer_forward.32} parent=15 // pred_region
        %p169 = scmp.lt.s32.totalorder %s10, 1
        %s170 = scalar_select %p169, %s10, 1
        %s171 = smul.addr %s170, 4
        %s172 = scalar_lea.vmem %s1, %s171
      $region24: #{gcd_transformer_forward.32} parent=15 // pred_fallthru
        _
      // Predicated region
      $region25: #{gcd_transformer_forward.32} parent=15 // pred_check
        %p173 = pneg %p82
      $region26: #{gcd_transformer_forward.32} parent=15 // pred_check_branch
        %175 = sbr.rel (%p173) target = $region28
      $region27: #{gcd_transformer_forward.32} parent=15 // pred_region
        %p176 = scmp.lt.s32.totalorder %s10, 1
        %s177 = scalar_select %p176, %s10, 1
        %s178 = smul.addr %s177, 4
        %s179 = scalar_lea.vmem %s2, %s178
      $region28: #{gcd_transformer_forward.32} parent=15 // pred_fallthru
        _
      // Predicated region
      $region29: #{gcd_transformer_forward.32} parent=15 // pred_check
        %p180 = pneg %p108
      $region30: #{gcd_transformer_forward.32} parent=15 // pred_check_branch
        %182 = sbr.rel (%p180) target = $region32
      $region31: #{gcd_transformer_forward.32} parent=15 // pred_region
        %p183 = scmp.lt.s32.totalorder %s10, 1
        %s184 = scalar_select %p183, %s10, 1
        %s185 = scalar_lea.vmem %s3, %s184
      $region32: #{gcd_transformer_forward.32} parent=15 // pred_fallthru
        _
    $region16: #{gcd_transformer_forward.32} parent=5 // pred_fallthru
      _
    %p186 = scmp.le.s32.totalorder 1, %s10
    %p187 = scmp.lt.s32.totalorder %s10, 3
    %p188 = pnand %p186, %p187
    %p189 = pneg %p188
    // Predicated region
    $region33: #{gcd_transformer_forward.32} parent=5 // pred_check
      _
    $region34: #{gcd_transformer_forward.32} parent=5 // pred_check_branch
      %191 = sbr.rel (%p188) target = $region36
    $region35: #{gcd_transformer_forward.32} parent=5 // pred_region
      %s192 = ssub.s32 %s10, 1
      %p193 = scmp.lt.s32.totalorder %s15, 1
      %s194 = scalar_select %p193, %s15, 1
      %s195 = smul.addr %s194, 4
      %s196 = scalar_lea.vmem %s0, %s195
      %p197 = pneg %p36
      %p198 = pneg %p33
      %p199 = scmp.lt.s32.totalorder %s15, 1
      %s200 = scalar_select %p199, %s15, 1
      %s201 = smul.addr %s200, 4
      %s202 = scalar_lea.vmem %s1, %s201
      %p203 = pneg %p62
      %p204 = pneg %p59
      %p205 = scmp.lt.s32.totalorder %s15, 1
      %s206 = scalar_select %p205, %s15, 1
      %s207 = smul.addr %s206, 4
      %s208 = scalar_lea.vmem %s2, %s207
      %p209 = pneg %p88
      %p210 = pneg %p85
      %p211 = scmp.lt.s32.totalorder %s15, 1
      %s212 = scalar_select %p211, %s15, 1
      %s213 = scalar_lea.vmem %s3, %s212
      %p214 = pneg %p114
      %p215 = pneg %p111
      %p216 = pneg %p140
      %p217 = pneg %p137
      %p218 = scmp.lt.s32.totalorder %s15, 1
      %s219 = scalar_select %p218, %s15, 1
      %s220 = smul.addr %s219, 4
      %s221 = scalar_lea.vmem %s4, %s220
      %p222 = scmp.lt.s32.totalorder %s15, 1
      %s223 = scalar_select %p222, %s15, 1
      %s224 = smul.addr %s223, 4
      %s225 = scalar_lea.vmem %s0, %s224
      %p226 = scmp.lt.s32.totalorder %s15, 1
      %s227 = scalar_select %p226, %s15, 1
      %s228 = smul.addr %s227, 4
      %s229 = scalar_lea.vmem %s1, %s228
      %p230 = scmp.lt.s32.totalorder %s15, 1
      %s231 = scalar_select %p230, %s15, 1
      %s232 = smul.addr %s231, 4
      %s233 = scalar_lea.vmem %s2, %s232
      %p234 = scmp.lt.s32.totalorder %s15, 1
      %s235 = scalar_select %p234, %s15, 1
      %s236 = scalar_lea.vmem %s3, %s235
      %p237 = scmp.lt.s32.totalorder %s15, 1
      %s238 = scalar_select %p237, %s15, 1
      %s239 = smul.addr %s238, 4
      %s240 = scalar_lea.vmem %s4, %s239
      %v242 = vld [vmem:[%s225] sm:$0xf]
      %v243 = vld [vmem:[%s229] sm:$0xf]
      %v244 = vld [vmem:[%s233] sm:$0xf]
      %v245 = vld [vmem:[%s236] sm:$0x1]
      %vm246 = vcmask 64512
      %v248 = vsel %vm246, %v242, 0
      %v251 = vsel %vm246, %v243, 0
      %253 = vmatprep.subr.bf16.mxu0 0
      %254 = vmatpush1.bf16.xpose.msra.mxu0 %v251
      %255 = vmatprep.subr.bf16.mxu0 0
      %256 = vmatpush1.bf16.xpose.msra.mxu0 0
      %257 = vmatprep.subr.bf16.mxu0 0
      %258 = vmatpush1.bf16.xpose.msra.mxu0 0
      %259 = vmatprep.subr.bf16.mxu0 0
      %260 = vmatpush1.bf16.xpose.msra.mxu0 0
      %261 = vmatprep.subr.bf16.mxu0 0
      %262 = vmatpush1.bf16.xpose.msra.mxu0 0
      %263 = vmatprep.subr.bf16.mxu0 0
      %264 = vmatpush1.bf16.xpose.msra.mxu0 0
      %265 = vmatprep.subr.bf16.mxu0 0
      %266 = vmatpush1.bf16.xpose.msra.mxu0 0
      %267 = vmatprep.subr.bf16.mxu0 0
      %268 = vmatpush1.bf16.xpose.msra.mxu0 0
      %269 = vmatprep.subr.bf16.mxu0 0
      %270 = vmatpush1.bf16.xpose.msra.mxu0 0
      %271 = vmatprep.subr.bf16.mxu0 0
      %272 = vmatpush1.bf16.xpose.msra.mxu0 0
      %273 = vmatprep.subr.bf16.mxu0 0
      %274 = vmatpush1.bf16.xpose.msra.mxu0 0
      %275 = vmatprep.subr.bf16.mxu0 0
      %276 = vmatpush1.bf16.xpose.msra.mxu0 0
      %277 = vmatprep.subr.bf16.mxu0 0
      %278 = vmatpush1.bf16.xpose.msra.mxu0 0
      %279 = vmatprep.subr.bf16.mxu0 0
      %280 = vmatpush1.bf16.xpose.msra.mxu0 0
      %281 = vmatprep.subr.bf16.mxu0 0
      %282 = vmatpush1.bf16.xpose.msra.mxu0 0
      %283 = vmatprep.subr.bf16.mxu0 0
      %284 = vmatpush1.bf16.xpose.msra.mxu0 0
      %285 = vmatprep.mubr.bf16.mxu0 0
      %286 = vmatmul.mubr.bf16.gmra.mrb[0].mxu0 %v248
      %v287 = vpop.f32.mrb[0].mxu0
      %v288 = vadd.f32 0.0, %v287
      %v289 = vpop.f32.mrb[0].mxu0
      %v290 = vpop.f32.mrb[0].mxu0
      %v291 = vpop.f32.mrb[0].mxu0
      %292 = vdwg.mxu0
      %v293 = vmul.f32 %v288, 0.35355338
      %v295 = vlaneseq
      %v296 = vshrl.u32 %v295, 7
      %v297 = vsub.s32 0, %v296
      %v298 = vrot.slane %v245, %v297
      %v300 = vadd.f32 %v293, %v298
      %v301 = vsel %vm246, %v300, -inf
      %302 = vmax.xlane.f32.xlu0 %v301
      %v303 = vpop.xlane.xlu0 %302
      %v304 = vsub.f32 %v300, %v303
      %v305 = vmul.f32 %v304, 1.442695
      %v306 = vpow.pop %v305
      %v307 = vsel %vm246, %v306, 0.0
      %308 = vadd.xlane.f32.xlu0 %v307
      %v309 = vpop.xlane.xlu0 %308
      %v310 = vrcp.pop %v309
      %v311 = vmul.f32 %v306, %v310
      %v312 = vpack.c.bf16 %v311, %v311
      %v314 = vsel %vm246, %v312, 0
      %vm316 = vcmask 1043456
      %v318 = vsel %vm316, %v244, 0
      %320 = vmatprep.subr.bf16.mxu0 0
      %321 = vmatpush1.bf16.msra.mxu0 %v318
      %322 = vmatprep.subr.bf16.mxu0 0
      %323 = vmatpush1.bf16.msra.mxu0 0
      %324 = vmatprep.subr.bf16.mxu0 0
      %325 = vmatpush1.bf16.msra.mxu0 0
      %326 = vmatprep.subr.bf16.mxu0 0
      %327 = vmatpush1.bf16.msra.mxu0 0
      %328 = vmatprep.subr.bf16.mxu0 0
      %329 = vmatpush1.bf16.msra.mxu0 0
      %330 = vmatprep.subr.bf16.mxu0 0
      %331 = vmatpush1.bf16.msra.mxu0 0
      %332 = vmatprep.subr.bf16.mxu0 0
      %333 = vmatpush1.bf16.msra.mxu0 0
      %334 = vmatprep.subr.bf16.mxu0 0
      %335 = vmatpush1.bf16.msra.mxu0 0
      %336 = vmatprep.subr.bf16.mxu0 0
      %337 = vmatpush1.bf16.msra.mxu0 0
      %338 = vmatprep.subr.bf16.mxu0 0
      %339 = vmatpush1.bf16.msra.mxu0 0
      %340 = vmatprep.subr.bf16.mxu0 0
      %341 = vmatpush1.bf16.msra.mxu0 0
      %342 = vmatprep.subr.bf16.mxu0 0
      %343 = vmatpush1.bf16.msra.mxu0 0
      %344 = vmatprep.subr.bf16.mxu0 0
      %345 = vmatpush1.bf16.msra.mxu0 0
      %346 = vmatprep.subr.bf16.mxu0 0
      %347 = vmatpush1.bf16.msra.mxu0 0
      %348 = vmatprep.subr.bf16.mxu0 0
      %349 = vmatpush1.bf16.msra.mxu0 0
      %350 = vmatprep.subr.bf16.mxu0 0
      %351 = vmatpush1.bf16.msra.mxu0 0
      %352 = vmatprep.mubr.bf16.mxu0 0
      %353 = vmatmul.mubr.bf16.gmra.mrb[0].mxu0 %v314
      %v354 = vpop.f32.mrb[0].mxu0
      %v355 = vadd.f32 0.0, %v354
      %v356 = vpop.f32.mrb[0].mxu0
      %v357 = vpop.f32.mrb[0].mxu0
      %v358 = vpop.f32.mrb[0].mxu0
      %359 = vdwg.mxu0
      %v360 = vpack.c.bf16 %v355, %v355
      %vm361 = vcmask 60416
      %362 = vst.msk [vmem:[%s240] sm:$0xf] %vm361, %v360
      %v364 = vunpack.c.l.b16 %v242
      %v365 = vpack.c.b16 %v364, %v364
      %366 = vrot.lane.b32.xlu0 %v365, 120
      %v367 = vpop.permute.xlu0 %366
      %v369 = vunpack.c.l.b16 %v243
      %v370 = vpack.c.b16 %v369, %v369
      %371 = vrot.lane.b32.xlu0 %v370, 120
      %v372 = vpop.permute.xlu0 %371
      %v374 = vsel %vm246, %v367, 0
      %v377 = vsel %vm246, %v372, 0
      %379 = vmatprep.subr.bf16.mxu0 0
      %380 = vmatpush1.bf16.xpose.msra.mxu0 %v377
      %381 = vmatprep.subr.bf16.mxu0 0
      %382 = vmatpush1.bf16.xpose.msra.mxu0 0
      %383 = vmatprep.subr.bf16.mxu0 0
      %384 = vmatpush1.bf16.xpose.msra.mxu0 0
      %385 = vmatprep.subr.bf16.mxu0 0
      %386 = vmatpush1.bf16.xpose.msra.mxu0 0
      %387 = vmatprep.subr.bf16.mxu0 0
      %388 = vmatpush1.bf16.xpose.msra.mxu0 0
      %389 = vmatprep.subr.bf16.mxu0 0
      %390 = vmatpush1.bf16.xpose.msra.mxu0 0
      %391 = vmatprep.subr.bf16.mxu0 0
      %392 = vmatpush1.bf16.xpose.msra.mxu0 0
      %393 = vmatprep.subr.bf16.mxu0 0
      %394 = vmatpush1.bf16.xpose.msra.mxu0 0
      %395 = vmatprep.subr.bf16.mxu0 0
      %396 = vmatpush1.bf16.xpose.msra.mxu0 0
      %397 = vmatprep.subr.bf16.mxu0 0
      %398 = vmatpush1.bf16.xpose.msra.mxu0 0
      %399 = vmatprep.subr.bf16.mxu0 0
      %400 = vmatpush1.bf16.xpose.msra.mxu0 0
      %401 = vmatprep.subr.bf16.mxu0 0
      %402 = vmatpush1.bf16.xpose.msra.mxu0 0
      %403 = vmatprep.subr.bf16.mxu0 0
      %404 = vmatpush1.bf16.xpose.msra.mxu0 0
      %405 = vmatprep.subr.bf16.mxu0 0
      %406 = vmatpush1.bf16.xpose.msra.mxu0 0
      %407 = vmatprep.subr.bf16.mxu0 0
      %408 = vmatpush1.bf16.xpose.msra.mxu0 0
      %409 = vmatprep.subr.bf16.mxu0 0
      %410 = vmatpush1.bf16.xpose.msra.mxu0 0
      %411 = vmatprep.mubr.bf16.mxu0 0
      %412 = vmatmul.mubr.bf16.gmra.mrb[0].mxu0 %v374
      %v413 = vpop.f32.mrb[0].mxu0
      %v414 = vadd.f32 0.0, %v413
      %v415 = vpop.f32.mrb[0].mxu0
      %v416 = vpop.f32.mrb[0].mxu0
      %v417 = vpop.f32.mrb[0].mxu0
      %418 = vdwg.mxu0
      %v419 = vmul.f32 %v414, 0.35355338
      %v420 = vadd.f32 %v419, %v298
      %v421 = vsel %vm246, %v420, -inf
      %422 = vmax.xlane.f32.xlu0 %v421
      %v423 = vpop.xlane.xlu0 %422
      %v424 = vsub.f32 %v420, %v423
      %v425 = vmul.f32 %v424, 1.442695
      %v426 = vpow.pop %v425
      %v427 = vsel %vm246, %v426, 0.0
      %428 = vadd.xlane.f32.xlu0 %v427
      %v429 = vpop.xlane.xlu0 %428
      %v430 = vrcp.pop %v429
      %v431 = vmul.f32 %v426, %v430
      %v432 = vpack.c.bf16 %v431, %v431
      %v434 = vunpack.c.l.b16 %v244
      %v435 = vpack.c.b16 %v434, %v434
      %436 = vrot.lane.b32.xlu0 %v435, 120
      %v437 = vpop.permute.xlu0 %436
      %v439 = vsel %vm246, %v432, 0
      %v442 = vsel %vm316, %v437, 0
      %444 = vmatprep.subr.bf16.mxu0 0
      %445 = vmatpush1.bf16.msra.mxu0 %v442
      %446 = vmatprep.subr.bf16.mxu0 0
      %447 = vmatpush1.bf16.msra.mxu0 0
      %448 = vmatprep.subr.bf16.mxu0 0
      %449 = vmatpush1.bf16.msra.mxu0 0
      %450 = vmatprep.subr.bf16.mxu0 0
      %451 = vmatpush1.bf16.msra.mxu0 0
      %452 = vmatprep.subr.bf16.mxu0 0
      %453 = vmatpush1.bf16.msra.mxu0 0
      %454 = vmatprep.subr.bf16.mxu0 0
      %455 = vmatpush1.bf16.msra.mxu0 0
      %456 = vmatprep.subr.bf16.mxu0 0
      %457 = vmatpush1.bf16.msra.mxu0 0
      %458 = vmatprep.subr.bf16.mxu0 0
      %459 = vmatpush1.bf16.msra.mxu0 0
      %460 = vmatprep.subr.bf16.mxu0 0
      %461 = vmatpush1.bf16.msra.mxu0 0
      %462 = vmatprep.subr.bf16.mxu0 0
      %463 = vmatpush1.bf16.msra.mxu0 0
      %464 = vmatprep.subr.bf16.mxu0 0
      %465 = vmatpush1.bf16.msra.mxu0 0
      %466 = vmatprep.subr.bf16.mxu0 0
      %467 = vmatpush1.bf16.msra.mxu0 0
      %468 = vmatprep.subr.bf16.mxu0 0
      %469 = vmatpush1.bf16.msra.mxu0 0
      %470 = vmatprep.subr.bf16.mxu0 0
      %471 = vmatpush1.bf16.msra.mxu0 0
      %472 = vmatprep.subr.bf16.mxu0 0
      %473 = vmatpush1.bf16.msra.mxu0 0
      %474 = vmatprep.subr.bf16.mxu0 0
      %475 = vmatpush1.bf16.msra.mxu0 0
      %476 = vmatprep.mubr.bf16.mxu0 0
      %477 = vmatmul.mubr.bf16.gmra.mrb[0].mxu0 %v439
      %v478 = vpop.f32.mrb[0].mxu0
      %v479 = vadd.f32 0.0, %v478
      %v480 = vpop.f32.mrb[0].mxu0
      %v481 = vpop.f32.mrb[0].mxu0
      %v482 = vpop.f32.mrb[0].mxu0
      %483 = vdwg.mxu0
      %v484 = vpack.c.bf16 %v479, %v479
      %v486 = vunpack.c.l.b16 %v484
      %v487 = vpack.c.b16 %v486, %v486
      %488 = vrot.lane.b32.xlu0 %v487, 8
      %v489 = vpop.permute.xlu0 %488
      %vm491 = vcmask 126016
      %492 = vst.msk [vmem:[%s240] sm:$0xf] %vm491, %v489
      %493 = vrot.lane.b32.xlu0 %v365, 112
      %v494 = vpop.permute.xlu0 %493
      %495 = vrot.lane.b32.xlu0 %v370, 112
      %v496 = vpop.permute.xlu0 %495
      %v498 = vsel %vm246, %v494, 0
      %v501 = vsel %vm246, %v496, 0
      %503 = vmatprep.subr.bf16.mxu0 0
      %504 = vmatpush1.bf16.xpose.msra.mxu0 %v501
      %505 = vmatprep.subr.bf16.mxu0 0
      %506 = vmatpush1.bf16.xpose.msra.mxu0 0
      %507 = vmatprep.subr.bf16.mxu0 0
      %508 = vmatpush1.bf16.xpose.msra.mxu0 0
      %509 = vmatprep.subr.bf16.mxu0 0
      %510 = vmatpush1.bf16.xpose.msra.mxu0 0
      %511 = vmatprep.subr.bf16.mxu0 0
      %512 = vmatpush1.bf16.xpose.msra.mxu0 0
      %513 = vmatprep.subr.bf16.mxu0 0
      %514 = vmatpush1.bf16.xpose.msra.mxu0 0
      %515 = vmatprep.subr.bf16.mxu0 0
      %516 = vmatpush1.bf16.xpose.msra.mxu0 0
      %517 = vmatprep.subr.bf16.mxu0 0
      %518 = vmatpush1.bf16.xpose.msra.mxu0 0
      %519 = vmatprep.subr.bf16.mxu0 0
      %520 = vmatpush1.bf16.xpose.msra.mxu0 0
      %521 = vmatprep.subr.bf16.mxu0 0
      %522 = vmatpush1.bf16.xpose.msra.mxu0 0
      %523 = vmatprep.subr.bf16.mxu0 0
      %524 = vmatpush1.bf16.xpose.msra.mxu0 0
      %525 = vmatprep.subr.bf16.mxu0 0
      %526 = vmatpush1.bf16.xpose.msra.mxu0 0
      %527 = vmatprep.subr.bf16.mxu0 0
      %528 = vmatpush1.bf16.xpose.msra.mxu0 0
      %529 = vmatprep.subr.bf16.mxu0 0
      %530 = vmatpush1.bf16.xpose.msra.mxu0 0
      %531 = vmatprep.subr.bf16.mxu0 0
      %532 = vmatpush1.bf16.xpose.msra.mxu0 0
      %533 = vmatprep.subr.bf16.mxu0 0
      %534 = vmatpush1.bf16.xpose.msra.mxu0 0
      %535 = vmatprep.mubr.bf16.mxu0 0
      %536 = vmatmul.mubr.bf16.gmra.mrb[0].mxu0 %v498
      %v537 = vpop.f32.mrb[0].mxu0
      %v538 = vadd.f32 0.0, %v537
      %v539 = vpop.f32.mrb[0].mxu0
      %v540 = vpop.f32.mrb[0].mxu0
      %v541 = vpop.f32.mrb[0].mxu0
      %542 = vdwg.mxu0
      %v543 = vmul.f32 %v538, 0.35355338
      %v544 = vadd.f32 %v543, %v298
      %v545 = vsel %vm246, %v544, -inf
      %546 = vmax.xlane.f32.xlu0 %v545
      %v547 = vpop.xlane.xlu0 %546
      %v548 = vsub.f32 %v544, %v547
      %v549 = vmul.f32 %v548, 1.442695
      %v550 = vpow.pop %v549
      %v551 = vsel %vm246, %v550, 0.0
      %552 = vadd.xlane.f32.xlu0 %v551
      %v553 = vpop.xlane.xlu0 %552
      %v554 = vrcp.pop %v553
      %v555 = vmul.f32 %v550, %v554
      %v556 = vpack.c.bf16 %v555, %v555
      %557 = vrot.lane.b32.xlu0 %v435, 112
      %v558 = vpop.permute.xlu0 %557
      %v560 = vsel %vm246, %v556, 0
      %v563 = vsel %vm316, %v558, 0
      %565 = vmatprep.subr.bf16.mxu0 0
      %566 = vmatpush1.bf16.msra.mxu0 %v563
      %567 = vmatprep.subr.bf16.mxu0 0
      %568 = vmatpush1.bf16.msra.mxu0 0
      %569 = vmatprep.subr.bf16.mxu0 0
      %570 = vmatpush1.bf16.msra.mxu0 0
      %571 = vmatprep.subr.bf16.mxu0 0
      %572 = vmatpush1.bf16.msra.mxu0 0
      %573 = vmatprep.subr.bf16.mxu0 0
      %574 = vmatpush1.bf16.msra.mxu0 0
      %575 = vmatprep.subr.bf16.mxu0 0
      %576 = vmatpush1.bf16.msra.mxu0 0
      %577 = vmatprep.subr.bf16.mxu0 0
      %578 = vmatpush1.bf16.msra.mxu0 0
      %579 = vmatprep.subr.bf16.mxu0 0
      %580 = vmatpush1.bf16.msra.mxu0 0
      %581 = vmatprep.subr.bf16.mxu0 0
      %582 = vmatpush1.bf16.msra.mxu0 0
      %583 = vmatprep.subr.bf16.mxu0 0
      %584 = vmatpush1.bf16.msra.mxu0 0
      %585 = vmatprep.subr.bf16.mxu0 0
      %586 = vmatpush1.bf16.msra.mxu0 0
      %587 = vmatprep.subr.bf16.mxu0 0
      %588 = vmatpush1.bf16.msra.mxu0 0
      %589 = vmatprep.subr.bf16.mxu0 0
      %590 = vmatpush1.bf16.msra.mxu0 0
      %591 = vmatprep.subr.bf16.mxu0 0
      %592 = vmatpush1.bf16.msra.mxu0 0
      %593 = vmatprep.subr.bf16.mxu0 0
      %594 = vmatpush1.bf16.msra.mxu0 0
      %595 = vmatprep.subr.bf16.mxu0 0
      %596 = vmatpush1.bf16.msra.mxu0 0
      %597 = vmatprep.mubr.bf16.mxu0 0
      %598 = vmatmul.mubr.bf16.gmra.mrb[0].mxu0 %v560
      %v599 = vpop.f32.mrb[0].mxu0
      %v600 = vadd.f32 0.0, %v599
      %v601 = vpop.f32.mrb[0].mxu0
      %v602 = vpop.f32.mrb[0].mxu0
      %v603 = vpop.f32.mrb[0].mxu0
      %604 = vdwg.mxu0
      %v605 = vpack.c.bf16 %v600, %v600
      %v607 = vunpack.c.l.b16 %v605
      %v608 = vpack.c.b16 %v607, %v607
      %609 = vrot.lane.b32.xlu0 %v608, 16
      %v610 = vpop.permute.xlu0 %609
      %vm612 = vcmask 191616
      %613 = vst.msk [vmem:[%s240] sm:$0xf] %vm612, %v610
      %614 = vrot.lane.b32.xlu0 %v365, 104
      %v615 = vpop.permute.xlu0 %614
      %616 = vrot.lane.b32.xlu0 %v370, 104
      %v617 = vpop.permute.xlu0 %616
      %v619 = vsel %vm246, %v615, 0
      %v622 = vsel %vm246, %v617, 0
      %624 = vmatprep.subr.bf16.mxu0 0
      %625 = vmatpush1.bf16.xpose.msra.mxu0 %v622
      %626 = vmatprep.subr.bf16.mxu0 0
      %627 = vmatpush1.bf16.xpose.msra.mxu0 0
      %628 = vmatprep.subr.bf16.mxu0 0
      %629 = vmatpush1.bf16.xpose.msra.mxu0 0
      %630 = vmatprep.subr.bf16.mxu0 0
      %631 = vmatpush1.bf16.xpose.msra.mxu0 0
      %632 = vmatprep.subr.bf16.mxu0 0
      %633 = vmatpush1.bf16.xpose.msra.mxu0 0
      %634 = vmatprep.subr.bf16.mxu0 0
      %635 = vmatpush1.bf16.xpose.msra.mxu0 0
      %636 = vmatprep.subr.bf16.mxu0 0
      %637 = vmatpush1.bf16.xpose.msra.mxu0 0
      %638 = vmatprep.subr.bf16.mxu0 0
      %639 = vmatpush1.bf16.xpose.msra.mxu0 0
      %640 = vmatprep.subr.bf16.mxu0 0
      %641 = vmatpush1.bf16.xpose.msra.mxu0 0
      %642 = vmatprep.subr.bf16.mxu0 0
      %643 = vmatpush1.bf16.xpose.msra.mxu0 0
      %644 = vmatprep.subr.bf16.mxu0 0
      %645 = vmatpush1.bf16.xpose.msra.mxu0 0
      %646 = vmatprep.subr.bf16.mxu0 0
      %647 = vmatpush1.bf16.xpose.msra.mxu0 0
      %648 = vmatprep.subr.bf16.mxu0 0
      %649 = vmatpush1.bf16.xpose.msra.mxu0 0
      %650 = vmatprep.subr.bf16.mxu0 0
      %651 = vmatpush1.bf16.xpose.msra.mxu0 0
      %652 = vmatprep.subr.bf16.mxu0 0
      %653 = vmatpush1.bf16.xpose.msra.mxu0 0
      %654 = vmatprep.subr.bf16.mxu0 0
      %655 = vmatpush1.bf16.xpose.msra.mxu0 0
      %656 = vmatprep.mubr.bf16.mxu0 0
      %657 = vmatmul.mubr.bf16.gmra.mrb[0].mxu0 %v619
      %v658 = vpop.f32.mrb[0].mxu0
      %v659 = vadd.f32 0.0, %v658
      %v660 = vpop.f32.mrb[0].mxu0
      %v661 = vpop.f32.mrb[0].mxu0
      %v662 = vpop.f32.mrb[0].mxu0
      %663 = vdwg.mxu0
      %v664 = vmul.f32 %v659, 0.35355338
      %v665 = vadd.f32 %v664, %v298
      %v666 = vsel %vm246, %v665, -inf
      %667 = vmax.xlane.f32.xlu0 %v666
      %v668 = vpop.xlane.xlu0 %667
      %v669 = vsub.f32 %v665, %v668
      %v670 = vmul.f32 %v669, 1.442695
      %v671 = vpow.pop %v670
      %v672 = vsel %vm246, %v671, 0.0
      %673 = vadd.xlane.f32.xlu0 %v672
      %v674 = vpop.xlane.xlu0 %673
      %v675 = vrcp.pop %v674
      %v676 = vmul.f32 %v671, %v675
      %v677 = vpack.c.bf16 %v676, %v676
      %678 = vrot.lane.b32.xlu0 %v435, 104
      %v679 = vpop.permute.xlu0 %678
      %v681 = vsel %vm246, %v677, 0
      %v684 = vsel %vm316, %v679, 0
      %686 = vmatprep.subr.bf16.mxu0 0
      %687 = vmatpush1.bf16.msra.mxu0 %v684
      %688 = vmatprep.subr.bf16.mxu0 0
      %689 = vmatpush1.bf16.msra.mxu0 0
      %690 = vmatprep.subr.bf16.mxu0 0
      %691 = vmatpush1.bf16.msra.mxu0 0
      %692 = vmatprep.subr.bf16.mxu0 0
      %693 = vmatpush1.bf16.msra.mxu0 0
      %694 = vmatprep.subr.bf16.mxu0 0
      %695 = vmatpush1.bf16.msra.mxu0 0
      %696 = vmatprep.subr.bf16.mxu0 0
      %697 = vmatpush1.bf16.msra.mxu0 0
      %698 = vmatprep.subr.bf16.mxu0 0
      %699 = vmatpush1.bf16.msra.mxu0 0
      %700 = vmatprep.subr.bf16.mxu0 0
      %701 = vmatpush1.bf16.msra.mxu0 0
      %702 = vmatprep.subr.bf16.mxu0 0
      %703 = vmatpush1.bf16.msra.mxu0 0
      %704 = vmatprep.subr.bf16.mxu0 0
      %705 = vmatpush1.bf16.msra.mxu0 0
      %706 = vmatprep.subr.bf16.mxu0 0
      %707 = vmatpush1.bf16.msra.mxu0 0
      %708 = vmatprep.subr.bf16.mxu0 0
      %709 = vmatpush1.bf16.msra.mxu0 0
      %710 = vmatprep.subr.bf16.mxu0 0
      %711 = vmatpush1.bf16.msra.mxu0 0
      %712 = vmatprep.subr.bf16.mxu0 0
      %713 = vmatpush1.bf16.msra.mxu0 0
      %714 = vmatprep.subr.bf16.mxu0 0
      %715 = vmatpush1.bf16.msra.mxu0 0
      %716 = vmatprep.subr.bf16.mxu0 0
      %717 = vmatpush1.bf16.msra.mxu0 0
      %718 = vmatprep.mubr.bf16.mxu0 0
      %719 = vmatmul.mubr.bf16.gmra.mrb[0].mxu0 %v681
      %v720 = vpop.f32.mrb[0].mxu0
      %v721 = vadd.f32 0.0, %v720
      %v722 = vpop.f32.mrb[0].mxu0
      %v723 = vpop.f32.mrb[0].mxu0
      %v724 = vpop.f32.mrb[0].mxu0
      %725 = vdwg.mxu0
      %v726 = vpack.c.bf16 %v721, %v721
      %v728 = vunpack.c.l.b16 %v726
      %v729 = vpack.c.b16 %v728, %v728
      %730 = vrot.lane.b32.xlu0 %v729, 24
      %v731 = vpop.permute.xlu0 %730
      %vm733 = vcmask 257216
      %734 = vst.msk [vmem:[%s240] sm:$0xf] %vm733, %v731
      %p735 = scmp.lt.s32.totalorder %s15, 1
      %s736 = scalar_select %p735, %s15, 1
      %s737 = smul.addr %s736, 4
      %s738 = scalar_lea.vmem %s4, %s737
      // Predicated region
      $region37: #{gcd_transformer_forward.32} parent=35 // pred_check
        %p739 = pneg %p137
      $region38: #{gcd_transformer_forward.32} parent=35 // pred_check_branch
        %741 = sbr.rel (%p739) target = $region40
      $region39: #{gcd_transformer_forward.32} parent=35 // pred_region
        _
      $region40: #{gcd_transformer_forward.32} parent=35 // pred_fallthru
        _
    $region36: #{gcd_transformer_forward.32} parent=5 // pred_fallthru
      _
    %p742 = scmp.le.s32.totalorder 2, %s10
    // Predicated region
    $region41: #{gcd_transformer_forward.32} parent=5 // pred_check
      %p743 = pneg %p742
    $region42: #{gcd_transformer_forward.32} parent=5 // pred_check_branch
      %745 = sbr.rel (%p743) target = $region44
    $region43: #{gcd_transformer_forward.32} parent=5 // pred_region
      %s746 = ssub.s32 %s10, 2
      // Predicated region
      $region45: #{gcd_transformer_forward.32} parent=43 // pred_check
        %p747 = pneg %p143
      $region46: #{gcd_transformer_forward.32} parent=43 // pred_check_branch
        %749 = sbr.rel (%p747) target = $region48
      $region47: #{gcd_transformer_forward.32} parent=43 // pred_region
        %p750 = scmp.lt.s32.totalorder %s16, 1
        %s751 = scalar_select %p750, %s16, 1
        %s752 = smul.addr %s751, 4
        %s753 = scalar_lea.vmem %s4, %s752
      $region48: #{gcd_transformer_forward.32} parent=43 // pred_fallthru
        _
    $region44: #{gcd_transformer_forward.32} parent=5 // pred_fallthru
      _
  $region6: #{gcd_transformer_forward.32} parent=0 // loop_footer
    %s14 = sadd.s32 1, %s10
  $region7: #{gcd_transformer_forward.32} parent=0 // loop_footer_branch
    %9 = sbr.rel target = $region3
  $region8: #{gcd_transformer_forward.32} parent=0 // loop_exit
    _

// kernel: gcd_transformer_forward.41
$region0: #{gcd_transformer_forward.41}
  #allocation0 [shape = 'u32[]', space=smem, size = 0x4, offset = 0x4, fixed_abs, tag = 'smem constant byte address 0x4 - core index']
  #allocation1 [shape = 'u32[144,128]{1,0:T(1,128)}', space=vmem, size = 0x12000, scoped, tag = 'internal scratch']
  %s0 = inlined_call_operand.vmem [shape: bf16[16,32], index: 0, kind: input, shape index: {}]
  %s1 = inlined_call_operand.vmem [shape: f32[1,32], index: 1, kind: input, shape index: {}]
  %s2 = inlined_call_operand.vmem [shape: f32[1,32], index: 2, kind: input, shape index: {}]
  %s3 = inlined_call_operand.vmem [shape: bf16[16,32], index: 3, kind: output, shape index: {}]
  %s4 = sld [smem:[#allocation0]]
  $region22: #{gcd_transformer_forward.41} parent=0
    _
  %s6 = ssub.s32 1, %s4
  %s7 = scalar_select 0, %s6, %s4
  // Predicated region
  $region2: #{gcd_transformer_forward.41} parent=0 // pred_check
    _
  $region3: #{gcd_transformer_forward.41} parent=0 // pred_check_branch
    %9 = sbr.rel (0) target = $region5
  $region4: #{gcd_transformer_forward.41} parent=0 // pred_region
    _
  $region5: #{gcd_transformer_forward.41} parent=0 // pred_fallthru
    _
  // Predicated region
  $region6: #{gcd_transformer_forward.41} parent=0 // pred_check
    _
  $region7: #{gcd_transformer_forward.41} parent=0 // pred_check_branch
    %11 = sbr.rel (0) target = $region9
  $region8: #{gcd_transformer_forward.41} parent=0 // pred_region
    _
  $region9: #{gcd_transformer_forward.41} parent=0 // pred_fallthru
    _
  // Predicated region
  $region10: #{gcd_transformer_forward.41} parent=0 // pred_check
    _
  $region11: #{gcd_transformer_forward.41} parent=0 // pred_check_branch
    %13 = sbr.rel (0) target = $region13
  $region12: #{gcd_transformer_forward.41} parent=0 // pred_region
    _
  $region13: #{gcd_transformer_forward.41} parent=0 // pred_fallthru
    _
  %v14 = vld [vmem:[%s0] sm:$0xf]
  %v15 = vld [vmem:[%s0 + $0x4] sm:$0xf]
  %v16 = vunpack.c.l.bf16 %v14
  %v17 = vunpack.c.l.bf16 %v15
  %vm18 = vcmask 261120
  %v19 = vsel %vm18, %v16, 0.0
  %20 = vadd.xlane.f32.xlu0 %v19
  %v21 = vpop.xlane.xlu0 %20
  %v22 = vsel %vm18, %v17, 0.0
  %23 = vadd.xlane.f32.xlu0 %v22
  %v24 = vpop.xlane.xlu0 %23
  %v25 = vrcp.pop 32.0
  %v26 = vmul.f32 %v21, %v25
  %v27 = vmul.f32 %v24, %v25
  %v28 = vsub.f32 %v16, %v26
  %v29 = vsub.f32 %v17, %v27
  %v30 = vmul.f32 %v28, %v28
  %v31 = vmul.f32 %v29, %v29
  %v32 = vsel %vm18, %v30, 0.0
  %33 = vadd.xlane.f32.xlu0 %v32
  %v34 = vpop.xlane.xlu0 %33
  %v35 = vsel %vm18, %v31, 0.0
  %36 = vadd.xlane.f32.xlu0 %v35
  %v37 = vpop.xlane.xlu0 %36
  %v38 = vmul.f32 %v34, %v25
  %v39 = vmul.f32 %v37, %v25
  %v40 = vadd.f32 %v38, 1e-05
  %v41 = vadd.f32 %v39, 1e-05
  %v42 = vrsqrt.pop %v40
  %v43 = vrsqrt.pop %v41
  %v44 = vmul.f32 %v28, %v42
  %v45 = vmul.f32 %v29, %v43
  %v46 = vld [vmem:[%s1] sm:$0x1]
  %v48 = vlaneseq
  %v49 = vshrl.u32 %v48, 7
  %v50 = vsub.s32 0, %v49
  %v51 = vrot.slane %v46, %v50
  %v53 = vmul.f32 %v44, %v51
  %v54 = vmul.f32 %v45, %v51
  %v55 = vld [vmem:[%s2] sm:$0x1]
  %v57 = vlaneseq
  %v58 = vshrl.u32 %v57, 7
  %v59 = vsub.s32 0, %v58
  %v60 = vrot.slane %v55, %v59
  %v62 = vadd.f32 %v53, %v60
  %v63 = vadd.f32 %v54, %v60
  %v64 = vpack.c.bf16 %v63, %v62
  %v66 = vunpack.c.l.b16 %v64
  %v67 = vunpack.c.h.b16 %v64
  %v68 = vpack.c.b16 %v66, %v66
  %v69 = vpack.c.b16 %v67, %v67
  %vm72 = vcmask 257024
  %73 = vst.msk [vmem:[%s3] sm:$0xf] %vm72, %v68
  %74 = vst.msk [vmem:[%s3 + $0x4] sm:$0xf] %vm72, %v69
  // Predicated region
  $region14: #{gcd_transformer_forward.41} parent=0 // pred_check
    _
  $region15: #{gcd_transformer_forward.41} parent=0 // pred_check_branch
    %76 = sbr.rel (0) target = $region17
  $region16: #{gcd_transformer_forward.41} parent=0 // pred_region
    _
  $region17: #{gcd_transformer_forward.41} parent=0 // pred_fallthru
    _
  // Predicated region
  $region18: #{gcd_transformer_forward.41} parent=0 // pred_check
    _
  $region19: #{gcd_transformer_forward.41} parent=0 // pred_check_branch
    %78 = sbr.rel (0) target = $region21
  $region20: #{gcd_transformer_forward.41} parent=0 // pred_region
    _
  $region21: #{gcd_transformer_forward.41} parent=0 // pred_fallthru
    _

// kernel: gcd_transformer_forward.35
$region0: #{gcd_transformer_forward.35}
  #allocation0 [shape = 'u32[]', space=smem, size = 0x4, offset = 0x4, fixed_abs, tag = 'smem constant byte address 0x4 - core index']
  #allocation1 [shape = 'u32[144,128]{1,0:T(1,128)}', space=vmem, size = 0x12000, scoped, tag = 'internal scratch']
  %s0 = inlined_call_operand.vmem [shape: bf16[16,64], index: 0, kind: input, shape index: {}]
  %s1 = inlined_call_operand.vmem [shape: bf16[64,32], index: 1, kind: input, shape index: {}]
  %s2 = inlined_call_operand.vmem [shape: f32[1,32], index: 2, kind: input, shape index: {}]
  %s3 = inlined_call_operand.vmem [shape: bf16[16,32], index: 3, kind: input, shape index: {}]
  %s4 = inlined_call_operand.vmem [shape: f32[1,32], index: 4, kind: input, shape index: {}]
  %s5 = inlined_call_operand.vmem [shape: f32[1,32], index: 5, kind: input, shape index: {}]
  %s6 = inlined_call_operand.vmem [shape: bf16[16,32], index: 6, kind: output, shape index: {}]
  %s7 = sld [smem:[#allocation0]]
  $region34: #{gcd_transformer_forward.35} parent=0
    _
  %s9 = ssub.s32 1, %s7
  %s10 = scalar_select 0, %s9, %s7
  // Predicated region
  $region2: #{gcd_transformer_forward.35} parent=0 // pred_check
    _
  $region3: #{gcd_transformer_forward.35} parent=0 // pred_check_branch
    %12 = sbr.rel (0) target = $region5
  $region4: #{gcd_transformer_forward.35} parent=0 // pred_region
    _
  $region5: #{gcd_transformer_forward.35} parent=0 // pred_fallthru
    _
  // Predicated region
  $region6: #{gcd_transformer_forward.35} parent=0 // pred_check
    _
  $region7: #{gcd_transformer_forward.35} parent=0 // pred_check_branch
    %14 = sbr.rel (0) target = $region9
  $region8: #{gcd_transformer_forward.35} parent=0 // pred_region
    _
  $region9: #{gcd_transformer_forward.35} parent=0 // pred_fallthru
    _
  // Predicated region
  $region10: #{gcd_transformer_forward.35} parent=0 // pred_check
    _
  $region11: #{gcd_transformer_forward.35} parent=0 // pred_check_branch
    %16 = sbr.rel (0) target = $region13
  $region12: #{gcd_transformer_forward.35} parent=0 // pred_region
    _
  $region13: #{gcd_transformer_forward.35} parent=0 // pred_fallthru
    _
  // Predicated region
  $region14: #{gcd_transformer_forward.35} parent=0 // pred_check
    _
  $region15: #{gcd_transformer_forward.35} parent=0 // pred_check_branch
    %18 = sbr.rel (0) target = $region17
  $region16: #{gcd_transformer_forward.35} parent=0 // pred_region
    _
  $region17: #{gcd_transformer_forward.35} parent=0 // pred_fallthru
    _
  // Predicated region
  $region18: #{gcd_transformer_forward.35} parent=0 // pred_check
    _
  $region19: #{gcd_transformer_forward.35} parent=0 // pred_check_branch
    %20 = sbr.rel (0) target = $region21
  $region20: #{gcd_transformer_forward.35} parent=0 // pred_region
    _
  $region21: #{gcd_transformer_forward.35} parent=0 // pred_fallthru
    _
  // Predicated region
  $region22: #{gcd_transformer_forward.35} parent=0 // pred_check
    _
  $region23: #{gcd_transformer_forward.35} parent=0 // pred_check_branch
    %22 = sbr.rel (0) target = $region25
  $region24: #{gcd_transformer_forward.35} parent=0 // pred_region
    _
  $region25: #{gcd_transformer_forward.35} parent=0 // pred_fallthru
    _
  %v24 = vld [vmem:[%s0] sm:$0xf]
  %v25 = vld [vmem:[%s0 + $0x4] sm:$0xf]
  %v26 = vld [vmem:[%s1] sm:$0xf]
  %v27 = vld [vmem:[%s1 + $0x4] sm:$0xf]
  %v28 = vld [vmem:[%s1 + $0x8] sm:$0xf]
  %v29 = vld [vmem:[%s1 + $0xc] sm:$0xf]
  %v30 = vld [vmem:[%s1 + $0x10] sm:$0xf]
  %v31 = vld [vmem:[%s1 + $0x14] sm:$0xf]
  %v32 = vld [vmem:[%s1 + $0x18] sm:$0xf]
  %v33 = vld [vmem:[%s1 + $0x1c] sm:$0xf]
  %v34 = vld [vmem:[%s2] sm:$0x1]
  %v36 = vlaneseq
  %v37 = vshrl.u32 %v36, 7
  %v38 = vsub.s32 0, %v37
  %v39 = vrot.slane %v34, %v38
  %v43 = vunpack.c.l.b16 %v24
  %v44 = vunpack.c.l.b16 %v25
  %v45 = vpack.c.b16 %v44, %v43
  %v54 = vunpack.c.l.b16 %v26
  %v55 = vunpack.c.l.b16 %v27
  %v56 = vunpack.c.l.b16 %v28
  %v57 = vunpack.c.l.b16 %v29
  %v58 = vunpack.c.l.b16 %v30
  %v59 = vunpack.c.l.b16 %v31
  %v60 = vunpack.c.l.b16 %v32
  %v61 = vunpack.c.l.b16 %v33
  %v62 = vpack.c.b16 %v55, %v54
  %v63 = vpack.c.b16 %v57, %v56
  %v64 = vpack.c.b16 %v59, %v58
  %v65 = vpack.c.b16 %v61, %v60
  %vm70 = vcmask 523264
  %v72 = vsel %vm70, %v45, 0
  %74 = vmatprep.subr.bf16.mxu0 0
  %75 = vmatpush1.bf16.msra.mxu0 %v62
  %76 = vmatprep.subr.bf16.mxu0 0
  %77 = vmatpush1.bf16.msra.mxu0 %v63
  %78 = vmatprep.subr.bf16.mxu0 0
  %79 = vmatpush1.bf16.msra.mxu0 %v64
  %80 = vmatprep.subr.bf16.mxu0 0
  %81 = vmatpush1.bf16.msra.mxu0 %v65
  %82 = vmatprep.subr.bf16.mxu0 0
  %83 = vmatpush1.bf16.msra.mxu0 0
  %84 = vmatprep.subr.bf16.mxu0 0
  %85 = vmatpush1.bf16.msra.mxu0 0
  %86 = vmatprep.subr.bf16.mxu0 0
  %87 = vmatpush1.bf16.msra.mxu0 0
  %88 = vmatprep.subr.bf16.mxu0 0
  %89 = vmatpush1.bf16.msra.mxu0 0
  %90 = vmatprep.subr.bf16.mxu0 0
  %91 = vmatpush1.bf16.msra.mxu0 0
  %92 = vmatprep.subr.bf16.mxu0 0
  %93 = vmatpush1.bf16.msra.mxu0 0
  %94 = vmatprep.subr.bf16.mxu0 0
  %95 = vmatpush1.bf16.msra.mxu0 0
  %96 = vmatprep.subr.bf16.mxu0 0
  %97 = vmatpush1.bf16.msra.mxu0 0
  %98 = vmatprep.subr.bf16.mxu0 0
  %99 = vmatpush1.bf16.msra.mxu0 0
  %100 = vmatprep.subr.bf16.mxu0 0
  %101 = vmatpush1.bf16.msra.mxu0 0
  %102 = vmatprep.subr.bf16.mxu0 0
  %103 = vmatpush1.bf16.msra.mxu0 0
  %104 = vmatprep.subr.bf16.mxu0 0
  %105 = vmatpush1.bf16.msra.mxu0 0
  %106 = vmatprep.mubr.bf16.mxu0 0
  %107 = vmatmul.mubr.bf16.gmra.mrb[0].mxu0 %v72
  %v108 = vpop.f32.mrb[0].mxu0
  %v109 = vadd.f32 %v39, %v108
  %v110 = vpop.f32.mrb[0].mxu0
  %v111 = vpop.f32.mrb[0].mxu0
  %v112 = vadd.f32 %v39, %v111
  %v113 = vpop.f32.mrb[0].mxu0
  %114 = vdwg.mxu0
  %v115 = vld [vmem:[%s3] sm:$0xf]
  %v116 = vld [vmem:[%s3 + $0x4] sm:$0xf]
  %v117 = vunpack.c.l.bf16 %v115
  %v118 = vunpack.c.l.bf16 %v116
  %v119 = vadd.f32 %v109, %v117
  %v120 = vadd.f32 %v112, %v118
  %vm121 = vcmask 261120
  %v122 = vsel %vm121, %v119, 0.0
  %123 = vadd.xlane.f32.xlu0 %v122
  %v124 = vpop.xlane.xlu0 %123
  %v125 = vsel %vm121, %v120, 0.0
  %126 = vadd.xlane.f32.xlu0 %v125
  %v127 = vpop.xlane.xlu0 %126
  %v128 = vrcp.pop 32.0
  %v129 = vmul.f32 %v124, %v128
  %v130 = vmul.f32 %v127, %v128
  %v131 = vsub.f32 %v119, %v129
  %v132 = vsub.f32 %v120, %v130
  %v133 = vmul.f32 %v131, %v131
  %v134 = vmul.f32 %v132, %v132
  %v135 = vsel %vm121, %v133, 0.0
  %136 = vadd.xlane.f32.xlu0 %v135
  %v137 = vpop.xlane.xlu0 %136
  %v138 = vsel %vm121, %v134, 0.0
  %139 = vadd.xlane.f32.xlu0 %v138
  %v140 = vpop.xlane.xlu0 %139
  %v141 = vmul.f32 %v137, %v128
  %v142 = vmul.f32 %v140, %v128
  %v143 = vadd.f32 %v141, 1e-05
  %v144 = vadd.f32 %v142, 1e-05
  %v145 = vrsqrt.pop %v143
  %v146 = vrsqrt.pop %v144
  %v147 = vmul.f32 %v131, %v145
  %v148 = vmul.f32 %v132, %v146
  %v149 = vld [vmem:[%s4] sm:$0x1]
  %v151 = vlaneseq
  %v152 = vshrl.u32 %v151, 7
  %v153 = vsub.s32 0, %v152
  %v154 = vrot.slane %v149, %v153
  %v156 = vmul.f32 %v147, %v154
  %v157 = vmul.f32 %v148, %v154
  %v158 = vld [vmem:[%s5] sm:$0x1]
  %v160 = vlaneseq
  %v161 = vshrl.u32 %v160, 7
  %v162 = vsub.s32 0, %v161
  %v163 = vrot.slane %v158, %v162
  %v165 = vadd.f32 %v156, %v163
  %v166 = vadd.f32 %v157, %v163
  %v167 = vpack.c.bf16 %v166, %v165
  %v169 = vunpack.c.l.b16 %v167
  %v170 = vunpack.c.h.b16 %v167
  %v171 = vpack.c.b16 %v169, %v169
  %v172 = vpack.c.b16 %v170, %v170
  %vm175 = vcmask 257024
  %176 = vst.msk [vmem:[%s6] sm:$0xf] %vm175, %v171
  %177 = vst.msk [vmem:[%s6 + $0x4] sm:$0xf] %vm175, %v172
  // Predicated region
  $region26: #{gcd_transformer_forward.35} parent=0 // pred_check
    _
  $region27: #{gcd_transformer_forward.35} parent=0 // pred_check_branch
    %179 = sbr.rel (0) target = $region29
  $region28: #{gcd_transformer_forward.35} parent=0 // pred_region
    _
  $region29: #{gcd_transformer_forward.35} parent=0 // pred_fallthru
    _
  // Predicated region
  $region30: #{gcd_transformer_forward.35} parent=0 // pred_check
    _
  $region31: #{gcd_transformer_forward.35} parent=0 // pred_check_branch
    %181 = sbr.rel (0) target = $region33
  $region32: #{gcd_transformer_forward.35} parent=0 // pred_region
    _
  $region33: #{gcd_transformer_forward.35} parent=0 // pred_fallthru
    _

// kernel: gcd_transformer_forward.46
$region0: #{gcd_transformer_forward.46}
  #allocation0 [shape = 'u32[]', space=smem, size = 0x4, offset = 0x4, fixed_abs, tag = 'smem constant byte address 0x4 - core index']
  #allocation1 [shape = 'u32[144,128]{1,0:T(1,128)}', space=vmem, size = 0x12000, scoped, tag = 'internal scratch']
  %s0 = inlined_call_operand.vmem [shape: bf16[16,32], index: 0, kind: input, shape index: {}]
  %s1 = inlined_call_operand.vmem [shape: bf16[32,64], index: 1, kind: input, shape index: {}]
  %s2 = inlined_call_operand.vmem [shape: f32[1,64], index: 2, kind: input, shape index: {}]
  %s3 = inlined_call_operand.vmem [shape: bf16[16,64], index: 3, kind: output, shape index: {}]
  %s4 = sld [smem:[#allocation0]]
  $region22: #{gcd_transformer_forward.46} parent=0
    _
  %s6 = ssub.s32 1, %s4
  %s7 = scalar_select 0, %s6, %s4
  // Predicated region
  $region2: #{gcd_transformer_forward.46} parent=0 // pred_check
    _
  $region3: #{gcd_transformer_forward.46} parent=0 // pred_check_branch
    %9 = sbr.rel (0) target = $region5
  $region4: #{gcd_transformer_forward.46} parent=0 // pred_region
    _
  $region5: #{gcd_transformer_forward.46} parent=0 // pred_fallthru
    _
  // Predicated region
  $region6: #{gcd_transformer_forward.46} parent=0 // pred_check
    _
  $region7: #{gcd_transformer_forward.46} parent=0 // pred_check_branch
    %11 = sbr.rel (0) target = $region9
  $region8: #{gcd_transformer_forward.46} parent=0 // pred_region
    _
  $region9: #{gcd_transformer_forward.46} parent=0 // pred_fallthru
    _
  // Predicated region
  $region10: #{gcd_transformer_forward.46} parent=0 // pred_check
    _
  $region11: #{gcd_transformer_forward.46} parent=0 // pred_check_branch
    %13 = sbr.rel (0) target = $region13
  $region12: #{gcd_transformer_forward.46} parent=0 // pred_region
    _
  $region13: #{gcd_transformer_forward.46} parent=0 // pred_fallthru
    _
  %v15 = vld [vmem:[%s0] sm:$0xf]
  %v16 = vld [vmem:[%s0 + $0x4] sm:$0xf]
  %v17 = vld [vmem:[%s1] sm:$0xf]
  %v18 = vld [vmem:[%s1 + $0x4] sm:$0xf]
  %v19 = vld [vmem:[%s1 + $0x8] sm:$0xf]
  %v20 = vld [vmem:[%s1 + $0xc] sm:$0xf]
  %v21 = vld [vmem:[%s2] sm:$0x1]
  %v23 = vlaneseq
  %v24 = vshrl.u32 %v23, 7
  %v25 = vsub.s32 0, %v24
  %v26 = vrot.slane %v21, %v25
  %v30 = vunpack.c.l.b16 %v15
  %v31 = vunpack.c.l.b16 %v16
  %v32 = vpack.c.b16 %v31, %v30
  %v37 = vunpack.c.l.b16 %v17
  %v38 = vunpack.c.l.b16 %v18
  %v39 = vunpack.c.l.b16 %v19
  %v40 = vunpack.c.l.b16 %v20
  %v41 = vpack.c.b16 %v38, %v37
  %v42 = vpack.c.b16 %v40, %v39
  %vm45 = vcmask 261120
  %v47 = vsel %vm45, %v32, 0
  %49 = vmatprep.subr.bf16.mxu0 0
  %50 = vmatpush1.bf16.msra.mxu0 %v41
  %51 = vmatprep.subr.bf16.mxu0 0
  %52 = vmatpush1.bf16.msra.mxu0 %v42
  %53 = vmatprep.subr.bf16.mxu0 0
  %54 = vmatpush1.bf16.msra.mxu0 0
  %55 = vmatprep.subr.bf16.mxu0 0
  %56 = vmatpush1.bf16.msra.mxu0 0
  %57 = vmatprep.subr.bf16.mxu0 0
  %58 = vmatpush1.bf16.msra.mxu0 0
  %59 = vmatprep.subr.bf16.mxu0 0
  %60 = vmatpush1.bf16.msra.mxu0 0
  %61 = vmatprep.subr.bf16.mxu0 0
  %62 = vmatpush1.bf16.msra.mxu0 0
  %63 = vmatprep.subr.bf16.mxu0 0
  %64 = vmatpush1.bf16.msra.mxu0 0
  %65 = vmatprep.subr.bf16.mxu0 0
  %66 = vmatpush1.bf16.msra.mxu0 0
  %67 = vmatprep.subr.bf16.mxu0 0
  %68 = vmatpush1.bf16.msra.mxu0 0
  %69 = vmatprep.subr.bf16.mxu0 0
  %70 = vmatpush1.bf16.msra.mxu0 0
  %71 = vmatprep.subr.bf16.mxu0 0
  %72 = vmatpush1.bf16.msra.mxu0 0
  %73 = vmatprep.subr.bf16.mxu0 0
  %74 = vmatpush1.bf16.msra.mxu0 0
  %75 = vmatprep.subr.bf16.mxu0 0
  %76 = vmatpush1.bf16.msra.mxu0 0
  %77 = vmatprep.subr.bf16.mxu0 0
  %78 = vmatpush1.bf16.msra.mxu0 0
  %79 = vmatprep.subr.bf16.mxu0 0
  %80 = vmatpush1.bf16.msra.mxu0 0
  %81 = vmatprep.mubr.bf16.mxu0 0
  %82 = vmatmul.mubr.bf16.gmra.mrb[0].mxu0 %v47
  %v83 = vpop.f32.mrb[0].mxu0
  %v84 = vadd.f32 %v26, %v83
  %v85 = vpop.f32.mrb[0].mxu0
  %v86 = vpop.f32.mrb[0].mxu0
  %v87 = vadd.f32 %v26, %v86
  %v88 = vpop.f32.mrb[0].mxu0
  %89 = vdwg.mxu0
  %v90 = vpack.c.bf16 %v87, %v84
  %v92 = vunpack.c.l.b16 %v90
  %v93 = vunpack.c.h.b16 %v90
  %v94 = vpack.c.b16 %v92, %v92
  %v95 = vpack.c.b16 %v93, %v93
  %vm98 = vcmask 519168
  %99 = vst.msk [vmem:[%s3] sm:$0xf] %vm98, %v94
  %100 = vst.msk [vmem:[%s3 + $0x4] sm:$0xf] %vm98, %v95
  // Predicated region
  $region14: #{gcd_transformer_forward.46} parent=0 // pred_check
    _
  $region15: #{gcd_transformer_forward.46} parent=0 // pred_check_branch
    %102 = sbr.rel (0) target = $region17
  $region16: #{gcd_transformer_forward.46} parent=0 // pred_region
    _
  $region17: #{gcd_transformer_forward.46} parent=0 // pred_fallthru
    _
  // Predicated region
  $region18: #{gcd_transformer_forward.46} parent=0 // pred_check
    _
  $region19: #{gcd_transformer_forward.46} parent=0 // pred_check_branch
    %104 = sbr.rel (0) target = $region21
  $region20: #{gcd_transformer_forward.46} parent=0 // pred_region
    _
  $region21: #{gcd_transformer_forward.46} parent=0 // pred_fallthru
    _

// kernel: gcd_transformer_forward.45
$region0: #{gcd_transformer_forward.45}
  #allocation0 [shape = 'u32[]', space=smem, size = 0x4, offset = 0x4, fixed_abs, tag = 'smem constant byte address 0x4 - core index']
  #allocation1 [shape = 'u32[144,128]{1,0:T(1,128)}', space=vmem, size = 0x12000, scoped, tag = 'internal scratch']
  %s0 = inlined_call_operand.vmem [shape: bf16[16,32], index: 0, kind: input, shape index: {}]
  %s1 = inlined_call_operand.vmem [shape: bf16[32,32], index: 1, kind: input, shape index: {}]
  %s2 = inlined_call_operand.vmem [shape: f32[1,32], index: 2, kind: input, shape index: {}]
  %s3 = inlined_call_operand.vmem [shape: bf16[16,32], index: 3, kind: output, shape index: {}]
  %s4 = sld [smem:[#allocation0]]
  $region22: #{gcd_transformer_forward.45} parent=0
    _
  %s6 = ssub.s32 1, %s4
  %s7 = scalar_select 0, %s6, %s4
  // Predicated region
  $region2: #{gcd_transformer_forward.45} parent=0 // pred_check
    _
  $region3: #{gcd_transformer_forward.45} parent=0 // pred_check_branch
    %9 = sbr.rel (0) target = $region5
  $region4: #{gcd_transformer_forward.45} parent=0 // pred_region
    _
  $region5: #{gcd_transformer_forward.45} parent=0 // pred_fallthru
    _
  // Predicated region
  $region6: #{gcd_transformer_forward.45} parent=0 // pred_check
    _
  $region7: #{gcd_transformer_forward.45} parent=0 // pred_check_branch
    %11 = sbr.rel (0) target = $region9
  $region8: #{gcd_transformer_forward.45} parent=0 // pred_region
    _
  $region9: #{gcd_transformer_forward.45} parent=0 // pred_fallthru
    _
  // Predicated region
  $region10: #{gcd_transformer_forward.45} parent=0 // pred_check
    _
  $region11: #{gcd_transformer_forward.45} parent=0 // pred_check_branch
    %13 = sbr.rel (0) target = $region13
  $region12: #{gcd_transformer_forward.45} parent=0 // pred_region
    _
  $region13: #{gcd_transformer_forward.45} parent=0 // pred_fallthru
    _
  %v15 = vld [vmem:[%s0] sm:$0xf]
  %v16 = vld [vmem:[%s0 + $0x4] sm:$0xf]
  %v17 = vld [vmem:[%s1] sm:$0xf]
  %v18 = vld [vmem:[%s1 + $0x4] sm:$0xf]
  %v19 = vld [vmem:[%s1 + $0x8] sm:$0xf]
  %v20 = vld [vmem:[%s1 + $0xc] sm:$0xf]
  %v21 = vld [vmem:[%s2] sm:$0x1]
  %v23 = vlaneseq
  %v24 = vshrl.u32 %v23, 7
  %v25 = vsub.s32 0, %v24
  %v26 = vrot.slane %v21, %v25
  %v30 = vunpack.c.l.b16 %v15
  %v31 = vunpack.c.l.b16 %v16
  %v32 = vpack.c.b16 %v31, %v30
  %v37 = vunpack.c.l.b16 %v17
  %v38 = vunpack.c.l.b16 %v18
  %v39 = vunpack.c.l.b16 %v19
  %v40 = vunpack.c.l.b16 %v20
  %v41 = vpack.c.b16 %v38, %v37
  %v42 = vpack.c.b16 %v40, %v39
  %vm45 = vcmask 261120
  %v47 = vsel %vm45, %v32, 0
  %49 = vmatprep.subr.bf16.mxu0 0
  %50 = vmatpush1.bf16.msra.mxu0 %v41
  %51 = vmatprep.subr.bf16.mxu0 0
  %52 = vmatpush1.bf16.msra.mxu0 %v42
  %53 = vmatprep.subr.bf16.mxu0 0
  %54 = vmatpush1.bf16.msra.mxu0 0
  %55 = vmatprep.subr.bf16.mxu0 0
  %56 = vmatpush1.bf16.msra.mxu0 0
  %57 = vmatprep.subr.bf16.mxu0 0
  %58 = vmatpush1.bf16.msra.mxu0 0
  %59 = vmatprep.subr.bf16.mxu0 0
  %60 = vmatpush1.bf16.msra.mxu0 0
  %61 = vmatprep.subr.bf16.mxu0 0
  %62 = vmatpush1.bf16.msra.mxu0 0
  %63 = vmatprep.subr.bf16.mxu0 0
  %64 = vmatpush1.bf16.msra.mxu0 0
  %65 = vmatprep.subr.bf16.mxu0 0
  %66 = vmatpush1.bf16.msra.mxu0 0
  %67 = vmatprep.subr.bf16.mxu0 0
  %68 = vmatpush1.bf16.msra.mxu0 0
  %69 = vmatprep.subr.bf16.mxu0 0
  %70 = vmatpush1.bf16.msra.mxu0 0
  %71 = vmatprep.subr.bf16.mxu0 0
  %72 = vmatpush1.bf16.msra.mxu0 0
  %73 = vmatprep.subr.bf16.mxu0 0
  %74 = vmatpush1.bf16.msra.mxu0 0
  %75 = vmatprep.subr.bf16.mxu0 0
  %76 = vmatpush1.bf16.msra.mxu0 0
  %77 = vmatprep.subr.bf16.mxu0 0
  %78 = vmatpush1.bf16.msra.mxu0 0
  %79 = vmatprep.subr.bf16.mxu0 0
  %80 = vmatpush1.bf16.msra.mxu0 0
  %81 = vmatprep.mubr.bf16.mxu0 0
  %82 = vmatmul.mubr.bf16.gmra.mrb[0].mxu0 %v47
  %v83 = vpop.f32.mrb[0].mxu0
  %v84 = vadd.f32 %v26, %v83
  %v85 = vpop.f32.mrb[0].mxu0
  %v86 = vpop.f32.mrb[0].mxu0
  %v87 = vadd.f32 %v26, %v86
  %v88 = vpop.f32.mrb[0].mxu0
  %89 = vdwg.mxu0
  %v90 = vpack.c.bf16 %v87, %v84
  %v92 = vunpack.c.l.b16 %v90
  %v93 = vunpack.c.h.b16 %v90
  %v94 = vpack.c.b16 %v92, %v92
  %v95 = vpack.c.b16 %v93, %v93
  %vm98 = vcmask 257024
  %99 = vst.msk [vmem:[%s3] sm:$0xf] %vm98, %v94
  %100 = vst.msk [vmem:[%s3 + $0x4] sm:$0xf] %vm98, %v95
  // Predicated region
  $region14: #{gcd_transformer_forward.45} parent=0 // pred_check
    _
  $region15: #{gcd_transformer_forward.45} parent=0 // pred_check_branch
    %102 = sbr.rel (0) target = $region17
  $region16: #{gcd_transformer_forward.45} parent=0 // pred_region
    _
  $region17: #{gcd_transformer_forward.45} parent=0 // pred_fallthru
    _
  // Predicated region
  $region18: #{gcd_transformer_forward.45} parent=0 // pred_check
    _
  $region19: #{gcd_transformer_forward.45} parent=0 // pred_check_branch
    %104 = sbr.rel (0) target = $region21
  $region20: #{gcd_transformer_forward.45} parent=0 // pred_region
    _
  $region21: #{gcd_transformer_forward.45} parent=0 // pred_fallthru
    _

// kernel: gcd_transformer_forward.61
$region0: #{gcd_transformer_forward.61}
  #allocation0 [shape = 'u32[]', space=smem, size = 0x4, offset = 0x4, fixed_abs, tag = 'smem constant byte address 0x4 - core index']
  #allocation1 [shape = 'u32[144,128]{1,0:T(1,128)}', space=vmem, size = 0x12000, scoped, tag = 'internal scratch']
  %s0 = inlined_call_operand.vmem [shape: bf16[16,32], index: 0, kind: input, shape index: {}]
  %s1 = inlined_call_operand.vmem [shape: bf16[32,16], index: 1, kind: input, shape index: {}]
  %s2 = inlined_call_operand.vmem [shape: f32[1,16], index: 2, kind: input, shape index: {}]
  %s3 = inlined_call_operand.hbm [shape: f32[16,16], index: 3, kind: output, shape index: {}]
  %s4 = sld [smem:[#allocation0]]
  $region22: #{gcd_transformer_forward.61} parent=0
    _
  %s6 = ssub.s32 1, %s4
  %s7 = scalar_select 0, %s6, %s4
  $region1: #{gcd_transformer_forward.61} parent=0
    #allocation2 [shape = 'u8[8192]{0}', space=vmem, size = 0x2000, scoped, tag = 'output window, operand 0, single buffered']
    #allocation3 [shape = 's32[1]{0}', space=sflag, size = 0x4, scoped, tag = 'scoped memory for gcd_transformer_forward.61']
    %8 = vsyncpa [#allocation3], 0
    // Predicated region
    $region2: #{gcd_transformer_forward.61} parent=1 // pred_check
      _
    $region3: #{gcd_transformer_forward.61} parent=1 // pred_check_branch
      %10 = sbr.rel (0) target = $region5
    $region4: #{gcd_transformer_forward.61} parent=1 // pred_region
      _
    $region5: #{gcd_transformer_forward.61} parent=1 // pred_fallthru
      _
    // Predicated region
    $region6: #{gcd_transformer_forward.61} parent=1 // pred_check
      _
    $region7: #{gcd_transformer_forward.61} parent=1 // pred_check_branch
      %12 = sbr.rel (0) target = $region9
    $region8: #{gcd_transformer_forward.61} parent=1 // pred_region
      _
    $region9: #{gcd_transformer_forward.61} parent=1 // pred_fallthru
      _
    // Predicated region
    $region10: #{gcd_transformer_forward.61} parent=1 // pred_check
      _
    $region11: #{gcd_transformer_forward.61} parent=1 // pred_check_branch
      %14 = sbr.rel (0) target = $region13
    $region12: #{gcd_transformer_forward.61} parent=1 // pred_region
      _
    $region13: #{gcd_transformer_forward.61} parent=1 // pred_fallthru
      _
    %v16 = vld [vmem:[%s0] sm:$0xf]
    %v17 = vld [vmem:[%s0 + $0x4] sm:$0xf]
    %v18 = vld [vmem:[%s1] sm:$0xf]
    %v19 = vld [vmem:[%s1 + $0x4] sm:$0xf]
    %v20 = vld [vmem:[%s1 + $0x8] sm:$0xf]
    %v21 = vld [vmem:[%s1 + $0xc] sm:$0xf]
    %v22 = vld [vmem:[%s2] sm:$0x1]
    %v24 = vlaneseq
    %v25 = vshrl.u32 %v24, 7
    %v26 = vsub.s32 0, %v25
    %v27 = vrot.slane %v22, %v26
    %v31 = vunpack.c.l.b16 %v16
    %v32 = vunpack.c.l.b16 %v17
    %v33 = vpack.c.b16 %v32, %v31
    %v38 = vunpack.c.l.b16 %v18
    %v39 = vunpack.c.l.b16 %v19
    %v40 = vunpack.c.l.b16 %v20
    %v41 = vunpack.c.l.b16 %v21
    %v42 = vpack.c.b16 %v39, %v38
    %v43 = vpack.c.b16 %v41, %v40
    %vm46 = vcmask 261120
    %v48 = vsel %vm46, %v33, 0
    %50 = vmatprep.subr.bf16.mxu0 0
    %51 = vmatpush1.bf16.msra.mxu0 %v42
    %52 = vmatprep.subr.bf16.mxu0 0
    %53 = vmatpush1.bf16.msra.mxu0 %v43
    %54 = vmatprep.subr.bf16.mxu0 0
    %55 = vmatpush1.bf16.msra.mxu0 0
    %56 = vmatprep.subr.bf16.mxu0 0
    %57 = vmatpush1.bf16.msra.mxu0 0
    %58 = vmatprep.subr.bf16.mxu0 0
    %59 = vmatpush1.bf16.msra.mxu0 0
    %60 = vmatprep.subr.bf16.mxu0 0
    %61 = vmatpush1.bf16.msra.mxu0 0
    %62 = vmatprep.subr.bf16.mxu0 0
    %63 = vmatpush1.bf16.msra.mxu0 0
    %64 = vmatprep.subr.bf16.mxu0 0
    %65 = vmatpush1.bf16.msra.mxu0 0
    %66 = vmatprep.subr.bf16.mxu0 0
    %67 = vmatpush1.bf16.msra.mxu0 0
    %68 = vmatprep.subr.bf16.mxu0 0
    %69 = vmatpush1.bf16.msra.mxu0 0
    %70 = vmatprep.subr.bf16.mxu0 0
    %71 = vmatpush1.bf16.msra.mxu0 0
    %72 = vmatprep.subr.bf16.mxu0 0
    %73 = vmatpush1.bf16.msra.mxu0 0
    %74 = vmatprep.subr.bf16.mxu0 0
    %75 = vmatpush1.bf16.msra.mxu0 0
    %76 = vmatprep.subr.bf16.mxu0 0
    %77 = vmatpush1.bf16.msra.mxu0 0
    %78 = vmatprep.subr.bf16.mxu0 0
    %79 = vmatpush1.bf16.msra.mxu0 0
    %80 = vmatprep.subr.bf16.mxu0 0
    %81 = vmatpush1.bf16.msra.mxu0 0
    %82 = vmatprep.mubr.bf16.mxu0 0
    %83 = vmatmul.mubr.bf16.gmra.mrb[0].mxu0 %v48
    %v84 = vpop.f32.mrb[0].mxu0
    %v85 = vadd.f32 %v27, %v84
    %v86 = vpop.f32.mrb[0].mxu0
    %v87 = vpop.f32.mrb[0].mxu0
    %v88 = vadd.f32 %v27, %v87
    %v89 = vpop.f32.mrb[0].mxu0
    %90 = vdwg.mxu0
    %vm91 = vcmask 130048
    %92 = vst.msk [vmem:[#allocation2] sm:$0xff] %vm91, %v85
    %93 = vst.msk [vmem:[#allocation2 + $0x8] sm:$0xff] %vm91, %v88
    // Predicated region
    $region14: #{gcd_transformer_forward.61} parent=1 // pred_check
      _
    $region15: #{gcd_transformer_forward.61} parent=1 // pred_check_branch
      %95 = sbr.rel (0) target = $region17
    $region16: #{gcd_transformer_forward.61} parent=1 // pred_region
      %s97 = ssub.s32 256, 256
      %98 = vsyncadd [#allocation3], %s97
      %s99 = sshll.u32 [#allocation2], 4
      %s100 = int_to_ptr.vmem [resolvable:$true] %s99
      %105 = dma.vmem_to_hbm [thread:$0]  %s100, 256, %s3, [#allocation3], 128, 128, 8
    $region17: #{gcd_transformer_forward.61} parent=1 // pred_fallthru
      _
    // Predicated region
    $region18: #{gcd_transformer_forward.61} parent=1 // pred_check
      _
    $region19: #{gcd_transformer_forward.61} parent=1 // pred_check_branch
      %107 = sbr.rel (0) target = $region21
    $region20: #{gcd_transformer_forward.61} parent=1 // pred_region
      %108 = dma.done [#allocation3], 256
    $region21: #{gcd_transformer_forward.61} parent=1 // pred_fallthru
      _
    %109 = vsyncpa [#allocation3], 1

// kernel: gcd_transformer_forward.43
$region0: #{gcd_transformer_forward.43}
  #allocation0 [shape = 'u32[]', space=smem, size = 0x4, offset = 0x4, fixed_abs, tag = 'smem constant byte address 0x4 - core index']
  #allocation1 [shape = 'u32[144,128]{1,0:T(1,128)}', space=vmem, size = 0x12000, scoped, tag = 'internal scratch']
  %s0 = inlined_call_operand.vmem [shape: bf16[2,8,32], index: 0, kind: input, shape index: {}]
  %s1 = inlined_call_operand.vmem [shape: bf16[2,8,32], index: 1, kind: input, shape index: {}]
  %s2 = inlined_call_operand.vmem [shape: bf16[2,8,32], index: 2, kind: input, shape index: {}]
  %s3 = inlined_call_operand.vmem [shape: f32[2,1,8], index: 3, kind: input, shape index: {}]
  %s4 = inlined_call_operand.vmem [shape: bf16[2,8,32], index: 4, kind: output, shape index: {}]
  %s5 = sld [smem:[#allocation0]]
  $region49: #{gcd_transformer_forward.43} parent=0
    _
  %s7 = ssub.s32 1, %s5
  %s8 = scalar_select 0, %s7, %s5
  loop: start=0, step=1, limit=4
  $region2: #{gcd_transformer_forward.43} parent=0 // loop_pre_header
    _
  $region3: #{gcd_transformer_forward.43} parent=0 // loop_header
    %s10 = sphi 0, %s14
    %p11 = scmp.ge.s32.totalorder %s10, 4
    %s20 = sphi 0, %s22
    %s23 = sphi 0, %s20
    %s24 = sphi 0, %s23
    %s40 = sphi 0, %s24
    %s46 = sphi 0, %s48
    %s49 = sphi 0, %s46
    %s50 = sphi 0, %s49
    %s66 = sphi 0, %s50
    %s72 = sphi 0, %s74
    %s75 = sphi 0, %s72
    %s76 = sphi 0, %s75
    %s92 = sphi 0, %s76
    %s98 = sphi 0, %s100
    %s101 = sphi 0, %s98
    %s102 = sphi 0, %s101
    %s118 = sphi 0, %s102
    %s124 = sphi 0, %s126
    %s127 = sphi 0, %s124
    %s128 = sphi 0, %s127
    %s144 = sphi 0, %s128
  $region4: #{gcd_transformer_forward.43} parent=0 // loop_header_branch
    %13 = sbr.rel (%p11) target = $region8
  $region5: #{gcd_transformer_forward.43} parent=0 // loop_body
    %s15 = ssub.s32 %s10, 1
    %s16 = ssub.s32 %s10, 2
    %s17 = sadd.s32 %s10, 1
    %s18 = ssub.s32 %s10, %s17
    %p19 = scmp.eq.s32.totalorder %s18, 0
    %s21 = sadd.s32 %s20, 1
    %s22 = scalar_select %p19, %s20, %s21
    %p25 = pneg %p19
    %p26 = scmp.eq.s32.totalorder %s10, 1
    %p27 = por %p25, %p26
    %p28 = scmp.ne.s32.totalorder %s20, %s23
    %p29 = scmp.eq.s32.totalorder %s10, 0
    %p30 = por %p28, %p29
    %p31 = scmp.ne.s32.totalorder %s20, %s23
    %p32 = scmp.eq.s32.totalorder %s15, 1
    %p33 = por %p31, %p32
    %p34 = scmp.ne.s32.totalorder %s23, %s24
    %p35 = scmp.eq.s32.totalorder %s15, 0
    %p36 = por %p34, %p35
    %p37 = scmp.ne.s32.totalorder %s23, %s24
    %p38 = scmp.eq.s32.totalorder %s16, 1
    %p39 = por %p37, %p38
    %p41 = scmp.ne.s32.totalorder %s24, %s40
    %p42 = scmp.eq.s32.totalorder %s16, 0
    %p43 = por %p41, %p42
    %s44 = ssub.s32 %s10, %s17
    %p45 = scmp.eq.s32.totalorder %s44, 0
    %s47 = sadd.s32 %s46, 1
    %s48 = scalar_select %p45, %s46, %s47
    %p51 = pneg %p45
    %p52 = scmp.eq.s32.totalorder %s10, 1
    %p53 = por %p51, %p52
    %p54 = scmp.ne.s32.totalorder %s46, %s49
    %p55 = scmp.eq.s32.totalorder %s10, 0
    %p56 = por %p54, %p55
    %p57 = scmp.ne.s32.totalorder %s46, %s49
    %p58 = scmp.eq.s32.totalorder %s15, 1
    %p59 = por %p57, %p58
    %p60 = scmp.ne.s32.totalorder %s49, %s50
    %p61 = scmp.eq.s32.totalorder %s15, 0
    %p62 = por %p60, %p61
    %p63 = scmp.ne.s32.totalorder %s49, %s50
    %p64 = scmp.eq.s32.totalorder %s16, 1
    %p65 = por %p63, %p64
    %p67 = scmp.ne.s32.totalorder %s50, %s66
    %p68 = scmp.eq.s32.totalorder %s16, 0
    %p69 = por %p67, %p68
    %s70 = ssub.s32 %s10, %s17
    %p71 = scmp.eq.s32.totalorder %s70, 0
    %s73 = sadd.s32 %s72, 1
    %s74 = scalar_select %p71, %s72, %s73
    %p77 = pneg %p71
    %p78 = scmp.eq.s32.totalorder %s10, 1
    %p79 = por %p77, %p78
    %p80 = scmp.ne.s32.totalorder %s72, %s75
    %p81 = scmp.eq.s32.totalorder %s10, 0
    %p82 = por %p80, %p81
    %p83 = scmp.ne.s32.totalorder %s72, %s75
    %p84 = scmp.eq.s32.totalorder %s15, 1
    %p85 = por %p83, %p84
    %p86 = scmp.ne.s32.totalorder %s75, %s76
    %p87 = scmp.eq.s32.totalorder %s15, 0
    %p88 = por %p86, %p87
    %p89 = scmp.ne.s32.totalorder %s75, %s76
    %p90 = scmp.eq.s32.totalorder %s16, 1
    %p91 = por %p89, %p90
    %p93 = scmp.ne.s32.totalorder %s76, %s92
    %p94 = scmp.eq.s32.totalorder %s16, 0
    %p95 = por %p93, %p94
    %s96 = ssub.s32 %s10, %s17
    %p97 = scmp.eq.s32.totalorder %s96, 0
    %s99 = sadd.s32 %s98, 1
    %s100 = scalar_select %p97, %s98, %s99
    %p103 = pneg %p97
    %p104 = scmp.eq.s32.totalorder %s10, 1
    %p105 = por %p103, %p104
    %p106 = scmp.ne.s32.totalorder %s98, %s101
    %p107 = scmp.eq.s32.totalorder %s10, 0
    %p108 = por %p106, %p107
    %p109 = scmp.ne.s32.totalorder %s98, %s101
    %p110 = scmp.eq.s32.totalorder %s15, 1
    %p111 = por %p109, %p110
    %p112 = scmp.ne.s32.totalorder %s101, %s102
    %p113 = scmp.eq.s32.totalorder %s15, 0
    %p114 = por %p112, %p113
    %p115 = scmp.ne.s32.totalorder %s101, %s102
    %p116 = scmp.eq.s32.totalorder %s16, 1
    %p117 = por %p115, %p116
    %p119 = scmp.ne.s32.totalorder %s102, %s118
    %p120 = scmp.eq.s32.totalorder %s16, 0
    %p121 = por %p119, %p120
    %s122 = ssub.s32 %s10, %s17
    %p123 = scmp.eq.s32.totalorder %s122, 0
    %s125 = sadd.s32 %s124, 1
    %s126 = scalar_select %p123, %s124, %s125
    %p129 = pneg %p123
    %p130 = scmp.eq.s32.totalorder %s10, 1
    %p131 = por %p129, %p130
    %p132 = scmp.ne.s32.totalorder %s124, %s127
    %p133 = scmp.eq.s32.totalorder %s10, 0
    %p134 = por %p132, %p133
    %p135 = scmp.ne.s32.totalorder %s124, %s127
    %p136 = scmp.eq.s32.totalorder %s15, 1
    %p137 = por %p135, %p136
    %p138 = scmp.ne.s32.totalorder %s127, %s128
    %p139 = scmp.eq.s32.totalorder %s15, 0
    %p140 = por %p138, %p139
    %p141 = scmp.ne.s32.totalorder %s127, %s128
    %p142 = scmp.eq.s32.totalorder %s16, 1
    %p143 = por %p141, %p142
    %p145 = scmp.ne.s32.totalorder %s128, %s144
    %p146 = scmp.eq.s32.totalorder %s16, 0
    %p147 = por %p145, %p146
    %p148 = scmp.le.s32.totalorder 1, %s10
    %p149 = scmp.lt.s32.totalorder %s10, 3
    %p150 = pnand %p148, %p149
    %p151 = pneg %p150
    // Predicated region
    $region9: #{gcd_transformer_forward.43} parent=5 // pred_check
      _
    $region10: #{gcd_transformer_forward.43} parent=5 // pred_check_branch
      %153 = sbr.rel (%p150) target = $region12
    $region11: #{gcd_transformer_forward.43} parent=5 // pred_region
      %s154 = ssub.s32 %s10, 1
    $region12: #{gcd_transformer_forward.43} parent=5 // pred_fallthru
      _
    %p155 = scmp.lt.s32.totalorder %s10, 2
    // Predicated region
    $region13: #{gcd_transformer_forward.43} parent=5 // pred_check
      %p156 = pneg %p155
    $region14: #{gcd_transformer_forward.43} parent=5 // pred_check_branch
      %158 = sbr.rel (%p156) target = $region16
    $region15: #{gcd_transformer_forward.43} parent=5 // pred_region
      // Predicated region
      $region17: #{gcd_transformer_forward.43} parent=15 // pred_check
        %p159 = pneg %p30
      $region18: #{gcd_transformer_forward.43} parent=15 // pred_check_branch
        %161 = sbr.rel (%p159) target = $region20
      $region19: #{gcd_transformer_forward.43} parent=15 // pred_region
        %p162 = scmp.lt.s32.totalorder %s10, 1
        %s163 = scalar_select %p162, %s10, 1
        %s164 = smul.addr %s163, 4
        %s165 = scalar_lea.vmem %s0, %s164
      $region20: #{gcd_transformer_forward.43} parent=15 // pred_fallthru
        _
      // Predicated region
      $region21: #{gcd_transformer_forward.43} parent=15 // pred_check
        %p166 = pneg %p56
      $region22: #{gcd_transformer_forward.43} parent=15 // pred_check_branch
        %168 = sbr.rel (%p166) target = $region24
      $region23: #{gcd_transformer_forward.43} parent=15 // pred_region
        %p169 = scmp.lt.s32.totalorder %s10, 1
        %s170 = scalar_select %p169, %s10, 1
        %s171 = smul.addr %s170, 4
        %s172 = scalar_lea.vmem %s1, %s171
      $region24: #{gcd_transformer_forward.43} parent=15 // pred_fallthru
        _
      // Predicated region
      $region25: #{gcd_transformer_forward.43} parent=15 // pred_check
        %p173 = pneg %p82
      $region26: #{gcd_transformer_forward.43} parent=15 // pred_check_branch
        %175 = sbr.rel (%p173) target = $region28
      $region27: #{gcd_transformer_forward.43} parent=15 // pred_region
        %p176 = scmp.lt.s32.totalorder %s10, 1
        %s177 = scalar_select %p176, %s10, 1
        %s178 = smul.addr %s177, 4
        %s179 = scalar_lea.vmem %s2, %s178
      $region28: #{gcd_transformer_forward.43} parent=15 // pred_fallthru
        _
      // Predicated region
      $region29: #{gcd_transformer_forward.43} parent=15 // pred_check
        %p180 = pneg %p108
      $region30: #{gcd_transformer_forward.43} parent=15 // pred_check_branch
        %182 = sbr.rel (%p180) target = $region32
      $region31: #{gcd_transformer_forward.43} parent=15 // pred_region
        %p183 = scmp.lt.s32.totalorder %s10, 1
        %s184 = scalar_select %p183, %s10, 1
        %s185 = scalar_lea.vmem %s3, %s184
      $region32: #{gcd_transformer_forward.43} parent=15 // pred_fallthru
        _
    $region16: #{gcd_transformer_forward.43} parent=5 // pred_fallthru
      _
    %p186 = scmp.le.s32.totalorder 1, %s10
    %p187 = scmp.lt.s32.totalorder %s10, 3
    %p188 = pnand %p186, %p187
    %p189 = pneg %p188
    // Predicated region
    $region33: #{gcd_transformer_forward.43} parent=5 // pred_check
      _
    $region34: #{gcd_transformer_forward.43} parent=5 // pred_check_branch
      %191 = sbr.rel (%p188) target = $region36
    $region35: #{gcd_transformer_forward.43} parent=5 // pred_region
      %s192 = ssub.s32 %s10, 1
      %p193 = scmp.lt.s32.totalorder %s15, 1
      %s194 = scalar_select %p193, %s15, 1
      %s195 = smul.addr %s194, 4
      %s196 = scalar_lea.vmem %s0, %s195
      %p197 = pneg %p36
      %p198 = pneg %p33
      %p199 = scmp.lt.s32.totalorder %s15, 1
      %s200 = scalar_select %p199, %s15, 1
      %s201 = smul.addr %s200, 4
      %s202 = scalar_lea.vmem %s1, %s201
      %p203 = pneg %p62
      %p204 = pneg %p59
      %p205 = scmp.lt.s32.totalorder %s15, 1
      %s206 = scalar_select %p205, %s15, 1
      %s207 = smul.addr %s206, 4
      %s208 = scalar_lea.vmem %s2, %s207
      %p209 = pneg %p88
      %p210 = pneg %p85
      %p211 = scmp.lt.s32.totalorder %s15, 1
      %s212 = scalar_select %p211, %s15, 1
      %s213 = scalar_lea.vmem %s3, %s212
      %p214 = pneg %p114
      %p215 = pneg %p111
      %p216 = pneg %p140
      %p217 = pneg %p137
      %p218 = scmp.lt.s32.totalorder %s15, 1
      %s219 = scalar_select %p218, %s15, 1
      %s220 = smul.addr %s219, 4
      %s221 = scalar_lea.vmem %s4, %s220
      %p222 = scmp.lt.s32.totalorder %s15, 1
      %s223 = scalar_select %p222, %s15, 1
      %s224 = smul.addr %s223, 4
      %s225 = scalar_lea.vmem %s0, %s224
      %p226 = scmp.lt.s32.totalorder %s15, 1
      %s227 = scalar_select %p226, %s15, 1
      %s228 = smul.addr %s227, 4
      %s229 = scalar_lea.vmem %s1, %s228
      %p230 = scmp.lt.s32.totalorder %s15, 1
      %s231 = scalar_select %p230, %s15, 1
      %s232 = smul.addr %s231, 4
      %s233 = scalar_lea.vmem %s2, %s232
      %p234 = scmp.lt.s32.totalorder %s15, 1
      %s235 = scalar_select %p234, %s15, 1
      %s236 = scalar_lea.vmem %s3, %s235
      %p237 = scmp.lt.s32.totalorder %s15, 1
      %s238 = scalar_select %p237, %s15, 1
      %s239 = smul.addr %s238, 4
      %s240 = scalar_lea.vmem %s4, %s239
      %v242 = vld [vmem:[%s225] sm:$0xf]
      %v243 = vld [vmem:[%s229] sm:$0xf]
      %v244 = vld [vmem:[%s233] sm:$0xf]
      %v245 = vld [vmem:[%s236] sm:$0x1]
      %v246 = vlaneseq
      %v247 = vshrl.u32 %v246, 7
      %v248 = vlaneseq
      %v249 = vand.u32 %v248, 127
      %vm250 = vcmp.gt.s32.totalorder %v249, %v247
      %vm251 = vcmask 64512
      %v253 = vsel %vm251, %v242, 0
      %v256 = vsel %vm251, %v243, 0
      %258 = vmatprep.subr.bf16.mxu0 0
      %259 = vmatpush1.bf16.xpose.msra.mxu0 %v256
      %260 = vmatprep.subr.bf16.mxu0 0
      %261 = vmatpush1.bf16.xpose.msra.mxu0 0
      %262 = vmatprep.subr.bf16.mxu0 0
      %263 = vmatpush1.bf16.xpose.msra.mxu0 0
      %264 = vmatprep.subr.bf16.mxu0 0
      %265 = vmatpush1.bf16.xpose.msra.mxu0 0
      %266 = vmatprep.subr.bf16.mxu0 0
      %267 = vmatpush1.bf16.xpose.msra.mxu0 0
      %268 = vmatprep.subr.bf16.mxu0 0
      %269 = vmatpush1.bf16.xpose.msra.mxu0 0
      %270 = vmatprep.subr.bf16.mxu0 0
      %271 = vmatpush1.bf16.xpose.msra.mxu0 0
      %272 = vmatprep.subr.bf16.mxu0 0
      %273 = vmatpush1.bf16.xpose.msra.mxu0 0
      %274 = vmatprep.subr.bf16.mxu0 0
      %275 = vmatpush1.bf16.xpose.msra.mxu0 0
      %276 = vmatprep.subr.bf16.mxu0 0
      %277 = vmatpush1.bf16.xpose.msra.mxu0 0
      %278 = vmatprep.subr.bf16.mxu0 0
      %279 = vmatpush1.bf16.xpose.msra.mxu0 0
      %280 = vmatprep.subr.bf16.mxu0 0
      %281 = vmatpush1.bf16.xpose.msra.mxu0 0
      %282 = vmatprep.subr.bf16.mxu0 0
      %283 = vmatpush1.bf16.xpose.msra.mxu0 0
      %284 = vmatprep.subr.bf16.mxu0 0
      %285 = vmatpush1.bf16.xpose.msra.mxu0 0
      %286 = vmatprep.subr.bf16.mxu0 0
      %287 = vmatpush1.bf16.xpose.msra.mxu0 0
      %288 = vmatprep.subr.bf16.mxu0 0
      %289 = vmatpush1.bf16.xpose.msra.mxu0 0
      %290 = vmatprep.mubr.bf16.mxu0 0
      %291 = vmatmul.mubr.bf16.gmra.mrb[0].mxu0 %v253
      %v292 = vpop.f32.mrb[0].mxu0
      %v293 = vadd.f32 0.0, %v292
      %v294 = vpop.f32.mrb[0].mxu0
      %v295 = vpop.f32.mrb[0].mxu0
      %v296 = vpop.f32.mrb[0].mxu0
      %297 = vdwg.mxu0
      %v298 = vmul.f32 %v293, 0.35355338
      %v300 = vlaneseq
      %v301 = vshrl.u32 %v300, 7
      %v302 = vsub.s32 0, %v301
      %v303 = vrot.slane %v245, %v302
      %v305 = vadd.f32 %v298, %v303
      %v306 = vsel %vm250, -1e+30, %v305
      %v307 = vsel %vm251, %v306, -inf
      %308 = vmax.xlane.f32.xlu0 %v307
      %v309 = vpop.xlane.xlu0 %308
      %v310 = vsub.f32 %v306, %v309
      %v311 = vmul.f32 %v310, 1.442695
      %v312 = vpow.pop %v311
      %v313 = vsel %vm251, %v312, 0.0
      %314 = vadd.xlane.f32.xlu0 %v313
      %v315 = vpop.xlane.xlu0 %314
      %v316 = vrcp.pop %v315
      %v317 = vmul.f32 %v312, %v316
      %v318 = vpack.c.bf16 %v317, %v317
      %v320 = vsel %vm251, %v318, 0
      %vm322 = vcmask 1043456
      %v324 = vsel %vm322, %v244, 0
      %326 = vmatprep.subr.bf16.mxu0 0
      %327 = vmatpush1.bf16.msra.mxu0 %v324
      %328 = vmatprep.subr.bf16.mxu0 0
      %329 = vmatpush1.bf16.msra.mxu0 0
      %330 = vmatprep.subr.bf16.mxu0 0
      %331 = vmatpush1.bf16.msra.mxu0 0
      %332 = vmatprep.subr.bf16.mxu0 0
      %333 = vmatpush1.bf16.msra.mxu0 0
      %334 = vmatprep.subr.bf16.mxu0 0
      %335 = vmatpush1.bf16.msra.mxu0 0
      %336 = vmatprep.subr.bf16.mxu0 0
      %337 = vmatpush1.bf16.msra.mxu0 0
      %338 = vmatprep.subr.bf16.mxu0 0
      %339 = vmatpush1.bf16.msra.mxu0 0
      %340 = vmatprep.subr.bf16.mxu0 0
      %341 = vmatpush1.bf16.msra.mxu0 0
      %342 = vmatprep.subr.bf16.mxu0 0
      %343 = vmatpush1.bf16.msra.mxu0 0
      %344 = vmatprep.subr.bf16.mxu0 0
      %345 = vmatpush1.bf16.msra.mxu0 0
      %346 = vmatprep.subr.bf16.mxu0 0
      %347 = vmatpush1.bf16.msra.mxu0 0
      %348 = vmatprep.subr.bf16.mxu0 0
      %349 = vmatpush1.bf16.msra.mxu0 0
      %350 = vmatprep.subr.bf16.mxu0 0
      %351 = vmatpush1.bf16.msra.mxu0 0
      %352 = vmatprep.subr.bf16.mxu0 0
      %353 = vmatpush1.bf16.msra.mxu0 0
      %354 = vmatprep.subr.bf16.mxu0 0
      %355 = vmatpush1.bf16.msra.mxu0 0
      %356 = vmatprep.subr.bf16.mxu0 0
      %357 = vmatpush1.bf16.msra.mxu0 0
      %358 = vmatprep.mubr.bf16.mxu0 0
      %359 = vmatmul.mubr.bf16.gmra.mrb[0].mxu0 %v320
      %v360 = vpop.f32.mrb[0].mxu0
      %v361 = vadd.f32 0.0, %v360
      %v362 = vpop.f32.mrb[0].mxu0
      %v363 = vpop.f32.mrb[0].mxu0
      %v364 = vpop.f32.mrb[0].mxu0
      %365 = vdwg.mxu0
      %v366 = vpack.c.bf16 %v361, %v361
      %vm367 = vcmask 60416
      %368 = vst.msk [vmem:[%s240] sm:$0xf] %vm367, %v366
      %v370 = vunpack.c.l.b16 %v242
      %v371 = vpack.c.b16 %v370, %v370
      %372 = vrot.lane.b32.xlu0 %v371, 120
      %v373 = vpop.permute.xlu0 %372
      %v375 = vunpack.c.l.b16 %v243
      %v376 = vpack.c.b16 %v375, %v375
      %377 = vrot.lane.b32.xlu0 %v376, 120
      %v378 = vpop.permute.xlu0 %377
      %v380 = vsel %vm251, %v373, 0
      %v383 = vsel %vm251, %v378, 0
      %385 = vmatprep.subr.bf16.mxu0 0
      %386 = vmatpush1.bf16.xpose.msra.mxu0 %v383
      %387 = vmatprep.subr.bf16.mxu0 0
      %388 = vmatpush1.bf16.xpose.msra.mxu0 0
      %389 = vmatprep.subr.bf16.mxu0 0
      %390 = vmatpush1.bf16.xpose.msra.mxu0 0
      %391 = vmatprep.subr.bf16.mxu0 0
      %392 = vmatpush1.bf16.xpose.msra.mxu0 0
      %393 = vmatprep.subr.bf16.mxu0 0
      %394 = vmatpush1.bf16.xpose.msra.mxu0 0
      %395 = vmatprep.subr.bf16.mxu0 0
      %396 = vmatpush1.bf16.xpose.msra.mxu0 0
      %397 = vmatprep.subr.bf16.mxu0 0
      %398 = vmatpush1.bf16.xpose.msra.mxu0 0
      %399 = vmatprep.subr.bf16.mxu0 0
      %400 = vmatpush1.bf16.xpose.msra.mxu0 0
      %401 = vmatprep.subr.bf16.mxu0 0
      %402 = vmatpush1.bf16.xpose.msra.mxu0 0
      %403 = vmatprep.subr.bf16.mxu0 0
      %404 = vmatpush1.bf16.xpose.msra.mxu0 0
      %405 = vmatprep.subr.bf16.mxu0 0
      %406 = vmatpush1.bf16.xpose.msra.mxu0 0
      %407 = vmatprep.subr.bf16.mxu0 0
      %408 = vmatpush1.bf16.xpose.msra.mxu0 0
      %409 = vmatprep.subr.bf16.mxu0 0
      %410 = vmatpush1.bf16.xpose.msra.mxu0 0
      %411 = vmatprep.subr.bf16.mxu0 0
      %412 = vmatpush1.bf16.xpose.msra.mxu0 0
      %413 = vmatprep.subr.bf16.mxu0 0
      %414 = vmatpush1.bf16.xpose.msra.mxu0 0
      %415 = vmatprep.subr.bf16.mxu0 0
      %416 = vmatpush1.bf16.xpose.msra.mxu0 0
      %417 = vmatprep.mubr.bf16.mxu0 0
      %418 = vmatmul.mubr.bf16.gmra.mrb[0].mxu0 %v380
      %v419 = vpop.f32.mrb[0].mxu0
      %v420 = vadd.f32 0.0, %v419
      %v421 = vpop.f32.mrb[0].mxu0
      %v422 = vpop.f32.mrb[0].mxu0
      %v423 = vpop.f32.mrb[0].mxu0
      %424 = vdwg.mxu0
      %v425 = vmul.f32 %v420, 0.35355338
      %v426 = vadd.f32 %v425, %v303
      %v427 = vsel %vm250, -1e+30, %v426
      %v428 = vsel %vm251, %v427, -inf
      %429 = vmax.xlane.f32.xlu0 %v428
      %v430 = vpop.xlane.xlu0 %429
      %v431 = vsub.f32 %v427, %v430
      %v432 = vmul.f32 %v431, 1.442695
      %v433 = vpow.pop %v432
      %v434 = vsel %vm251, %v433, 0.0
      %435 = vadd.xlane.f32.xlu0 %v434
      %v436 = vpop.xlane.xlu0 %435
      %v437 = vrcp.pop %v436
      %v438 = vmul.f32 %v433, %v437
      %v439 = vpack.c.bf16 %v438, %v438
      %v441 = vunpack.c.l.b16 %v244
      %v442 = vpack.c.b16 %v441, %v441
      %443 = vrot.lane.b32.xlu0 %v442, 120
      %v444 = vpop.permute.xlu0 %443
      %v446 = vsel %vm251, %v439, 0
      %v449 = vsel %vm322, %v444, 0
      %451 = vmatprep.subr.bf16.mxu0 0
      %452 = vmatpush1.bf16.msra.mxu0 %v449
      %453 = vmatprep.subr.bf16.mxu0 0
      %454 = vmatpush1.bf16.msra.mxu0 0
      %455 = vmatprep.subr.bf16.mxu0 0
      %456 = vmatpush1.bf16.msra.mxu0 0
      %457 = vmatprep.subr.bf16.mxu0 0
      %458 = vmatpush1.bf16.msra.mxu0 0
      %459 = vmatprep.subr.bf16.mxu0 0
      %460 = vmatpush1.bf16.msra.mxu0 0
      %461 = vmatprep.subr.bf16.mxu0 0
      %462 = vmatpush1.bf16.msra.mxu0 0
      %463 = vmatprep.subr.bf16.mxu0 0
      %464 = vmatpush1.bf16.msra.mxu0 0
      %465 = vmatprep.subr.bf16.mxu0 0
      %466 = vmatpush1.bf16.msra.mxu0 0
      %467 = vmatprep.subr.bf16.mxu0 0
      %468 = vmatpush1.bf16.msra.mxu0 0
      %469 = vmatprep.subr.bf16.mxu0 0
      %470 = vmatpush1.bf16.msra.mxu0 0
      %471 = vmatprep.subr.bf16.mxu0 0
      %472 = vmatpush1.bf16.msra.mxu0 0
      %473 = vmatprep.subr.bf16.mxu0 0
      %474 = vmatpush1.bf16.msra.mxu0 0
      %475 = vmatprep.subr.bf16.mxu0 0
      %476 = vmatpush1.bf16.msra.mxu0 0
      %477 = vmatprep.subr.bf16.mxu0 0
      %478 = vmatpush1.bf16.msra.mxu0 0
      %479 = vmatprep.subr.bf16.mxu0 0
      %480 = vmatpush1.bf16.msra.mxu0 0
      %481 = vmatprep.subr.bf16.mxu0 0
      %482 = vmatpush1.bf16.msra.mxu0 0
      %483 = vmatprep.mubr.bf16.mxu0 0
      %484 = vmatmul.mubr.bf16.gmra.mrb[0].mxu0 %v446
      %v485 = vpop.f32.mrb[0].mxu0
      %v486 = vadd.f32 0.0, %v485
      %v487 = vpop.f32.mrb[0].mxu0
      %v488 = vpop.f32.mrb[0].mxu0
      %v489 = vpop.f32.mrb[0].mxu0
      %490 = vdwg.mxu0
      %v491 = vpack.c.bf16 %v486, %v486
      %v493 = vunpack.c.l.b16 %v491
      %v494 = vpack.c.b16 %v493, %v493
      %495 = vrot.lane.b32.xlu0 %v494, 8
      %v496 = vpop.permute.xlu0 %495
      %vm498 = vcmask 126016
      %499 = vst.msk [vmem:[%s240] sm:$0xf] %vm498, %v496
      %500 = vrot.lane.b32.xlu0 %v371, 112
      %v501 = vpop.permute.xlu0 %500
      %502 = vrot.lane.b32.xlu0 %v376, 112
      %v503 = vpop.permute.xlu0 %502
      %v505 = vsel %vm251, %v501, 0
      %v508 = vsel %vm251, %v503, 0
      %510 = vmatprep.subr.bf16.mxu0 0
      %511 = vmatpush1.bf16.xpose.msra.mxu0 %v508
      %512 = vmatprep.subr.bf16.mxu0 0
      %513 = vmatpush1.bf16.xpose.msra.mxu0 0
      %514 = vmatprep.subr.bf16.mxu0 0
      %515 = vmatpush1.bf16.xpose.msra.mxu0 0
      %516 = vmatprep.subr.bf16.mxu0 0
      %517 = vmatpush1.bf16.xpose.msra.mxu0 0
      %518 = vmatprep.subr.bf16.mxu0 0
      %519 = vmatpush1.bf16.xpose.msra.mxu0 0
      %520 = vmatprep.subr.bf16.mxu0 0
      %521 = vmatpush1.bf16.xpose.msra.mxu0 0
      %522 = vmatprep.subr.bf16.mxu0 0
      %523 = vmatpush1.bf16.xpose.msra.mxu0 0
      %524 = vmatprep.subr.bf16.mxu0 0
      %525 = vmatpush1.bf16.xpose.msra.mxu0 0
      %526 = vmatprep.subr.bf16.mxu0 0
      %527 = vmatpush1.bf16.xpose.msra.mxu0 0
      %528 = vmatprep.subr.bf16.mxu0 0
      %529 = vmatpush1.bf16.xpose.msra.mxu0 0
      %530 = vmatprep.subr.bf16.mxu0 0
      %531 = vmatpush1.bf16.xpose.msra.mxu0 0
      %532 = vmatprep.subr.bf16.mxu0 0
      %533 = vmatpush1.bf16.xpose.msra.mxu0 0
      %534 = vmatprep.subr.bf16.mxu0 0
      %535 = vmatpush1.bf16.xpose.msra.mxu0 0
      %536 = vmatprep.subr.bf16.mxu0 0
      %537 = vmatpush1.bf16.xpose.msra.mxu0 0
      %538 = vmatprep.subr.bf16.mxu0 0
      %539 = vmatpush1.bf16.xpose.msra.mxu0 0
      %540 = vmatprep.subr.bf16.mxu0 0
      %541 = vmatpush1.bf16.xpose.msra.mxu0 0
      %542 = vmatprep.mubr.bf16.mxu0 0
      %543 = vmatmul.mubr.bf16.gmra.mrb[0].mxu0 %v505
      %v544 = vpop.f32.mrb[0].mxu0
      %v545 = vadd.f32 0.0, %v544
      %v546 = vpop.f32.mrb[0].mxu0
      %v547 = vpop.f32.mrb[0].mxu0
      %v548 = vpop.f32.mrb[0].mxu0
      %549 = vdwg.mxu0
      %v550 = vmul.f32 %v545, 0.35355338
      %v551 = vadd.f32 %v550, %v303
      %v552 = vsel %vm250, -1e+30, %v551
      %v553 = vsel %vm251, %v552, -inf
      %554 = vmax.xlane.f32.xlu0 %v553
      %v555 = vpop.xlane.xlu0 %554
      %v556 = vsub.f32 %v552, %v555
      %v557 = vmul.f32 %v556, 1.442695
      %v558 = vpow.pop %v557
      %v559 = vsel %vm251, %v558, 0.0
      %560 = vadd.xlane.f32.xlu0 %v559
      %v561 = vpop.xlane.xlu0 %560
      %v562 = vrcp.pop %v561
      %v563 = vmul.f32 %v558, %v562
      %v564 = vpack.c.bf16 %v563, %v563
      %565 = vrot.lane.b32.xlu0 %v442, 112
      %v566 = vpop.permute.xlu0 %565
      %v568 = vsel %vm251, %v564, 0
      %v571 = vsel %vm322, %v566, 0
      %573 = vmatprep.subr.bf16.mxu0 0
      %574 = vmatpush1.bf16.msra.mxu0 %v571
      %575 = vmatprep.subr.bf16.mxu0 0
      %576 = vmatpush1.bf16.msra.mxu0 0
      %577 = vmatprep.subr.bf16.mxu0 0
      %578 = vmatpush1.bf16.msra.mxu0 0
      %579 = vmatprep.subr.bf16.mxu0 0
      %580 = vmatpush1.bf16.msra.mxu0 0
      %581 = vmatprep.subr.bf16.mxu0 0
      %582 = vmatpush1.bf16.msra.mxu0 0
      %583 = vmatprep.subr.bf16.mxu0 0
      %584 = vmatpush1.bf16.msra.mxu0 0
      %585 = vmatprep.subr.bf16.mxu0 0
      %586 = vmatpush1.bf16.msra.mxu0 0
      %587 = vmatprep.subr.bf16.mxu0 0
      %588 = vmatpush1.bf16.msra.mxu0 0
      %589 = vmatprep.subr.bf16.mxu0 0
      %590 = vmatpush1.bf16.msra.mxu0 0
      %591 = vmatprep.subr.bf16.mxu0 0
      %592 = vmatpush1.bf16.msra.mxu0 0
      %593 = vmatprep.subr.bf16.mxu0 0
      %594 = vmatpush1.bf16.msra.mxu0 0
      %595 = vmatprep.subr.bf16.mxu0 0
      %596 = vmatpush1.bf16.msra.mxu0 0
      %597 = vmatprep.subr.bf16.mxu0 0
      %598 = vmatpush1.bf16.msra.mxu0 0
      %599 = vmatprep.subr.bf16.mxu0 0
      %600 = vmatpush1.bf16.msra.mxu0 0
      %601 = vmatprep.subr.bf16.mxu0 0
      %602 = vmatpush1.bf16.msra.mxu0 0
      %603 = vmatprep.subr.bf16.mxu0 0
      %604 = vmatpush1.bf16.msra.mxu0 0
      %605 = vmatprep.mubr.bf16.mxu0 0
      %606 = vmatmul.mubr.bf16.gmra.mrb[0].mxu0 %v568
      %v607 = vpop.f32.mrb[0].mxu0
      %v608 = vadd.f32 0.0, %v607
      %v609 = vpop.f32.mrb[0].mxu0
      %v610 = vpop.f32.mrb[0].mxu0
      %v611 = vpop.f32.mrb[0].mxu0
      %612 = vdwg.mxu0
      %v613 = vpack.c.bf16 %v608, %v608
      %v615 = vunpack.c.l.b16 %v613
      %v616 = vpack.c.b16 %v615, %v615
      %617 = vrot.lane.b32.xlu0 %v616, 16
      %v618 = vpop.permute.xlu0 %617
      %vm620 = vcmask 191616
      %621 = vst.msk [vmem:[%s240] sm:$0xf] %vm620, %v618
      %622 = vrot.lane.b32.xlu0 %v371, 104
      %v623 = vpop.permute.xlu0 %622
      %624 = vrot.lane.b32.xlu0 %v376, 104
      %v625 = vpop.permute.xlu0 %624
      %v627 = vsel %vm251, %v623, 0
      %v630 = vsel %vm251, %v625, 0
      %632 = vmatprep.subr.bf16.mxu0 0
      %633 = vmatpush1.bf16.xpose.msra.mxu0 %v630
      %634 = vmatprep.subr.bf16.mxu0 0
      %635 = vmatpush1.bf16.xpose.msra.mxu0 0
      %636 = vmatprep.subr.bf16.mxu0 0
      %637 = vmatpush1.bf16.xpose.msra.mxu0 0
      %638 = vmatprep.subr.bf16.mxu0 0
      %639 = vmatpush1.bf16.xpose.msra.mxu0 0
      %640 = vmatprep.subr.bf16.mxu0 0
      %641 = vmatpush1.bf16.xpose.msra.mxu0 0
      %642 = vmatprep.subr.bf16.mxu0 0
      %643 = vmatpush1.bf16.xpose.msra.mxu0 0
      %644 = vmatprep.subr.bf16.mxu0 0
      %645 = vmatpush1.bf16.xpose.msra.mxu0 0
      %646 = vmatprep.subr.bf16.mxu0 0
      %647 = vmatpush1.bf16.xpose.msra.mxu0 0
      %648 = vmatprep.subr.bf16.mxu0 0
      %649 = vmatpush1.bf16.xpose.msra.mxu0 0
      %650 = vmatprep.subr.bf16.mxu0 0
      %651 = vmatpush1.bf16.xpose.msra.mxu0 0
      %652 = vmatprep.subr.bf16.mxu0 0
      %653 = vmatpush1.bf16.xpose.msra.mxu0 0
      %654 = vmatprep.subr.bf16.mxu0 0
      %655 = vmatpush1.bf16.xpose.msra.mxu0 0
      %656 = vmatprep.subr.bf16.mxu0 0
      %657 = vmatpush1.bf16.xpose.msra.mxu0 0
      %658 = vmatprep.subr.bf16.mxu0 0
      %659 = vmatpush1.bf16.xpose.msra.mxu0 0
      %660 = vmatprep.subr.bf16.mxu0 0
      %661 = vmatpush1.bf16.xpose.msra.mxu0 0
      %662 = vmatprep.subr.bf16.mxu0 0
      %663 = vmatpush1.bf16.xpose.msra.mxu0 0
      %664 = vmatprep.mubr.bf16.mxu0 0
      %665 = vmatmul.mubr.bf16.gmra.mrb[0].mxu0 %v627
      %v666 = vpop.f32.mrb[0].mxu0
      %v667 = vadd.f32 0.0, %v666
      %v668 = vpop.f32.mrb[0].mxu0
      %v669 = vpop.f32.mrb[0].mxu0
      %v670 = vpop.f32.mrb[0].mxu0
      %671 = vdwg.mxu0
      %v672 = vmul.f32 %v667, 0.35355338
      %v673 = vadd.f32 %v672, %v303
      %v674 = vsel %vm250, -1e+30, %v673
      %v675 = vsel %vm251, %v674, -inf
      %676 = vmax.xlane.f32.xlu0 %v675
      %v677 = vpop.xlane.xlu0 %676
      %v678 = vsub.f32 %v674, %v677
      %v679 = vmul.f32 %v678, 1.442695
      %v680 = vpow.pop %v679
      %v681 = vsel %vm251, %v680, 0.0
      %682 = vadd.xlane.f32.xlu0 %v681
      %v683 = vpop.xlane.xlu0 %682
      %v684 = vrcp.pop %v683
      %v685 = vmul.f32 %v680, %v684
      %v686 = vpack.c.bf16 %v685, %v685
      %687 = vrot.lane.b32.xlu0 %v442, 104
      %v688 = vpop.permute.xlu0 %687
      %v690 = vsel %vm251, %v686, 0
      %v693 = vsel %vm322, %v688, 0
      %695 = vmatprep.subr.bf16.mxu0 0
      %696 = vmatpush1.bf16.msra.mxu0 %v693
      %697 = vmatprep.subr.bf16.mxu0 0
      %698 = vmatpush1.bf16.msra.mxu0 0
      %699 = vmatprep.subr.bf16.mxu0 0
      %700 = vmatpush1.bf16.msra.mxu0 0
      %701 = vmatprep.subr.bf16.mxu0 0
      %702 = vmatpush1.bf16.msra.mxu0 0
      %703 = vmatprep.subr.bf16.mxu0 0
      %704 = vmatpush1.bf16.msra.mxu0 0
      %705 = vmatprep.subr.bf16.mxu0 0
      %706 = vmatpush1.bf16.msra.mxu0 0
      %707 = vmatprep.subr.bf16.mxu0 0
      %708 = vmatpush1.bf16.msra.mxu0 0
      %709 = vmatprep.subr.bf16.mxu0 0
      %710 = vmatpush1.bf16.msra.mxu0 0
      %711 = vmatprep.subr.bf16.mxu0 0
      %712 = vmatpush1.bf16.msra.mxu0 0
      %713 = vmatprep.subr.bf16.mxu0 0
      %714 = vmatpush1.bf16.msra.mxu0 0
      %715 = vmatprep.subr.bf16.mxu0 0
      %716 = vmatpush1.bf16.msra.mxu0 0
      %717 = vmatprep.subr.bf16.mxu0 0
      %718 = vmatpush1.bf16.msra.mxu0 0
      %719 = vmatprep.subr.bf16.mxu0 0
      %720 = vmatpush1.bf16.msra.mxu0 0
      %721 = vmatprep.subr.bf16.mxu0 0
      %722 = vmatpush1.bf16.msra.mxu0 0
      %723 = vmatprep.subr.bf16.mxu0 0
      %724 = vmatpush1.bf16.msra.mxu0 0
      %725 = vmatprep.subr.bf16.mxu0 0
      %726 = vmatpush1.bf16.msra.mxu0 0
      %727 = vmatprep.mubr.bf16.mxu0 0
      %728 = vmatmul.mubr.bf16.gmra.mrb[0].mxu0 %v690
      %v729 = vpop.f32.mrb[0].mxu0
      %v730 = vadd.f32 0.0, %v729
      %v731 = vpop.f32.mrb[0].mxu0
      %v732 = vpop.f32.mrb[0].mxu0
      %v733 = vpop.f32.mrb[0].mxu0
      %734 = vdwg.mxu0
      %v735 = vpack.c.bf16 %v730, %v730
      %v737 = vunpack.c.l.b16 %v735
      %v738 = vpack.c.b16 %v737, %v737
      %739 = vrot.lane.b32.xlu0 %v738, 24
      %v740 = vpop.permute.xlu0 %739
      %vm742 = vcmask 257216
      %743 = vst.msk [vmem:[%s240] sm:$0xf] %vm742, %v740
      %p744 = scmp.lt.s32.totalorder %s15, 1
      %s745 = scalar_select %p744, %s15, 1
      %s746 = smul.addr %s745, 4
      %s747 = scalar_lea.vmem %s4, %s746
      // Predicated region
      $region37: #{gcd_transformer_forward.43} parent=35 // pred_check
        %p748 = pneg %p137
      $region38: #{gcd_transformer_forward.43} parent=35 // pred_check_branch
        %750 = sbr.rel (%p748) target = $region40
      $region39: #{gcd_transformer_forward.43} parent=35 // pred_region
        _
      $region40: #{gcd_transformer_forward.43} parent=35 // pred_fallthru
        _
    $region36: #{gcd_transformer_forward.43} parent=5 // pred_fallthru
      _
    %p751 = scmp.le.s32.totalorder 2, %s10
    // Predicated region
    $region41: #{gcd_transformer_forward.43} parent=5 // pred_check
      %p752 = pneg %p751
    $region42: #{gcd_transformer_forward.43} parent=5 // pred_check_branch
      %754 = sbr.rel (%p752) target = $region44
    $region43: #{gcd_transformer_forward.43} parent=5 // pred_region
      %s755 = ssub.s32 %s10, 2
      // Predicated region
      $region45: #{gcd_transformer_forward.43} parent=43 // pred_check
        %p756 = pneg %p143
      $region46: #{gcd_transformer_forward.43} parent=43 // pred_check_branch
        %758 = sbr.rel (%p756) target = $region48
      $region47: #{gcd_transformer_forward.43} parent=43 // pred_region
        %p759 = scmp.lt.s32.totalorder %s16, 1
        %s760 = scalar_select %p759, %s16, 1
        %s761 = smul.addr %s760, 4
        %s762 = scalar_lea.vmem %s4, %s761
      $region48: #{gcd_transformer_forward.43} parent=43 // pred_fallthru
        _
    $region44: #{gcd_transformer_forward.43} parent=5 // pred_fallthru
      _
  $region6: #{gcd_transformer_forward.43} parent=0 // loop_footer
    %s14 = sadd.s32 1, %s10
  $region7: #{gcd_transformer_forward.43} parent=0 // loop_footer_branch
    %9 = sbr.rel target = $region3
  $region8: #{gcd_transformer_forward.43} parent=0 // loop_exit
    _

</llo_original>
